<compile_context>
chip_gen: v7x
topology: tpu7x:2x2x1
jax: 0.10.0
libtpu: 0.0.40
codegen_flags: <defaults>
</compile_context>

<pallas_src>
import functools

import jax
import jax.numpy as jnp
from jax.experimental import pallas as pl
from jax.experimental.pallas import tpu as pltpu

LANE = 128


def _round_up(x, m):
    return ((x + m - 1) // m) * m


def _vmem_capacity_bytes():
    """Best-effort query of per-core VMEM capacity (None if unavailable)."""
    try:
        return int(pltpu.get_tpu_info().vmem_capacity_bytes)
    except Exception:
        return None


# ----------------------------------------------------------------------------- kernel

def _fused_contextnet_kernel(*refs, num_layers, K, TT, T_valid, num_classes, with_fc):
    """Fused ContextNet encoder for one (batch, time-tile) grid point.

    refs layout (set up by contextnet_forward):
      x_ref                  (1, 2*H + T_pad, Cin_pad) bf16   halo-padded input
      [w_taps, shift] * L    (K, Cin_p, Cout_p) bf16 (BN scale folded), (1, Cout_p) f32
      [fc_w]                 (Dout_p, NC_p) bf16               (only if with_fc)
      out_ref                (1, TT, Dout_p) bf16
      [logp_ref]             (1, TT, NC_p)  f32                (only if with_fc)
    """
    pad = (K - 1) // 2
    H = num_layers * pad
    n_in = 1 + 2 * num_layers + (1 if with_fc else 0)

    x_ref = refs[0]
    layer_refs = refs[1:1 + 2 * num_layers]
    fc_w_ref = refs[n_in - 1] if with_fc else None
    out_ref = refs[n_in]
    logp_ref = refs[n_in + 1] if with_fc else None

    tile_start = pl.program_id(1) * TT
    start = pl.multiple_of(tile_start, 16)          # TT is a multiple of 16
    # Overlapping (TT + 2H)-row window sliced from the resident full-time input
    # block: no HBM-side pad copies and no overlapping HBM windows.
    cur = x_ref[0, pl.ds(start, TT + 2 * H), :]     # (TT+2H, Cin_pad) bf16

    # Boundary-mask bookkeeping, hoisted out of the layer loop: one row iota per
    # tile; each layer just slices the global-time column it needs.
    row = jax.lax.broadcasted_iota(jnp.int32, (TT + 2 * H, 1), 0)
    g_full = (tile_start - H) + row                 # global time index of window rows

    for l in range(num_layers):
        w_taps = layer_refs[2 * l]                  # (K, Cin_p, Cout_p) bf16 ref
        shift = layer_refs[2 * l + 1][...]          # (1, Cout_p) f32
        h_out = (num_layers - 1 - l) * pad
        out_len = TT + 2 * h_out

        # K accumulated per-tap MXU dots (no im2col concat buffer).  The single f32
        # accumulator maps onto v7x's in-place MRB accumulation; on v5e/v6e it is
        # K-1 VPU adds instead of the previous K-wide copy + repack.
        y = jnp.dot(cur[0:out_len, :], w_taps[0],
                    preferred_element_type=jnp.float32)
        for k in range(1, K):
            y = y + jnp.dot(cur[k:k + out_len, :], w_taps[k],
                            preferred_element_type=jnp.float32)

        y = y + shift                               # folded eval BatchNorm (scale in w)
        y = y * jax.nn.sigmoid(y)                   # Swish in f32 (EUP slot)

        if l < num_layers - 1:
            # Zero rows whose global time index lies outside [0, T): reproduces the
            # per-layer zero "same" padding the next layer's taps must see.  The
            # final layer skips this (its out-of-range rows are never consumed).
            off = (l + 1) * pad
            g = g_full[off:off + out_len, :]
            y = jnp.where((g >= 0) & (g < T_valid), y, 0.0)

        cur = y.astype(jnp.bfloat16)                # bf16 between layers (MXU feed)

    out_ref[0] = cur                                # (TT, Dout_p), lane-dense store

    if with_fc:
        logits = jnp.dot(cur, fc_w_ref[...], preferred_element_type=jnp.float32)
        nc_pad = logits.shape[-1]
        cls = jax.lax.broadcasted_iota(jnp.int32, (1, nc_pad), 1)
        logits = jnp.where(cls < num_classes, logits, -1e30)  # mask padded classes
        m = jnp.max(logits, axis=-1, keepdims=True)
        e = jnp.exp(logits - m)
        logp_ref[0] = (logits - m - jnp.log(jnp.sum(e, axis=-1, keepdims=True))
                       ).astype(logp_ref.dtype)


# ----------------------------------------------------------------------------- params

def init_contextnet_params(key, num_classes, model_size="m", input_dim=80,
                           num_layers=5, kernel_size=5, num_channels=256,
                           output_dim=640, joint_ctc_attention=False):
    """Deterministic init matching ContextNet.__init__ shapes.

    Channels are zero-padded to multiples of 128 lanes, the eval-BatchNorm scale is
    folded into the (bf16) conv weights, and weights are stored per-tap
    (K, Cin_pad, Cout_pad) so the kernel issues K accumulated MXU dots."""
    support = {"s": 0.5, "m": 1, "l": 2}
    assert model_size in support, f"{model_size} is not supported."
    alpha = support[model_size]
    num_channels = int(num_channels * alpha)
    output_dim = int(output_dim * alpha)
    eps = 1e-5
    # TODO(synk): even kernel_size would differ from PyTorch Conv1d(padding=(K-1)//2).
    assert kernel_size % 2 == 1, "only odd kernel_size supported"

    # TODO(synk): the reference source does not include `ConvBlock`; we implement the
    # canonical ContextNet block (Conv1d same-padding stride 1, no bias -> eval
    # BatchNorm folded to scale/shift -> Swish) without SE / residual sub-modules.
    chans = [input_dim] + [num_channels] * (num_layers - 1) + [output_dim]
    blocks = []
    for i in range(num_layers):
        cin, cout = chans[i], chans[i + 1]
        cin_p, cout_p = _round_up(cin, LANE), _round_up(cout, LANE)
        key, kw, kg, kb, km, kv = jax.random.split(key, 6)
        w = jax.random.normal(kw, (kernel_size, cin, cout), jnp.float32) * 0.05
        gamma = 1.0 + 0.1 * jax.random.normal(kg, (cout,), jnp.float32)
        beta = 0.1 * jax.random.normal(kb, (cout,), jnp.float32)
        mean = 0.1 * jax.random.normal(km, (cout,), jnp.float32)
        var = jnp.abs(jax.random.normal(kv, (cout,), jnp.float32)) + 0.5
        scale = gamma / jnp.sqrt(var + eps)
        shift = beta - mean * scale
        # Fold the BN scale into the conv weights: the kernel only adds `shift`.
        w = w * scale[None, None, :]
        # Lane-pad channels; padded taps / shifts are zero so padded lanes stay
        # exactly zero through the whole stack.
        w_p = jnp.zeros((kernel_size, cin_p, cout_p), jnp.float32)
        w_p = w_p.at[:, :cin, :cout].set(w)
        shift_p = jnp.zeros((1, cout_p), jnp.float32).at[0, :cout].set(shift)
        blocks.append({"w": w_p.astype(jnp.bfloat16), "shift": shift_p,
                       "cin": cin, "cout": cout})

    fc_w = None
    if joint_ctc_attention:
        key, kfc = jax.random.split(key)
        fc = jax.random.normal(kfc, (output_dim, num_classes), jnp.float32) * 0.05
        d_p, nc_p = _round_up(output_dim, LANE), _round_up(num_classes, LANE)
        fc_w = (jnp.zeros((d_p, nc_p), jnp.float32)
                .at[:output_dim, :num_classes].set(fc).astype(jnp.bfloat16))

    return {"blocks": blocks, "fc_w": fc_w,
            "joint_ctc_attention": joint_ctc_attention,
            "input_dim": input_dim, "output_dim": output_dim,
            "num_classes": num_classes, "kernel_size": kernel_size}


# ----------------------------------------------------------------------------- forward

def contextnet_forward(params, inputs, input_lengths, *, tile_t=None):
    """inputs: (B, T, input_dim) float; input_lengths: (B,) int32.

    Returns (output[B,T,output_dim] bf16, encoder_logits[B,T,num_classes] f32 or
    None, output_lengths), matching ContextNet.forward (stride-1 "same" convs keep
    the lengths unchanged)."""
    B, T, cin = inputs.shape
    assert cin == params["input_dim"]
    K = params["kernel_size"]
    pad = (K - 1) // 2
    L = len(params["blocks"])
    H = L * pad
    cin_p = params["blocks"][0]["w"].shape[1]
    d_out = params["output_dim"]
    d_out_p = params["blocks"][-1]["w"].shape[2]
    nc = params["num_classes"]
    with_fc = params["joint_ctc_attention"]
    nc_p = params["fc_w"].shape[1] if with_fc else 0

    # --- generation-aware tile / VMEM budget -------------------------------------
    cap = _vmem_capacity_bytes()
    big_vmem = cap is not None and cap >= 100 * 1024 * 1024   # v5e / v6e: 128 MiB
    if cap is None:
        vmem_limit = 48 * 1024 * 1024                         # proven-safe default
    elif big_vmem:
        vmem_limit = 96 * 1024 * 1024                         # v5e / v6e headroom
    else:
        vmem_limit = min(52 * 1024 * 1024, int(cap * 0.8))    # v7x: 64 MiB / TC

    if tile_t is None:
        tile_t = 1024 if big_vmem else 512
        if with_fc and nc_p >= 2048:
            tile_t //= 2          # keep the f32 log-prob tile + fc weight in budget
    # Multiple of 16 keeps bf16 sublane packing aligned for the window slice/store.
    tile_t = max(16, _round_up(min(tile_t, _round_up(T, 16)), 16))
    if B == 1 and _round_up(T, tile_t) // tile_t < 2 and T > 16:
        # Megacore (v7x): make sure the second TensorCore gets at least one step.
        tile_t = max(16, _round_up((T + 1) // 2, 16))
    T_pad = _round_up(T, tile_t)
    nT = T_pad // tile_t

    # One small, lane-padded, bf16, halo-padded copy of the input for the WHOLE
    # fused stack.  TODO(synk): for very long sequences on v7x, switch this block to
    # memory_space=pl.ANY + a manually double-buffered (tile_t + 2H) halo DMA so the
    # resident block does not scale with T.
    x = jnp.zeros((B, H + T_pad + H, cin_p), jnp.bfloat16)
    x = x.at[:, H:H + T, :cin].set(inputs.astype(jnp.bfloat16))

    kernel = functools.partial(
        _fused_contextnet_kernel, num_layers=L, K=K, TT=tile_t,
        T_valid=T, num_classes=nc, with_fc=with_fc)

    # Advisory cost estimate for XLA scheduling around the custom call.
    flops = transcendentals = 0
    for l, blk in enumerate(params["blocks"]):
        kk, ci_p, co_p = blk["w"].shape
        out_len = tile_t + 2 * (L - 1 - l) * pad
        flops += 2 * out_len * kk * ci_p * co_p
        transcendentals += out_len * co_p              # sigmoid
    if with_fc:
        flops += 2 * tile_t * params["fc_w"].shape[0] * nc_p
        transcendentals += tile_t * nc_p               # exp
    flops *= B * nT
    transcendentals *= B * nT
    bytes_accessed = (x.size * 2
                      + sum(b_["w"].size * 2 + b_["shift"].size * 4
                            for b_ in params["blocks"])
                      + (params["fc_w"].size * 2 if with_fc else 0)
                      + B * T_pad * d_out_p * 2
                      + (B * T_pad * nc_p * 4 if with_fc else 0))
    cost = pl.CostEstimate(flops=int(flops), transcendentals=int(transcendentals),
                           bytes_accessed=int(bytes_accessed))

    def _run(single_buffer_consts):
        # Constant-index operands (same block for every grid point) gain nothing
        # from double-buffering; request a single VMEM buffer when supported.
        const_kw = {"pipeline_mode": pl.Buffered(1)} if single_buffer_consts else {}
        args = [x]
        in_specs = [pl.BlockSpec((1, H + T_pad + H, cin_p), lambda b, t: (b, 0, 0))]
        for blk in params["blocks"]:
            kk, ci_p, co_p = blk["w"].shape
            args.extend([blk["w"], blk["shift"]])
            in_specs.append(
                pl.BlockSpec((kk, ci_p, co_p), lambda b, t: (0, 0, 0), **const_kw))
            in_specs.append(
                pl.BlockSpec((1, co_p), lambda b, t: (0, 0), **const_kw))
        out_shapes = [jax.ShapeDtypeStruct((B, T_pad, d_out_p), jnp.bfloat16)]
        out_specs = [pl.BlockSpec((1, tile_t, d_out_p), lambda b, t: (b, t, 0))]
        if with_fc:
            d_p = params["fc_w"].shape[0]
            args.append(params["fc_w"])
            in_specs.append(
                pl.BlockSpec((d_p, nc_p), lambda b, t: (0, 0), **const_kw))
            out_shapes.append(jax.ShapeDtypeStruct((B, T_pad, nc_p), jnp.float32))
            out_specs.append(pl.BlockSpec((1, tile_t, nc_p), lambda b, t: (b, t, 0)))

        call = pl.pallas_call(
            kernel,
            out_shape=tuple(out_shapes),
            grid_spec=pltpu.PrefetchScalarGridSpec(
                num_scalar_prefetch=0,
                grid=(B, nT),
                in_specs=in_specs,
                out_specs=tuple(out_specs)),
            compiler_params=pltpu.CompilerParams(
                dimension_semantics=("parallel", "parallel"),
                vmem_limit_bytes=vmem_limit),
            cost_estimate=cost,
        )
        return jax.block_until_ready(call(*args))

    try:
        outs = _run(True)
    except Exception:
        # pl.Buffered(1) single-buffering is not supported by every jax version;
        # fall back to default double-buffering (costs only VMEM).
        outs = _run(False)

    if with_fc:
        out_full, logp_full = outs
        encoder_logits = (logp_full if (T_pad == T and nc_p == nc)
                          else logp_full[:, :T, :nc])
    else:
        out_full = outs[0]
        encoder_logits = None
    # Skip the epilogue slice (an extra HBM pass) when no padding was added.
    output = (out_full if (T_pad == T and d_out_p == d_out)
              else out_full[:, :T, :d_out])
    # TODO(synk): per-sample input_lengths are not used to mask frames inside the
    # blocks (matches the previous implementation); stride-1 "same" convs keep them.
    output_lengths = input_lengths
    return output, encoder_logits, output_lengths


# ----------------------------------------------------------------------------- reference

def _reference_forward(params, inputs):
    """Pure-JAX reference (lax.conv) with matching bf16 rounding / BN folding."""
    K = params["kernel_size"]
    pad = (K - 1) // 2
    x = inputs.astype(jnp.bfloat16).astype(jnp.float32)
    for blk in params["blocks"]:
        cin, cout = blk["cin"], blk["cout"]
        w = blk["w"].astype(jnp.float32)[:, :cin, :cout]   # (K,cin,cout), scale folded
        shift = blk["shift"][0, :cout]
        y = jax.lax.conv_general_dilated(
            x, w, window_strides=(1,), padding=[(pad, K - 1 - pad)],
            dimension_numbers=("NWC", "WIO", "NWC"))
        y = y + shift
        y = y * jax.nn.sigmoid(y)
        x = y.astype(jnp.bfloat16).astype(jnp.float32)
    d_out, nc = params["output_dim"], params["num_classes"]
    out = x
    logp = None
    if params["joint_ctc_attention"]:
        fc = params["fc_w"].astype(jnp.float32)[:d_out, :nc]
        logp = jax.nn.log_softmax(out @ fc, axis=-1)
    return out, logp


# ----------------------------------------------------------------------------- main

if __name__ == "__main__":
    key = jax.random.PRNGKey(0)

    # Small shapes consistent with the module's forward.
    B, T = 2, 32
    num_classes = 10
    input_dim = 8
    num_layers = 3
    kernel_size = 5
    num_channels = 16
    output_dim = 32

    key, k_in = jax.random.split(key)
    inputs = jax.random.normal(k_in, (B, T, input_dim), jnp.float32)
    input_lengths = jnp.array([T, T - 5], dtype=jnp.int32)

    params = init_contextnet_params(
        key,
        num_classes=num_classes,
        model_size="m",
        input_dim=input_dim,
        num_layers=num_layers,
        kernel_size=kernel_size,
        num_channels=num_channels,
        output_dim=output_dim,
        joint_ctc_attention=True,
    )

    # tile_t=16 -> two time tiles, exercising the halo / multi-tile path.
    output, encoder_logits, output_lengths = contextnet_forward(
        params, inputs, input_lengths, tile_t=16)
    jax.block_until_ready((output, encoder_logits, output_lengths))

    assert output.shape == (B, T, output_dim)
    assert encoder_logits.shape == (B, T, num_classes)
    assert output_lengths.shape == (B,)

    # Sanity check against a pure-JAX reference with matching bf16 rounding.
    ref_out, ref_logp = _reference_forward(params, inputs)
    err_out = float(jnp.max(jnp.abs(output.astype(jnp.float32) - ref_out)))
    err_lp = float(jnp.max(jnp.abs(encoder_logits - ref_logp)))
    assert err_out < 5e-2 and err_lp < 5e-2, (err_out, err_lp)

    print("KERNEL_OK")
</pallas_src>

<mosaic_0001>
module attributes {stable_mosaic.version = 11 : i64} {
  func.func @_fused_contextnet_kernel(%arg0: i32, %arg1: i32, %arg2: memref<1x44x128xbf16, #tpu.memory_space<vmem>>, %arg3: memref<5x128x128xbf16, #tpu.memory_space<vmem>>, %arg4: memref<1x128xf32, #tpu.memory_space<vmem>>, %arg5: memref<5x128x128xbf16, #tpu.memory_space<vmem>>, %arg6: memref<1x128xf32, #tpu.memory_space<vmem>>, %arg7: memref<5x128x128xbf16, #tpu.memory_space<vmem>>, %arg8: memref<1x128xf32, #tpu.memory_space<vmem>>, %arg9: memref<128x128xbf16, #tpu.memory_space<vmem>>, %arg10: memref<1x16x128xbf16, #tpu.memory_space<vmem>>, %arg11: memref<1x16x128xf32, #tpu.memory_space<vmem>>) attributes {dimension_semantics = [#tpu.dimension_semantics<parallel>, #tpu.dimension_semantics<parallel>], iteration_bounds = array<i64: 2, 2>, scalar_prefetch = 0 : i64, scratch_operands = 0 : i64, tpu.core_type = #tpu.core_type<tc>, window_params = [{transform_indices = @transform_0, window_bounds = array<i64: 1, 44, 128>}, {pipeline_mode = #tpu.pipeline_mode<synchronous>, transform_indices = @transform_1, window_bounds = array<i64: 5, 128, 128>}, {pipeline_mode = #tpu.pipeline_mode<synchronous>, transform_indices = @transform_2, window_bounds = array<i64: 1, 128>}, {pipeline_mode = #tpu.pipeline_mode<synchronous>, transform_indices = @transform_3, window_bounds = array<i64: 5, 128, 128>}, {pipeline_mode = #tpu.pipeline_mode<synchronous>, transform_indices = @transform_4, window_bounds = array<i64: 1, 128>}, {pipeline_mode = #tpu.pipeline_mode<synchronous>, transform_indices = @transform_5, window_bounds = array<i64: 5, 128, 128>}, {pipeline_mode = #tpu.pipeline_mode<synchronous>, transform_indices = @transform_6, window_bounds = array<i64: 1, 128>}, {pipeline_mode = #tpu.pipeline_mode<synchronous>, transform_indices = @transform_7, window_bounds = array<i64: 128, 128>}, {transform_indices = @transform_8, window_bounds = array<i64: 1, 16, 128>}, {transform_indices = @transform_9, window_bounds = array<i64: 1, 16, 128>}]} {
    %c16_i32 = arith.constant 16 : i32
    %0 = arith.muli %arg1, %c16_i32 : i32
    %1 = tpu.assume_multiple %0, 16 : i32
    %c0 = arith.constant 0 : index
    %2 = arith.index_cast %1 : i32 to index
    %c0_0 = arith.constant 0 : index
    %3 = vector.load %arg2[%c0, %2, %c0_0] : memref<1x44x128xbf16, #tpu.memory_space<vmem>>, vector<1x28x128xbf16>
    %4 = vector.shape_cast %3 : vector<1x28x128xbf16> to vector<28x128xbf16>
    %5 = tpu.iota {dimensions = array<i32: 0>} : vector<28x1xi32>
    %c6_i32 = arith.constant 6 : i32
    %6 = arith.subi %0, %c6_i32 : i32
    %7 = vector.broadcast %6 : i32 to vector<28x1xi32>
    %8 = arith.addi %7, %5 : vector<28x1xi32>
    %c0_1 = arith.constant 0 : index
    %c0_2 = arith.constant 0 : index
    %9 = vector.load %arg4[%c0_1, %c0_2] : memref<1x128xf32, #tpu.memory_space<vmem>>, vector<1x128xf32>
    %10 = vector.extract_strided_slice %4 {offsets = [0, 0], sizes = [24, 128], strides = [1, 1]} : vector<28x128xbf16> to vector<24x128xbf16>
    %c0_3 = arith.constant 0 : index
    %c0_4 = arith.constant 0 : index
    %c0_5 = arith.constant 0 : index
    %11 = vector.load %arg3[%c0_3, %c0_4, %c0_5] : memref<5x128x128xbf16, #tpu.memory_space<vmem>>, vector<1x128x128xbf16>
    %12 = vector.shape_cast %11 : vector<1x128x128xbf16> to vector<128x128xbf16>
    %cst = arith.constant dense<0.000000e+00> : vector<24x128xf32>
    %13 = tpu.matmul %10, %12, %cst {dimension_numbers = #tpu.dot_dimension_numbers<[1], [0], [0], [1], [0, 0, 1, 1], [], []>} : vector<24x128xbf16>, vector<128x128xbf16>, vector<24x128xf32> -> vector<24x128xf32>
    %14 = vector.extract_strided_slice %4 {offsets = [1, 0], sizes = [24, 128], strides = [1, 1]} : vector<28x128xbf16> to vector<24x128xbf16>
    %c1 = arith.constant 1 : index
    %c0_6 = arith.constant 0 : index
    %c0_7 = arith.constant 0 : index
    %15 = vector.load %arg3[%c1, %c0_6, %c0_7] : memref<5x128x128xbf16, #tpu.memory_space<vmem>>, vector<1x128x128xbf16>
    %16 = vector.shape_cast %15 : vector<1x128x128xbf16> to vector<128x128xbf16>
    %cst_8 = arith.constant dense<0.000000e+00> : vector<24x128xf32>
    %17 = tpu.matmul %14, %16, %cst_8 {dimension_numbers = #tpu.dot_dimension_numbers<[1], [0], [0], [1], [0, 0, 1, 1], [], []>} : vector<24x128xbf16>, vector<128x128xbf16>, vector<24x128xf32> -> vector<24x128xf32>
    %18 = arith.addf %13, %17 : vector<24x128xf32>
    %19 = vector.extract_strided_slice %4 {offsets = [2, 0], sizes = [24, 128], strides = [1, 1]} : vector<28x128xbf16> to vector<24x128xbf16>
    %c2 = arith.constant 2 : index
    %c0_9 = arith.constant 0 : index
    %c0_10 = arith.constant 0 : index
    %20 = vector.load %arg3[%c2, %c0_9, %c0_10] : memref<5x128x128xbf16, #tpu.memory_space<vmem>>, vector<1x128x128xbf16>
    %21 = vector.shape_cast %20 : vector<1x128x128xbf16> to vector<128x128xbf16>
    %cst_11 = arith.constant dense<0.000000e+00> : vector<24x128xf32>
    %22 = tpu.matmul %19, %21, %cst_11 {dimension_numbers = #tpu.dot_dimension_numbers<[1], [0], [0], [1], [0, 0, 1, 1], [], []>} : vector<24x128xbf16>, vector<128x128xbf16>, vector<24x128xf32> -> vector<24x128xf32>
    %23 = arith.addf %18, %22 : vector<24x128xf32>
    %24 = vector.extract_strided_slice %4 {offsets = [3, 0], sizes = [24, 128], strides = [1, 1]} : vector<28x128xbf16> to vector<24x128xbf16>
    %c3 = arith.constant 3 : index
    %c0_12 = arith.constant 0 : index
    %c0_13 = arith.constant 0 : index
    %25 = vector.load %arg3[%c3, %c0_12, %c0_13] : memref<5x128x128xbf16, #tpu.memory_space<vmem>>, vector<1x128x128xbf16>
    %26 = vector.shape_cast %25 : vector<1x128x128xbf16> to vector<128x128xbf16>
    %cst_14 = arith.constant dense<0.000000e+00> : vector<24x128xf32>
    %27 = tpu.matmul %24, %26, %cst_14 {dimension_numbers = #tpu.dot_dimension_numbers<[1], [0], [0], [1], [0, 0, 1, 1], [], []>} : vector<24x128xbf16>, vector<128x128xbf16>, vector<24x128xf32> -> vector<24x128xf32>
    %28 = arith.addf %23, %27 : vector<24x128xf32>
    %29 = vector.extract_strided_slice %4 {offsets = [4, 0], sizes = [24, 128], strides = [1, 1]} : vector<28x128xbf16> to vector<24x128xbf16>
    %c4 = arith.constant 4 : index
    %c0_15 = arith.constant 0 : index
    %c0_16 = arith.constant 0 : index
    %30 = vector.load %arg3[%c4, %c0_15, %c0_16] : memref<5x128x128xbf16, #tpu.memory_space<vmem>>, vector<1x128x128xbf16>
    %31 = vector.shape_cast %30 : vector<1x128x128xbf16> to vector<128x128xbf16>
    %cst_17 = arith.constant dense<0.000000e+00> : vector<24x128xf32>
    %32 = tpu.matmul %29, %31, %cst_17 {dimension_numbers = #tpu.dot_dimension_numbers<[1], [0], [0], [1], [0, 0, 1, 1], [], []>} : vector<24x128xbf16>, vector<128x128xbf16>, vector<24x128xf32> -> vector<24x128xf32>
    %33 = arith.addf %28, %32 : vector<24x128xf32>
    %34 = vector.broadcast %9 : vector<1x128xf32> to vector<24x128xf32>
    %35 = arith.addf %33, %34 : vector<24x128xf32>
    %36 = arith.negf %35 : vector<24x128xf32>
    %37 = math.exp %36 : vector<24x128xf32>
    %cst_18 = arith.constant 1.000000e+00 : f32
    %38 = vector.broadcast %cst_18 : f32 to vector<24x128xf32>
    %39 = arith.addf %38, %37 : vector<24x128xf32>
    %40 = arith.divf %38, %39 : vector<24x128xf32>
    %41 = arith.mulf %35, %40 : vector<24x128xf32>
    %42 = vector.extract_strided_slice %8 {offsets = [2, 0], sizes = [24, 1], strides = [1, 1]} : vector<28x1xi32> to vector<24x1xi32>
    %c0_i32 = arith.constant 0 : i32
    %43 = vector.broadcast %c0_i32 : i32 to vector<24x1xi32>
    %44 = arith.cmpi sge, %42, %43 : vector<24x1xi32>
    %c32_i32 = arith.constant 32 : i32
    %45 = vector.broadcast %c32_i32 : i32 to vector<24x1xi32>
    %46 = arith.cmpi slt, %42, %45 : vector<24x1xi32>
    %47 = arith.andi %44, %46 : vector<24x1xi1>
    %cst_19 = arith.constant 0.000000e+00 : f32
    %48 = vector.shape_cast %47 : vector<24x1xi1> to vector<24x1xi1>
    %49 = vector.broadcast %48 : vector<24x1xi1> to vector<24x128xi1>
    %50 = vector.broadcast %cst_19 : f32 to vector<24x128xf32>
    %51 = arith.select %49, %41, %50 : vector<24x128xi1>, vector<24x128xf32>
    %52 = arith.truncf %51 : vector<24x128xf32> to vector<24x128xbf16>
    %c0_20 = arith.constant 0 : index
    %c0_21 = arith.constant 0 : index
    %53 = vector.load %arg6[%c0_20, %c0_21] : memref<1x128xf32, #tpu.memory_space<vmem>>, vector<1x128xf32>
    %54 = vector.extract_strided_slice %52 {offsets = [0, 0], sizes = [20, 128], strides = [1, 1]} : vector<24x128xbf16> to vector<20x128xbf16>
    %c0_22 = arith.constant 0 : index
    %c0_23 = arith.constant 0 : index
    %c0_24 = arith.constant 0 : index
    %55 = vector.load %arg5[%c0_22, %c0_23, %c0_24] : memref<5x128x128xbf16, #tpu.memory_space<vmem>>, vector<1x128x128xbf16>
    %56 = vector.shape_cast %55 : vector<1x128x128xbf16> to vector<128x128xbf16>
    %cst_25 = arith.constant dense<0.000000e+00> : vector<20x128xf32>
    %57 = tpu.matmul %54, %56, %cst_25 {dimension_numbers = #tpu.dot_dimension_numbers<[1], [0], [0], [1], [0, 0, 1, 1], [], []>} : vector<20x128xbf16>, vector<128x128xbf16>, vector<20x128xf32> -> vector<20x128xf32>
    %58 = vector.extract_strided_slice %52 {offsets = [1, 0], sizes = [20, 128], strides = [1, 1]} : vector<24x128xbf16> to vector<20x128xbf16>
    %c1_26 = arith.constant 1 : index
    %c0_27 = arith.constant 0 : index
    %c0_28 = arith.constant 0 : index
    %59 = vector.load %arg5[%c1_26, %c0_27, %c0_28] : memref<5x128x128xbf16, #tpu.memory_space<vmem>>, vector<1x128x128xbf16>
    %60 = vector.shape_cast %59 : vector<1x128x128xbf16> to vector<128x128xbf16>
    %cst_29 = arith.constant dense<0.000000e+00> : vector<20x128xf32>
    %61 = tpu.matmul %58, %60, %cst_29 {dimension_numbers = #tpu.dot_dimension_numbers<[1], [0], [0], [1], [0, 0, 1, 1], [], []>} : vector<20x128xbf16>, vector<128x128xbf16>, vector<20x128xf32> -> vector<20x128xf32>
    %62 = arith.addf %57, %61 : vector<20x128xf32>
    %63 = vector.extract_strided_slice %52 {offsets = [2, 0], sizes = [20, 128], strides = [1, 1]} : vector<24x128xbf16> to vector<20x128xbf16>
    %c2_30 = arith.constant 2 : index
    %c0_31 = arith.constant 0 : index
    %c0_32 = arith.constant 0 : index
    %64 = vector.load %arg5[%c2_30, %c0_31, %c0_32] : memref<5x128x128xbf16, #tpu.memory_space<vmem>>, vector<1x128x128xbf16>
    %65 = vector.shape_cast %64 : vector<1x128x128xbf16> to vector<128x128xbf16>
    %cst_33 = arith.constant dense<0.000000e+00> : vector<20x128xf32>
    %66 = tpu.matmul %63, %65, %cst_33 {dimension_numbers = #tpu.dot_dimension_numbers<[1], [0], [0], [1], [0, 0, 1, 1], [], []>} : vector<20x128xbf16>, vector<128x128xbf16>, vector<20x128xf32> -> vector<20x128xf32>
    %67 = arith.addf %62, %66 : vector<20x128xf32>
    %68 = vector.extract_strided_slice %52 {offsets = [3, 0], sizes = [20, 128], strides = [1, 1]} : vector<24x128xbf16> to vector<20x128xbf16>
    %c3_34 = arith.constant 3 : index
    %c0_35 = arith.constant 0 : index
    %c0_36 = arith.constant 0 : index
    %69 = vector.load %arg5[%c3_34, %c0_35, %c0_36] : memref<5x128x128xbf16, #tpu.memory_space<vmem>>, vector<1x128x128xbf16>
    %70 = vector.shape_cast %69 : vector<1x128x128xbf16> to vector<128x128xbf16>
    %cst_37 = arith.constant dense<0.000000e+00> : vector<20x128xf32>
    %71 = tpu.matmul %68, %70, %cst_37 {dimension_numbers = #tpu.dot_dimension_numbers<[1], [0], [0], [1], [0, 0, 1, 1], [], []>} : vector<20x128xbf16>, vector<128x128xbf16>, vector<20x128xf32> -> vector<20x128xf32>
    %72 = arith.addf %67, %71 : vector<20x128xf32>
    %73 = vector.extract_strided_slice %52 {offsets = [4, 0], sizes = [20, 128], strides = [1, 1]} : vector<24x128xbf16> to vector<20x128xbf16>
    %c4_38 = arith.constant 4 : index
    %c0_39 = arith.constant 0 : index
    %c0_40 = arith.constant 0 : index
    %74 = vector.load %arg5[%c4_38, %c0_39, %c0_40] : memref<5x128x128xbf16, #tpu.memory_space<vmem>>, vector<1x128x128xbf16>
    %75 = vector.shape_cast %74 : vector<1x128x128xbf16> to vector<128x128xbf16>
    %cst_41 = arith.constant dense<0.000000e+00> : vector<20x128xf32>
    %76 = tpu.matmul %73, %75, %cst_41 {dimension_numbers = #tpu.dot_dimension_numbers<[1], [0], [0], [1], [0, 0, 1, 1], [], []>} : vector<20x128xbf16>, vector<128x128xbf16>, vector<20x128xf32> -> vector<20x128xf32>
    %77 = arith.addf %72, %76 : vector<20x128xf32>
    %78 = vector.broadcast %53 : vector<1x128xf32> to vector<20x128xf32>
    %79 = arith.addf %77, %78 : vector<20x128xf32>
    %80 = arith.negf %79 : vector<20x128xf32>
    %81 = math.exp %80 : vector<20x128xf32>
    %cst_42 = arith.constant 1.000000e+00 : f32
    %82 = vector.broadcast %cst_42 : f32 to vector<20x128xf32>
    %83 = arith.addf %82, %81 : vector<20x128xf32>
    %84 = arith.divf %82, %83 : vector<20x128xf32>
    %85 = arith.mulf %79, %84 : vector<20x128xf32>
    %86 = vector.extract_strided_slice %8 {offsets = [4, 0], sizes = [20, 1], strides = [1, 1]} : vector<28x1xi32> to vector<20x1xi32>
    %c0_i32_43 = arith.constant 0 : i32
    %87 = vector.broadcast %c0_i32_43 : i32 to vector<20x1xi32>
    %88 = arith.cmpi sge, %86, %87 : vector<20x1xi32>
    %c32_i32_44 = arith.constant 32 : i32
    %89 = vector.broadcast %c32_i32_44 : i32 to vector<20x1xi32>
    %90 = arith.cmpi slt, %86, %89 : vector<20x1xi32>
    %91 = arith.andi %88, %90 : vector<20x1xi1>
    %cst_45 = arith.constant 0.000000e+00 : f32
    %92 = vector.shape_cast %91 : vector<20x1xi1> to vector<20x1xi1>
    %93 = vector.broadcast %92 : vector<20x1xi1> to vector<20x128xi1>
    %94 = vector.broadcast %cst_45 : f32 to vector<20x128xf32>
    %95 = arith.select %93, %85, %94 : vector<20x128xi1>, vector<20x128xf32>
    %96 = arith.truncf %95 : vector<20x128xf32> to vector<20x128xbf16>
    %c0_46 = arith.constant 0 : index
    %c0_47 = arith.constant 0 : index
    %97 = vector.load %arg8[%c0_46, %c0_47] : memref<1x128xf32, #tpu.memory_space<vmem>>, vector<1x128xf32>
    %98 = vector.extract_strided_slice %96 {offsets = [0, 0], sizes = [16, 128], strides = [1, 1]} : vector<20x128xbf16> to vector<16x128xbf16>
    %c0_48 = arith.constant 0 : index
    %c0_49 = arith.constant 0 : index
    %c0_50 = arith.constant 0 : index
    %99 = vector.load %arg7[%c0_48, %c0_49, %c0_50] : memref<5x128x128xbf16, #tpu.memory_space<vmem>>, vector<1x128x128xbf16>
    %100 = vector.shape_cast %99 : vector<1x128x128xbf16> to vector<128x128xbf16>
    %cst_51 = arith.constant dense<0.000000e+00> : vector<16x128xf32>
    %101 = tpu.matmul %98, %100, %cst_51 {dimension_numbers = #tpu.dot_dimension_numbers<[1], [0], [0], [1], [0, 0, 1, 1], [], []>} : vector<16x128xbf16>, vector<128x128xbf16>, vector<16x128xf32> -> vector<16x128xf32>
    %102 = vector.extract_strided_slice %96 {offsets = [1, 0], sizes = [16, 128], strides = [1, 1]} : vector<20x128xbf16> to vector<16x128xbf16>
    %c1_52 = arith.constant 1 : index
    %c0_53 = arith.constant 0 : index
    %c0_54 = arith.constant 0 : index
    %103 = vector.load %arg7[%c1_52, %c0_53, %c0_54] : memref<5x128x128xbf16, #tpu.memory_space<vmem>>, vector<1x128x128xbf16>
    %104 = vector.shape_cast %103 : vector<1x128x128xbf16> to vector<128x128xbf16>
    %cst_55 = arith.constant dense<0.000000e+00> : vector<16x128xf32>
    %105 = tpu.matmul %102, %104, %cst_55 {dimension_numbers = #tpu.dot_dimension_numbers<[1], [0], [0], [1], [0, 0, 1, 1], [], []>} : vector<16x128xbf16>, vector<128x128xbf16>, vector<16x128xf32> -> vector<16x128xf32>
    %106 = arith.addf %101, %105 : vector<16x128xf32>
    %107 = vector.extract_strided_slice %96 {offsets = [2, 0], sizes = [16, 128], strides = [1, 1]} : vector<20x128xbf16> to vector<16x128xbf16>
    %c2_56 = arith.constant 2 : index
    %c0_57 = arith.constant 0 : index
    %c0_58 = arith.constant 0 : index
    %108 = vector.load %arg7[%c2_56, %c0_57, %c0_58] : memref<5x128x128xbf16, #tpu.memory_space<vmem>>, vector<1x128x128xbf16>
    %109 = vector.shape_cast %108 : vector<1x128x128xbf16> to vector<128x128xbf16>
    %cst_59 = arith.constant dense<0.000000e+00> : vector<16x128xf32>
    %110 = tpu.matmul %107, %109, %cst_59 {dimension_numbers = #tpu.dot_dimension_numbers<[1], [0], [0], [1], [0, 0, 1, 1], [], []>} : vector<16x128xbf16>, vector<128x128xbf16>, vector<16x128xf32> -> vector<16x128xf32>
    %111 = arith.addf %106, %110 : vector<16x128xf32>
    %112 = vector.extract_strided_slice %96 {offsets = [3, 0], sizes = [16, 128], strides = [1, 1]} : vector<20x128xbf16> to vector<16x128xbf16>
    %c3_60 = arith.constant 3 : index
    %c0_61 = arith.constant 0 : index
    %c0_62 = arith.constant 0 : index
    %113 = vector.load %arg7[%c3_60, %c0_61, %c0_62] : memref<5x128x128xbf16, #tpu.memory_space<vmem>>, vector<1x128x128xbf16>
    %114 = vector.shape_cast %113 : vector<1x128x128xbf16> to vector<128x128xbf16>
    %cst_63 = arith.constant dense<0.000000e+00> : vector<16x128xf32>
    %115 = tpu.matmul %112, %114, %cst_63 {dimension_numbers = #tpu.dot_dimension_numbers<[1], [0], [0], [1], [0, 0, 1, 1], [], []>} : vector<16x128xbf16>, vector<128x128xbf16>, vector<16x128xf32> -> vector<16x128xf32>
    %116 = arith.addf %111, %115 : vector<16x128xf32>
    %117 = vector.extract_strided_slice %96 {offsets = [4, 0], sizes = [16, 128], strides = [1, 1]} : vector<20x128xbf16> to vector<16x128xbf16>
    %c4_64 = arith.constant 4 : index
    %c0_65 = arith.constant 0 : index
    %c0_66 = arith.constant 0 : index
    %118 = vector.load %arg7[%c4_64, %c0_65, %c0_66] : memref<5x128x128xbf16, #tpu.memory_space<vmem>>, vector<1x128x128xbf16>
    %119 = vector.shape_cast %118 : vector<1x128x128xbf16> to vector<128x128xbf16>
    %cst_67 = arith.constant dense<0.000000e+00> : vector<16x128xf32>
    %120 = tpu.matmul %117, %119, %cst_67 {dimension_numbers = #tpu.dot_dimension_numbers<[1], [0], [0], [1], [0, 0, 1, 1], [], []>} : vector<16x128xbf16>, vector<128x128xbf16>, vector<16x128xf32> -> vector<16x128xf32>
    %121 = arith.addf %116, %120 : vector<16x128xf32>
    %122 = vector.broadcast %97 : vector<1x128xf32> to vector<16x128xf32>
    %123 = arith.addf %121, %122 : vector<16x128xf32>
    %124 = arith.negf %123 : vector<16x128xf32>
    %125 = math.exp %124 : vector<16x128xf32>
    %cst_68 = arith.constant 1.000000e+00 : f32
    %126 = vector.broadcast %cst_68 : f32 to vector<16x128xf32>
    %127 = arith.addf %126, %125 : vector<16x128xf32>
    %128 = arith.divf %126, %127 : vector<16x128xf32>
    %129 = arith.mulf %123, %128 : vector<16x128xf32>
    %130 = arith.truncf %129 : vector<16x128xf32> to vector<16x128xbf16>
    %c0_69 = arith.constant 0 : index
    %c0_70 = arith.constant 0 : index
    %c0_71 = arith.constant 0 : index
    %131 = vector.load %arg10[%c0_69, %c0_70, %c0_71] : memref<1x16x128xbf16, #tpu.memory_space<vmem>>, vector<1x16x128xbf16>
    %132 = vector.shape_cast %131 : vector<1x16x128xbf16> to vector<16x128xbf16>
    %133 = vector.shape_cast %130 : vector<16x128xbf16> to vector<1x16x128xbf16>
    tpu.vector_store %arg10[%c0_69, %c0_70, %c0_71], %133 {strides = array<i32>} : memref<1x16x128xbf16, #tpu.memory_space<vmem>>, vector<1x16x128xbf16>,
    %c0_72 = arith.constant 0 : index
    %c0_73 = arith.constant 0 : index
    %134 = vector.load %arg9[%c0_72, %c0_73] : memref<128x128xbf16, #tpu.memory_space<vmem>>, vector<128x128xbf16>
    %cst_74 = arith.constant dense<0.000000e+00> : vector<16x128xf32>
    %135 = tpu.matmul %130, %134, %cst_74 {dimension_numbers = #tpu.dot_dimension_numbers<[1], [0], [0], [1], [0, 0, 1, 1], [], []>} : vector<16x128xbf16>, vector<128x128xbf16>, vector<16x128xf32> -> vector<16x128xf32>
    %136 = tpu.iota {dimensions = array<i32: 1>} : vector<1x128xi32>
    %c10_i32 = arith.constant 10 : i32
    %137 = vector.broadcast %c10_i32 : i32 to vector<1x128xi32>
    %138 = arith.cmpi slt, %136, %137 : vector<1x128xi32>
    %cst_75 = arith.constant -1.000000e+30 : f32
    %139 = vector.shape_cast %138 : vector<1x128xi1> to vector<1x128xi1>
    %140 = vector.broadcast %139 : vector<1x128xi1> to vector<16x128xi1>
    %141 = vector.broadcast %cst_75 : f32 to vector<16x128xf32>
    %142 = arith.select %140, %135, %141 : vector<16x128xi1>, vector<16x128xf32>
    %cst_76 = arith.constant dense<0xFF800000> : vector<16xf32>
    %143 = vector.multi_reduction <maximumf>, %142, %cst_76 [1] : vector<16x128xf32> to vector<16xf32>
    %144 = vector.shape_cast %143 : vector<16xf32> to vector<16x1xf32>
    %145 = vector.broadcast %144 : vector<16x1xf32> to vector<16x128xf32>
    %146 = arith.subf %142, %145 : vector<16x128xf32>
    %147 = math.exp %146 : vector<16x128xf32>
    %148 = vector.broadcast %144 : vector<16x1xf32> to vector<16x128xf32>
    %149 = arith.subf %142, %148 : vector<16x128xf32>
    %cst_77 = arith.constant dense<0.000000e+00> : vector<16xf32>
    %150 = vector.multi_reduction <add>, %147, %cst_77 [1] : vector<16x128xf32> to vector<16xf32>
    %151 = vector.shape_cast %150 : vector<16xf32> to vector<16x1xf32>
    %152 = math.log %151 : vector<16x1xf32>
    %153 = vector.broadcast %152 : vector<16x1xf32> to vector<16x128xf32>
    %154 = arith.subf %149, %153 : vector<16x128xf32>
    %c0_78 = arith.constant 0 : index
    %c0_79 = arith.constant 0 : index
    %c0_80 = arith.constant 0 : index
    %155 = vector.load %arg11[%c0_78, %c0_79, %c0_80] : memref<1x16x128xf32, #tpu.memory_space<vmem>>, vector<1x16x128xf32>
    %156 = vector.shape_cast %155 : vector<1x16x128xf32> to vector<16x128xf32>
    %157 = vector.shape_cast %154 : vector<16x128xf32> to vector<1x16x128xf32>
    tpu.vector_store %arg11[%c0_78, %c0_79, %c0_80], %157 {strides = array<i32>} : memref<1x16x128xf32, #tpu.memory_space<vmem>>, vector<1x16x128xf32>,
    return
  }
  func.func @transform_0(%arg0: i32, %arg1: i32) -> (i32, i32, i32) {
    %c0_i32 = arith.constant 0 : i32
    %c0_i32_0 = arith.constant 0 : i32
    %c0_i32_1 = arith.constant 0 : i32
    return %arg0, %c0_i32, %c0_i32_0 : i32, i32, i32
  }
  func.func @transform_1(%arg0: i32, %arg1: i32) -> (i32, i32, i32) {
    %c0_i32 = arith.constant 0 : i32
    %c0_i32_0 = arith.constant 0 : i32
    %c0_i32_1 = arith.constant 0 : i32
    %c0_i32_2 = arith.constant 0 : i32
    return %c0_i32, %c0_i32_0, %c0_i32_1 : i32, i32, i32
  }
  func.func @transform_2(%arg0: i32, %arg1: i32) -> (i32, i32) {
    %c0_i32 = arith.constant 0 : i32
    %c0_i32_0 = arith.constant 0 : i32
    %c0_i32_1 = arith.constant 0 : i32
    return %c0_i32, %c0_i32_0 : i32, i32
  }
  func.func @transform_3(%arg0: i32, %arg1: i32) -> (i32, i32, i32) {
    %c0_i32 = arith.constant 0 : i32
    %c0_i32_0 = arith.constant 0 : i32
    %c0_i32_1 = arith.constant 0 : i32
    %c0_i32_2 = arith.constant 0 : i32
    return %c0_i32, %c0_i32_0, %c0_i32_1 : i32, i32, i32
  }
  func.func @transform_4(%arg0: i32, %arg1: i32) -> (i32, i32) {
    %c0_i32 = arith.constant 0 : i32
    %c0_i32_0 = arith.constant 0 : i32
    %c0_i32_1 = arith.constant 0 : i32
    return %c0_i32, %c0_i32_0 : i32, i32
  }
  func.func @transform_5(%arg0: i32, %arg1: i32) -> (i32, i32, i32) {
    %c0_i32 = arith.constant 0 : i32
    %c0_i32_0 = arith.constant 0 : i32
    %c0_i32_1 = arith.constant 0 : i32
    %c0_i32_2 = arith.constant 0 : i32
    return %c0_i32, %c0_i32_0, %c0_i32_1 : i32, i32, i32
  }
  func.func @transform_6(%arg0: i32, %arg1: i32) -> (i32, i32) {
    %c0_i32 = arith.constant 0 : i32
    %c0_i32_0 = arith.constant 0 : i32
    %c0_i32_1 = arith.constant 0 : i32
    return %c0_i32, %c0_i32_0 : i32, i32
  }
  func.func @transform_7(%arg0: i32, %arg1: i32) -> (i32, i32) {
    %c0_i32 = arith.constant 0 : i32
    %c0_i32_0 = arith.constant 0 : i32
    %c0_i32_1 = arith.constant 0 : i32
    return %c0_i32, %c0_i32_0 : i32, i32
  }
  func.func @transform_8(%arg0: i32, %arg1: i32) -> (i32, i32, i32) {
    %c0_i32 = arith.constant 0 : i32
    %c0_i32_0 = arith.constant 0 : i32
    return %arg0, %arg1, %c0_i32 : i32, i32, i32
  }
  func.func @transform_9(%arg0: i32, %arg1: i32) -> (i32, i32, i32) {
    %c0_i32 = arith.constant 0 : i32
    %c0_i32_0 = arith.constant 0 : i32
    return %arg0, %arg1, %c0_i32 : i32, i32, i32
  }
}

module attributes {stable_mosaic.version = 11 : i64} {
  func.func @_fused_contextnet_kernel(%arg0: i32, %arg1: i32, %arg2: memref<1x44x128xbf16, #tpu.memory_space<vmem>>, %arg3: memref<5x128x128xbf16, #tpu.memory_space<vmem>>, %arg4: memref<1x128xf32, #tpu.memory_space<vmem>>, %arg5: memref<5x128x128xbf16, #tpu.memory_space<vmem>>, %arg6: memref<1x128xf32, #tpu.memory_space<vmem>>, %arg7: memref<5x128x128xbf16, #tpu.memory_space<vmem>>, %arg8: memref<1x128xf32, #tpu.memory_space<vmem>>, %arg9: memref<128x128xbf16, #tpu.memory_space<vmem>>, %arg10: memref<1x16x128xbf16, #tpu.memory_space<vmem>>, %arg11: memref<1x16x128xf32, #tpu.memory_space<vmem>>) attributes {dimension_semantics = [#tpu.dimension_semantics<parallel>, #tpu.dimension_semantics<parallel>], iteration_bounds = array<i64: 2, 2>, scalar_prefetch = 0 : i64, scratch_operands = 0 : i64, tpu.core_type = #tpu.core_type<tc>, window_params = [{transform_indices = @transform_0, window_bounds = array<i64: 1, 44, 128>}, {pipeline_mode = #tpu.pipeline_mode<synchronous>, transform_indices = @transform_1, window_bounds = array<i64: 5, 128, 128>}, {pipeline_mode = #tpu.pipeline_mode<synchronous>, transform_indices = @transform_2, window_bounds = array<i64: 1, 128>}, {pipeline_mode = #tpu.pipeline_mode<synchronous>, transform_indices = @transform_3, window_bounds = array<i64: 5, 128, 128>}, {pipeline_mode = #tpu.pipeline_mode<synchronous>, transform_indices = @transform_4, window_bounds = array<i64: 1, 128>}, {pipeline_mode = #tpu.pipeline_mode<synchronous>, transform_indices = @transform_5, window_bounds = array<i64: 5, 128, 128>}, {pipeline_mode = #tpu.pipeline_mode<synchronous>, transform_indices = @transform_6, window_bounds = array<i64: 1, 128>}, {pipeline_mode = #tpu.pipeline_mode<synchronous>, transform_indices = @transform_7, window_bounds = array<i64: 128, 128>}, {transform_indices = @transform_8, window_bounds = array<i64: 1, 16, 128>}, {transform_indices = @transform_9, window_bounds = array<i64: 1, 16, 128>}]} {
    %c16_i32 = arith.constant 16 : i32
    %0 = arith.muli %arg1, %c16_i32 : i32
    %1 = tpu.assume_multiple %0, 16 : i32
    %c0 = arith.constant 0 : index
    %2 = arith.index_cast %1 : i32 to index
    %c0_0 = arith.constant 0 : index
    %3 = vector.load %arg2[%c0, %2, %c0_0] : memref<1x44x128xbf16, #tpu.memory_space<vmem>>, vector<1x28x128xbf16>
    %4 = vector.shape_cast %3 : vector<1x28x128xbf16> to vector<28x128xbf16>
    %5 = tpu.iota {dimensions = array<i32: 0>} : vector<28x1xi32>
    %c6_i32 = arith.constant 6 : i32
    %6 = arith.subi %0, %c6_i32 : i32
    %7 = vector.broadcast %6 : i32 to vector<28x1xi32>
    %8 = arith.addi %7, %5 : vector<28x1xi32>
    %c0_1 = arith.constant 0 : index
    %c0_2 = arith.constant 0 : index
    %9 = vector.load %arg4[%c0_1, %c0_2] : memref<1x128xf32, #tpu.memory_space<vmem>>, vector<1x128xf32>
    %10 = vector.extract_strided_slice %4 {offsets = [0, 0], sizes = [24, 128], strides = [1, 1]} : vector<28x128xbf16> to vector<24x128xbf16>
    %c0_3 = arith.constant 0 : index
    %c0_4 = arith.constant 0 : index
    %c0_5 = arith.constant 0 : index
    %11 = vector.load %arg3[%c0_3, %c0_4, %c0_5] : memref<5x128x128xbf16, #tpu.memory_space<vmem>>, vector<1x128x128xbf16>
    %12 = vector.shape_cast %11 : vector<1x128x128xbf16> to vector<128x128xbf16>
    %cst = arith.constant dense<0.000000e+00> : vector<24x128xf32>
    %13 = tpu.matmul %10, %12, %cst {dimension_numbers = #tpu.dot_dimension_numbers<[1], [0], [0], [1], [0, 0, 1, 1], [], []>} : vector<24x128xbf16>, vector<128x128xbf16>, vector<24x128xf32> -> vector<24x128xf32>
    %14 = vector.extract_strided_slice %4 {offsets = [1, 0], sizes = [24, 128], strides = [1, 1]} : vector<28x128xbf16> to vector<24x128xbf16>
    %c1 = arith.constant 1 : index
    %c0_6 = arith.constant 0 : index
    %c0_7 = arith.constant 0 : index
    %15 = vector.load %arg3[%c1, %c0_6, %c0_7] : memref<5x128x128xbf16, #tpu.memory_space<vmem>>, vector<1x128x128xbf16>
    %16 = vector.shape_cast %15 : vector<1x128x128xbf16> to vector<128x128xbf16>
    %cst_8 = arith.constant dense<0.000000e+00> : vector<24x128xf32>
    %17 = tpu.matmul %14, %16, %cst_8 {dimension_numbers = #tpu.dot_dimension_numbers<[1], [0], [0], [1], [0, 0, 1, 1], [], []>} : vector<24x128xbf16>, vector<128x128xbf16>, vector<24x128xf32> -> vector<24x128xf32>
    %18 = arith.addf %13, %17 : vector<24x128xf32>
    %19 = vector.extract_strided_slice %4 {offsets = [2, 0], sizes = [24, 128], strides = [1, 1]} : vector<28x128xbf16> to vector<24x128xbf16>
    %c2 = arith.constant 2 : index
    %c0_9 = arith.constant 0 : index
    %c0_10 = arith.constant 0 : index
    %20 = vector.load %arg3[%c2, %c0_9, %c0_10] : memref<5x128x128xbf16, #tpu.memory_space<vmem>>, vector<1x128x128xbf16>
    %21 = vector.shape_cast %20 : vector<1x128x128xbf16> to vector<128x128xbf16>
    %cst_11 = arith.constant dense<0.000000e+00> : vector<24x128xf32>
    %22 = tpu.matmul %19, %21, %cst_11 {dimension_numbers = #tpu.dot_dimension_numbers<[1], [0], [0], [1], [0, 0, 1, 1], [], []>} : vector<24x128xbf16>, vector<128x128xbf16>, vector<24x128xf32> -> vector<24x128xf32>
    %23 = arith.addf %18, %22 : vector<24x128xf32>
    %24 = vector.extract_strided_slice %4 {offsets = [3, 0], sizes = [24, 128], strides = [1, 1]} : vector<28x128xbf16> to vector<24x128xbf16>
    %c3 = arith.constant 3 : index
    %c0_12 = arith.constant 0 : index
    %c0_13 = arith.constant 0 : index
    %25 = vector.load %arg3[%c3, %c0_12, %c0_13] : memref<5x128x128xbf16, #tpu.memory_space<vmem>>, vector<1x128x128xbf16>
    %26 = vector.shape_cast %25 : vector<1x128x128xbf16> to vector<128x128xbf16>
    %cst_14 = arith.constant dense<0.000000e+00> : vector<24x128xf32>
    %27 = tpu.matmul %24, %26, %cst_14 {dimension_numbers = #tpu.dot_dimension_numbers<[1], [0], [0], [1], [0, 0, 1, 1], [], []>} : vector<24x128xbf16>, vector<128x128xbf16>, vector<24x128xf32> -> vector<24x128xf32>
    %28 = arith.addf %23, %27 : vector<24x128xf32>
    %29 = vector.extract_strided_slice %4 {offsets = [4, 0], sizes = [24, 128], strides = [1, 1]} : vector<28x128xbf16> to vector<24x128xbf16>
    %c4 = arith.constant 4 : index
    %c0_15 = arith.constant 0 : index
    %c0_16 = arith.constant 0 : index
    %30 = vector.load %arg3[%c4, %c0_15, %c0_16] : memref<5x128x128xbf16, #tpu.memory_space<vmem>>, vector<1x128x128xbf16>
    %31 = vector.shape_cast %30 : vector<1x128x128xbf16> to vector<128x128xbf16>
    %cst_17 = arith.constant dense<0.000000e+00> : vector<24x128xf32>
    %32 = tpu.matmul %29, %31, %cst_17 {dimension_numbers = #tpu.dot_dimension_numbers<[1], [0], [0], [1], [0, 0, 1, 1], [], []>} : vector<24x128xbf16>, vector<128x128xbf16>, vector<24x128xf32> -> vector<24x128xf32>
    %33 = arith.addf %28, %32 : vector<24x128xf32>
    %34 = vector.broadcast %9 : vector<1x128xf32> to vector<24x128xf32>
    %35 = arith.addf %33, %34 : vector<24x128xf32>
    %36 = arith.negf %35 : vector<24x128xf32>
    %37 = math.exp %36 : vector<24x128xf32>
    %cst_18 = arith.constant 1.000000e+00 : f32
    %38 = vector.broadcast %cst_18 : f32 to vector<24x128xf32>
    %39 = arith.addf %38, %37 : vector<24x128xf32>
    %40 = arith.divf %38, %39 : vector<24x128xf32>
    %41 = arith.mulf %35, %40 : vector<24x128xf32>
    %42 = vector.extract_strided_slice %8 {offsets = [2, 0], sizes = [24, 1], strides = [1, 1]} : vector<28x1xi32> to vector<24x1xi32>
    %c0_i32 = arith.constant 0 : i32
    %43 = vector.broadcast %c0_i32 : i32 to vector<24x1xi32>
    %44 = arith.cmpi sge, %42, %43 : vector<24x1xi32>
    %c32_i32 = arith.constant 32 : i32
    %45 = vector.broadcast %c32_i32 : i32 to vector<24x1xi32>
    %46 = arith.cmpi slt, %42, %45 : vector<24x1xi32>
    %47 = arith.andi %44, %46 : vector<24x1xi1>
    %cst_19 = arith.constant 0.000000e+00 : f32
    %48 = vector.shape_cast %47 : vector<24x1xi1> to vector<24x1xi1>
    %49 = vector.broadcast %48 : vector<24x1xi1> to vector<24x128xi1>
    %50 = vector.broadcast %cst_19 : f32 to vector<24x128xf32>
    %51 = arith.select %49, %41, %50 : vector<24x128xi1>, vector<24x128xf32>
    %52 = arith.truncf %51 : vector<24x128xf32> to vector<24x128xbf16>
    %c0_20 = arith.constant 0 : index
    %c0_21 = arith.constant 0 : index
    %53 = vector.load %arg6[%c0_20, %c0_21] : memref<1x128xf32, #tpu.memory_space<vmem>>, vector<1x128xf32>
    %54 = vector.extract_strided_slice %52 {offsets = [0, 0], sizes = [20, 128], strides = [1, 1]} : vector<24x128xbf16> to vector<20x128xbf16>
    %c0_22 = arith.constant 0 : index
    %c0_23 = arith.constant 0 : index
    %c0_24 = arith.constant 0 : index
    %55 = vector.load %arg5[%c0_22, %c0_23, %c0_24] : memref<5x128x128xbf16, #tpu.memory_space<vmem>>, vector<1x128x128xbf16>
    %56 = vector.shape_cast %55 : vector<1x128x128xbf16> to vector<128x128xbf16>
    %cst_25 = arith.constant dense<0.000000e+00> : vector<20x128xf32>
    %57 = tpu.matmul %54, %56, %cst_25 {dimension_numbers = #tpu.dot_dimension_numbers<[1], [0], [0], [1], [0, 0, 1, 1], [], []>} : vector<20x128xbf16>, vector<128x128xbf16>, vector<20x128xf32> -> vector<20x128xf32>
    %58 = vector.extract_strided_slice %52 {offsets = [1, 0], sizes = [20, 128], strides = [1, 1]} : vector<24x128xbf16> to vector<20x128xbf16>
    %c1_26 = arith.constant 1 : index
    %c0_27 = arith.constant 0 : index
    %c0_28 = arith.constant 0 : index
    %59 = vector.load %arg5[%c1_26, %c0_27, %c0_28] : memref<5x128x128xbf16, #tpu.memory_space<vmem>>, vector<1x128x128xbf16>
    %60 = vector.shape_cast %59 : vector<1x128x128xbf16> to vector<128x128xbf16>
    %cst_29 = arith.constant dense<0.000000e+00> : vector<20x128xf32>
    %61 = tpu.matmul %58, %60, %cst_29 {dimension_numbers = #tpu.dot_dimension_numbers<[1], [0], [0], [1], [0, 0, 1, 1], [], []>} : vector<20x128xbf16>, vector<128x128xbf16>, vector<20x128xf32> -> vector<20x128xf32>
    %62 = arith.addf %57, %61 : vector<20x128xf32>
    %63 = vector.extract_strided_slice %52 {offsets = [2, 0], sizes = [20, 128], strides = [1, 1]} : vector<24x128xbf16> to vector<20x128xbf16>
    %c2_30 = arith.constant 2 : index
    %c0_31 = arith.constant 0 : index
    %c0_32 = arith.constant 0 : index
    %64 = vector.load %arg5[%c2_30, %c0_31, %c0_32] : memref<5x128x128xbf16, #tpu.memory_space<vmem>>, vector<1x128x128xbf16>
    %65 = vector.shape_cast %64 : vector<1x128x128xbf16> to vector<128x128xbf16>
    %cst_33 = arith.constant dense<0.000000e+00> : vector<20x128xf32>
    %66 = tpu.matmul %63, %65, %cst_33 {dimension_numbers = #tpu.dot_dimension_numbers<[1], [0], [0], [1], [0, 0, 1, 1], [], []>} : vector<20x128xbf16>, vector<128x128xbf16>, vector<20x128xf32> -> vector<20x128xf32>
    %67 = arith.addf %62, %66 : vector<20x128xf32>
    %68 = vector.extract_strided_slice %52 {offsets = [3, 0], sizes = [20, 128], strides = [1, 1]} : vector<24x128xbf16> to vector<20x128xbf16>
    %c3_34 = arith.constant 3 : index
    %c0_35 = arith.constant 0 : index
    %c0_36 = arith.constant 0 : index
    %69 = vector.load %arg5[%c3_34, %c0_35, %c0_36] : memref<5x128x128xbf16, #tpu.memory_space<vmem>>, vector<1x128x128xbf16>
    %70 = vector.shape_cast %69 : vector<1x128x128xbf16> to vector<128x128xbf16>
    %cst_37 = arith.constant dense<0.000000e+00> : vector<20x128xf32>
    %71 = tpu.matmul %68, %70, %cst_37 {dimension_numbers = #tpu.dot_dimension_numbers<[1], [0], [0], [1], [0, 0, 1, 1], [], []>} : vector<20x128xbf16>, vector<128x128xbf16>, vector<20x128xf32> -> vector<20x128xf32>
    %72 = arith.addf %67, %71 : vector<20x128xf32>
    %73 = vector.extract_strided_slice %52 {offsets = [4, 0], sizes = [20, 128], strides = [1, 1]} : vector<24x128xbf16> to vector<20x128xbf16>
    %c4_38 = arith.constant 4 : index
    %c0_39 = arith.constant 0 : index
    %c0_40 = arith.constant 0 : index
    %74 = vector.load %arg5[%c4_38, %c0_39, %c0_40] : memref<5x128x128xbf16, #tpu.memory_space<vmem>>, vector<1x128x128xbf16>
    %75 = vector.shape_cast %74 : vector<1x128x128xbf16> to vector<128x128xbf16>
    %cst_41 = arith.constant dense<0.000000e+00> : vector<20x128xf32>
    %76 = tpu.matmul %73, %75, %cst_41 {dimension_numbers = #tpu.dot_dimension_numbers<[1], [0], [0], [1], [0, 0, 1, 1], [], []>} : vector<20x128xbf16>, vector<128x128xbf16>, vector<20x128xf32> -> vector<20x128xf32>
    %77 = arith.addf %72, %76 : vector<20x128xf32>
    %78 = vector.broadcast %53 : vector<1x128xf32> to vector<20x128xf32>
    %79 = arith.addf %77, %78 : vector<20x128xf32>
    %80 = arith.negf %79 : vector<20x128xf32>
    %81 = math.exp %80 : vector<20x128xf32>
    %cst_42 = arith.constant 1.000000e+00 : f32
    %82 = vector.broadcast %cst_42 : f32 to vector<20x128xf32>
    %83 = arith.addf %82, %81 : vector<20x128xf32>
    %84 = arith.divf %82, %83 : vector<20x128xf32>
    %85 = arith.mulf %79, %84 : vector<20x128xf32>
    %86 = vector.extract_strided_slice %8 {offsets = [4, 0], sizes = [20, 1], strides = [1, 1]} : vector<28x1xi32> to vector<20x1xi32>
    %c0_i32_43 = arith.constant 0 : i32
    %87 = vector.broadcast %c0_i32_43 : i32 to vector<20x1xi32>
    %88 = arith.cmpi sge, %86, %87 : vector<20x1xi32>
    %c32_i32_44 = arith.constant 32 : i32
    %89 = vector.broadcast %c32_i32_44 : i32 to vector<20x1xi32>
    %90 = arith.cmpi slt, %86, %89 : vector<20x1xi32>
    %91 = arith.andi %88, %90 : vector<20x1xi1>
    %cst_45 = arith.constant 0.000000e+00 : f32
    %92 = vector.shape_cast %91 : vector<20x1xi1> to vector<20x1xi1>
    %93 = vector.broadcast %92 : vector<20x1xi1> to vector<20x128xi1>
    %94 = vector.broadcast %cst_45 : f32 to vector<20x128xf32>
    %95 = arith.select %93, %85, %94 : vector<20x128xi1>, vector<20x128xf32>
    %96 = arith.truncf %95 : vector<20x128xf32> to vector<20x128xbf16>
    %c0_46 = arith.constant 0 : index
    %c0_47 = arith.constant 0 : index
    %97 = vector.load %arg8[%c0_46, %c0_47] : memref<1x128xf32, #tpu.memory_space<vmem>>, vector<1x128xf32>
    %98 = vector.extract_strided_slice %96 {offsets = [0, 0], sizes = [16, 128], strides = [1, 1]} : vector<20x128xbf16> to vector<16x128xbf16>
    %c0_48 = arith.constant 0 : index
    %c0_49 = arith.constant 0 : index
    %c0_50 = arith.constant 0 : index
    %99 = vector.load %arg7[%c0_48, %c0_49, %c0_50] : memref<5x128x128xbf16, #tpu.memory_space<vmem>>, vector<1x128x128xbf16>
    %100 = vector.shape_cast %99 : vector<1x128x128xbf16> to vector<128x128xbf16>
    %cst_51 = arith.constant dense<0.000000e+00> : vector<16x128xf32>
    %101 = tpu.matmul %98, %100, %cst_51 {dimension_numbers = #tpu.dot_dimension_numbers<[1], [0], [0], [1], [0, 0, 1, 1], [], []>} : vector<16x128xbf16>, vector<128x128xbf16>, vector<16x128xf32> -> vector<16x128xf32>
    %102 = vector.extract_strided_slice %96 {offsets = [1, 0], sizes = [16, 128], strides = [1, 1]} : vector<20x128xbf16> to vector<16x128xbf16>
    %c1_52 = arith.constant 1 : index
    %c0_53 = arith.constant 0 : index
    %c0_54 = arith.constant 0 : index
    %103 = vector.load %arg7[%c1_52, %c0_53, %c0_54] : memref<5x128x128xbf16, #tpu.memory_space<vmem>>, vector<1x128x128xbf16>
    %104 = vector.shape_cast %103 : vector<1x128x128xbf16> to vector<128x128xbf16>
    %cst_55 = arith.constant dense<0.000000e+00> : vector<16x128xf32>
    %105 = tpu.matmul %102, %104, %cst_55 {dimension_numbers = #tpu.dot_dimension_numbers<[1], [0], [0], [1], [0, 0, 1, 1], [], []>} : vector<16x128xbf16>, vector<128x128xbf16>, vector<16x128xf32> -> vector<16x128xf32>
    %106 = arith.addf %101, %105 : vector<16x128xf32>
    %107 = vector.extract_strided_slice %96 {offsets = [2, 0], sizes = [16, 128], strides = [1, 1]} : vector<20x128xbf16> to vector<16x128xbf16>
    %c2_56 = arith.constant 2 : index
    %c0_57 = arith.constant 0 : index
    %c0_58 = arith.constant 0 : index
    %108 = vector.load %arg7[%c2_56, %c0_57, %c0_58] : memref<5x128x128xbf16, #tpu.memory_space<vmem>>, vector<1x128x128xbf16>
    %109 = vector.shape_cast %108 : vector<1x128x128xbf16> to vector<128x128xbf16>
    %cst_59 = arith.constant dense<0.000000e+00> : vector<16x128xf32>
    %110 = tpu.matmul %107, %109, %cst_59 {dimension_numbers = #tpu.dot_dimension_numbers<[1], [0], [0], [1], [0, 0, 1, 1], [], []>} : vector<16x128xbf16>, vector<128x128xbf16>, vector<16x128xf32> -> vector<16x128xf32>
    %111 = arith.addf %106, %110 : vector<16x128xf32>
    %112 = vector.extract_strided_slice %96 {offsets = [3, 0], sizes = [16, 128], strides = [1, 1]} : vector<20x128xbf16> to vector<16x128xbf16>
    %c3_60 = arith.constant 3 : index
    %c0_61 = arith.constant 0 : index
    %c0_62 = arith.constant 0 : index
    %113 = vector.load %arg7[%c3_60, %c0_61, %c0_62] : memref<5x128x128xbf16, #tpu.memory_space<vmem>>, vector<1x128x128xbf16>
    %114 = vector.shape_cast %113 : vector<1x128x128xbf16> to vector<128x128xbf16>
    %cst_63 = arith.constant dense<0.000000e+00> : vector<16x128xf32>
    %115 = tpu.matmul %112, %114, %cst_63 {dimension_numbers = #tpu.dot_dimension_numbers<[1], [0], [0], [1], [0, 0, 1, 1], [], []>} : vector<16x128xbf16>, vector<128x128xbf16>, vector<16x128xf32> -> vector<16x128xf32>
    %116 = arith.addf %111, %115 : vector<16x128xf32>
    %117 = vector.extract_strided_slice %96 {offsets = [4, 0], sizes = [16, 128], strides = [1, 1]} : vector<20x128xbf16> to vector<16x128xbf16>
    %c4_64 = arith.constant 4 : index
    %c0_65 = arith.constant 0 : index
    %c0_66 = arith.constant 0 : index
    %118 = vector.load %arg7[%c4_64, %c0_65, %c0_66] : memref<5x128x128xbf16, #tpu.memory_space<vmem>>, vector<1x128x128xbf16>
    %119 = vector.shape_cast %118 : vector<1x128x128xbf16> to vector<128x128xbf16>
    %cst_67 = arith.constant dense<0.000000e+00> : vector<16x128xf32>
    %120 = tpu.matmul %117, %119, %cst_67 {dimension_numbers = #tpu.dot_dimension_numbers<[1], [0], [0], [1], [0, 0, 1, 1], [], []>} : vector<16x128xbf16>, vector<128x128xbf16>, vector<16x128xf32> -> vector<16x128xf32>
    %121 = arith.addf %116, %120 : vector<16x128xf32>
    %122 = vector.broadcast %97 : vector<1x128xf32> to vector<16x128xf32>
    %123 = arith.addf %121, %122 : vector<16x128xf32>
    %124 = arith.negf %123 : vector<16x128xf32>
    %125 = math.exp %124 : vector<16x128xf32>
    %cst_68 = arith.constant 1.000000e+00 : f32
    %126 = vector.broadcast %cst_68 : f32 to vector<16x128xf32>
    %127 = arith.addf %126, %125 : vector<16x128xf32>
    %128 = arith.divf %126, %127 : vector<16x128xf32>
    %129 = arith.mulf %123, %128 : vector<16x128xf32>
    %130 = arith.truncf %129 : vector<16x128xf32> to vector<16x128xbf16>
    %c0_69 = arith.constant 0 : index
    %c0_70 = arith.constant 0 : index
    %c0_71 = arith.constant 0 : index
    %131 = vector.load %arg10[%c0_69, %c0_70, %c0_71] : memref<1x16x128xbf16, #tpu.memory_space<vmem>>, vector<1x16x128xbf16>
    %132 = vector.shape_cast %131 : vector<1x16x128xbf16> to vector<16x128xbf16>
    %133 = vector.shape_cast %130 : vector<16x128xbf16> to vector<1x16x128xbf16>
    tpu.vector_store %arg10[%c0_69, %c0_70, %c0_71], %133 {strides = array<i32>} : memref<1x16x128xbf16, #tpu.memory_space<vmem>>, vector<1x16x128xbf16>,
    %c0_72 = arith.constant 0 : index
    %c0_73 = arith.constant 0 : index
    %134 = vector.load %arg9[%c0_72, %c0_73] : memref<128x128xbf16, #tpu.memory_space<vmem>>, vector<128x128xbf16>
    %cst_74 = arith.constant dense<0.000000e+00> : vector<16x128xf32>
    %135 = tpu.matmul %130, %134, %cst_74 {dimension_numbers = #tpu.dot_dimension_numbers<[1], [0], [0], [1], [0, 0, 1, 1], [], []>} : vector<16x128xbf16>, vector<128x128xbf16>, vector<16x128xf32> -> vector<16x128xf32>
    %136 = tpu.iota {dimensions = array<i32: 1>} : vector<1x128xi32>
    %c10_i32 = arith.constant 10 : i32
    %137 = vector.broadcast %c10_i32 : i32 to vector<1x128xi32>
    %138 = arith.cmpi slt, %136, %137 : vector<1x128xi32>
    %cst_75 = arith.constant -1.000000e+30 : f32
    %139 = vector.shape_cast %138 : vector<1x128xi1> to vector<1x128xi1>
    %140 = vector.broadcast %139 : vector<1x128xi1> to vector<16x128xi1>
    %141 = vector.broadcast %cst_75 : f32 to vector<16x128xf32>
    %142 = arith.select %140, %135, %141 : vector<16x128xi1>, vector<16x128xf32>
    %cst_76 = arith.constant dense<0xFF800000> : vector<16xf32>
    %143 = vector.multi_reduction <maximumf>, %142, %cst_76 [1] : vector<16x128xf32> to vector<16xf32>
    %144 = vector.shape_cast %143 : vector<16xf32> to vector<16x1xf32>
    %145 = vector.broadcast %144 : vector<16x1xf32> to vector<16x128xf32>
    %146 = arith.subf %142, %145 : vector<16x128xf32>
    %147 = math.exp %146 : vector<16x128xf32>
    %148 = vector.broadcast %144 : vector<16x1xf32> to vector<16x128xf32>
    %149 = arith.subf %142, %148 : vector<16x128xf32>
    %cst_77 = arith.constant dense<0.000000e+00> : vector<16xf32>
    %150 = vector.multi_reduction <add>, %147, %cst_77 [1] : vector<16x128xf32> to vector<16xf32>
    %151 = vector.shape_cast %150 : vector<16xf32> to vector<16x1xf32>
    %152 = math.log %151 : vector<16x1xf32>
    %153 = vector.broadcast %152 : vector<16x1xf32> to vector<16x128xf32>
    %154 = arith.subf %149, %153 : vector<16x128xf32>
    %c0_78 = arith.constant 0 : index
    %c0_79 = arith.constant 0 : index
    %c0_80 = arith.constant 0 : index
    %155 = vector.load %arg11[%c0_78, %c0_79, %c0_80] : memref<1x16x128xf32, #tpu.memory_space<vmem>>, vector<1x16x128xf32>
    %156 = vector.shape_cast %155 : vector<1x16x128xf32> to vector<16x128xf32>
    %157 = vector.shape_cast %154 : vector<16x128xf32> to vector<1x16x128xf32>
    tpu.vector_store %arg11[%c0_78, %c0_79, %c0_80], %157 {strides = array<i32>} : memref<1x16x128xf32, #tpu.memory_space<vmem>>, vector<1x16x128xf32>,
    return
  }
  func.func @transform_0(%arg0: i32, %arg1: i32) -> (i32, i32, i32) {
    %c0_i32 = arith.constant 0 : i32
    %c0_i32_0 = arith.constant 0 : i32
    %c0_i32_1 = arith.constant 0 : i32
    return %arg0, %c0_i32, %c0_i32_0 : i32, i32, i32
  }
  func.func @transform_1(%arg0: i32, %arg1: i32) -> (i32, i32, i32) {
    %c0_i32 = arith.constant 0 : i32
    %c0_i32_0 = arith.constant 0 : i32
    %c0_i32_1 = arith.constant 0 : i32
    %c0_i32_2 = arith.constant 0 : i32
    return %c0_i32, %c0_i32_0, %c0_i32_1 : i32, i32, i32
  }
  func.func @transform_2(%arg0: i32, %arg1: i32) -> (i32, i32) {
    %c0_i32 = arith.constant 0 : i32
    %c0_i32_0 = arith.constant 0 : i32
    %c0_i32_1 = arith.constant 0 : i32
    return %c0_i32, %c0_i32_0 : i32, i32
  }
  func.func @transform_3(%arg0: i32, %arg1: i32) -> (i32, i32, i32) {
    %c0_i32 = arith.constant 0 : i32
    %c0_i32_0 = arith.constant 0 : i32
    %c0_i32_1 = arith.constant 0 : i32
    %c0_i32_2 = arith.constant 0 : i32
    return %c0_i32, %c0_i32_0, %c0_i32_1 : i32, i32, i32
  }
  func.func @transform_4(%arg0: i32, %arg1: i32) -> (i32, i32) {
    %c0_i32 = arith.constant 0 : i32
    %c0_i32_0 = arith.constant 0 : i32
    %c0_i32_1 = arith.constant 0 : i32
    return %c0_i32, %c0_i32_0 : i32, i32
  }
  func.func @transform_5(%arg0: i32, %arg1: i32) -> (i32, i32, i32) {
    %c0_i32 = arith.constant 0 : i32
    %c0_i32_0 = arith.constant 0 : i32
    %c0_i32_1 = arith.constant 0 : i32
    %c0_i32_2 = arith.constant 0 : i32
    return %c0_i32, %c0_i32_0, %c0_i32_1 : i32, i32, i32
  }
  func.func @transform_6(%arg0: i32, %arg1: i32) -> (i32, i32) {
    %c0_i32 = arith.constant 0 : i32
    %c0_i32_0 = arith.constant 0 : i32
    %c0_i32_1 = arith.constant 0 : i32
    return %c0_i32, %c0_i32_0 : i32, i32
  }
  func.func @transform_7(%arg0: i32, %arg1: i32) -> (i32, i32) {
    %c0_i32 = arith.constant 0 : i32
    %c0_i32_0 = arith.constant 0 : i32
    %c0_i32_1 = arith.constant 0 : i32
    return %c0_i32, %c0_i32_0 : i32, i32
  }
  func.func @transform_8(%arg0: i32, %arg1: i32) -> (i32, i32, i32) {
    %c0_i32 = arith.constant 0 : i32
    %c0_i32_0 = arith.constant 0 : i32
    return %arg0, %arg1, %c0_i32 : i32, i32, i32
  }
  func.func @transform_9(%arg0: i32, %arg1: i32) -> (i32, i32, i32) {
    %c0_i32 = arith.constant 0 : i32
    %c0_i32_0 = arith.constant 0 : i32
    return %arg0, %arg1, %c0_i32 : i32, i32, i32
  }
}

</mosaic_0001>

<llo_original>
// kernel: tpu_custom_call.1
$region0: #{tpu_custom_call.1}
  #allocation0 [shape = 'u32[]', space=smem, size = 0x4, offset = 0x4, fixed_abs, tag = 'smem constant byte address 0x4 - core index']
  #allocation1 [shape = 'u32[144,128]{1,0:T(1,128)}', space=vmem, size = 0x12000, scoped, tag = 'internal scratch']
  %s0 = inlined_call_operand.vmem [shape: bf16[2,44,128], index: 0, kind: input, shape index: {}]
  %s1 = inlined_call_operand.hbm [shape: bf16[5,128,128], index: 1, kind: input, shape index: {}]
  %s2 = inlined_call_operand.vmem [shape: f32[1,128], index: 2, kind: input, shape index: {}]
  %s3 = inlined_call_operand.hbm [shape: bf16[5,128,128], index: 3, kind: input, shape index: {}]
  %s4 = inlined_call_operand.vmem [shape: f32[1,128], index: 4, kind: input, shape index: {}]
  %s5 = inlined_call_operand.hbm [shape: bf16[5,128,128], index: 5, kind: input, shape index: {}]
  %s6 = inlined_call_operand.vmem [shape: f32[1,128], index: 6, kind: input, shape index: {}]
  %s7 = inlined_call_operand.vmem [shape: bf16[128,128], index: 7, kind: input, shape index: {}]
  %s8 = inlined_call_operand.hbm [shape: bf16[2,32,128], index: 8, kind: output, shape index: {0}]
  %s9 = inlined_call_operand.hbm [shape: f32[2,32,128], index: 9, kind: output, shape index: {1}]
  %10 = xla_tuple %s8, %s9
  %s11 = sld [smem:[#allocation0]]
  $region85: #{tpu_custom_call.1} parent=0
    _
  %s13 = ssub.s32 1, %s11
  %s14 = scalar_select 0, %s13, %s11
  $region1: #{tpu_custom_call.1} parent=0
    #allocation2 [shape = 'u8[163840]{0}', space=vmem, size = 0x28000, scoped, tag = 'input window, operand 1, single buffered']
    #allocation3 [shape = 's32[2]{0}', space=sflag, size = 0x8, scoped, tag = 'scoped memory for tpu_custom_call.1']
    #allocation4 [shape = 's32[2]{0}', space=sflag, size = 0x8, scoped, tag = 'scoped memory for tpu_custom_call.1']
    #allocation5 [shape = 'u8[163840]{0}', space=vmem, size = 0x28000, scoped, tag = 'input window, operand 3, single buffered']
    #allocation6 [shape = 's32[1]{0}', space=sflag, size = 0x4, scoped, tag = 'scoped memory for tpu_custom_call.1']
    #allocation7 [shape = 'u8[163840]{0}', space=vmem, size = 0x28000, scoped, tag = 'input window, operand 5, single buffered']
    #allocation8 [shape = 'u8[8192]{0}', space=vmem, size = 0x2000, scoped, tag = 'output window, operand 0']
    #allocation9 [shape = 'u8[16384]{0}', space=vmem, size = 0x4000, scoped, tag = 'output window, operand 1']
    #allocation10 [shape = 's32[2]{0}', space=sflag, size = 0x8, scoped, tag = 'scoped memory for tpu_custom_call.1']
    %15 = vsyncpa [#allocation3], 0
    %16 = vsyncpa [#allocation6], 0
    %17 = vsyncpa [#allocation4], 0
    %s18 = scalar_lea.sflag [#allocation4], 1
    %19 = vsyncpa %s18, 0
    %20 = vsyncpa [#allocation10], 0
    %s21 = scalar_lea.sflag [#allocation10], 1
    %22 = vsyncpa %s21, 0
    loop: start=0, step=1, limit=6
    $region2: #{tpu_custom_call.1} parent=1 // loop_pre_header
      _
    $region3: #{tpu_custom_call.1} parent=1 // loop_header
      %s24 = sphi 0, %s28
      %p25 = scmp.ge.s32.totalorder %s24, 6
      %s31 = sphi 0, %s43
      %s32 = sphi 0, %s39
      %s33 = sphi 0, %s31
      %s34 = sphi 0, %s32
      %s35 = sphi 0, %s33
      %s36 = sphi 0, %s34
      %s46 = sphi 0, %s48
      %s49 = sphi 0, %s46
      %s50 = sphi 0, %s49
      %s66 = sphi 0, %s50
      %s70 = sphi 0, %s70
      %s72 = sphi 0, %s70
      %s73 = sphi 0, %s72
      %s87 = sphi 0, %s73
      %s91 = sphi 0, %s91
      %s93 = sphi 0, %s91
      %s94 = sphi 0, %s93
      %s108 = sphi 0, %s94
      %s112 = sphi 0, %s112
      %s114 = sphi 0, %s112
      %s115 = sphi 0, %s114
      %s129 = sphi 0, %s115
      %s133 = sphi 0, %s133
      %s135 = sphi 0, %s133
      %s136 = sphi 0, %s135
      %s150 = sphi 0, %s136
      %s154 = sphi 0, %s154
      %s156 = sphi 0, %s154
      %s157 = sphi 0, %s156
      %s171 = sphi 0, %s157
      %s175 = sphi 0, %s175
      %s177 = sphi 0, %s175
      %s178 = sphi 0, %s177
      %s192 = sphi 0, %s178
      %s196 = sphi 0, %s196
      %s198 = sphi 0, %s196
      %s199 = sphi 0, %s198
      %s213 = sphi 0, %s199
      %s221 = sphi 0, %s223
      %s224 = sphi 0, %s221
      %s225 = sphi 0, %s224
      %s241 = sphi 0, %s225
      %s249 = sphi 0, %s251
      %s252 = sphi 0, %s249
      %s253 = sphi 0, %s252
      %s269 = sphi 0, %s253
    $region4: #{tpu_custom_call.1} parent=1 // loop_header_branch
      %27 = sbr.rel (%p25) target = $region8
    $region5: #{tpu_custom_call.1} parent=1 // loop_body
      %s29 = ssub.s32 %s24, 1
      %s30 = ssub.s32 %s24, 2
      %s37 = sadd.s32 1, %s32
      %p38 = scmp.ge.s32.totalorder %s37, 2
      %s39 = scalar_select %p38, 0, %s37
      %s40 = sadd.s32 1, %s31
      %s41 = scalar_select %p38, %s40, %s31
      %p42 = scmp.ge.s32.totalorder %s41, 2
      %s43 = scalar_select %p42, 0, %s41
      %s44 = ssub.s32 %s31, %s43
      %p45 = scmp.eq.s32.totalorder %s44, 0
      %s47 = sadd.s32 %s46, 1
      %s48 = scalar_select %p45, %s46, %s47
      %p51 = pneg %p45
      %p52 = scmp.eq.s32.totalorder %s24, 3
      %p53 = por %p51, %p52
      %p54 = scmp.ne.s32.totalorder %s46, %s49
      %p55 = scmp.eq.s32.totalorder %s24, 0
      %p56 = por %p54, %p55
      %p57 = scmp.ne.s32.totalorder %s46, %s49
      %p58 = scmp.eq.s32.totalorder %s29, 3
      %p59 = por %p57, %p58
      %p60 = scmp.ne.s32.totalorder %s49, %s50
      %p61 = scmp.eq.s32.totalorder %s29, 0
      %p62 = por %p60, %p61
      %p63 = scmp.ne.s32.totalorder %s49, %s50
      %p64 = scmp.eq.s32.totalorder %s30, 3
      %p65 = por %p63, %p64
      %p67 = scmp.ne.s32.totalorder %s50, %s66
      %p68 = scmp.eq.s32.totalorder %s30, 0
      %p69 = por %p67, %p68
      %s71 = sadd.s32 %s70, 1
      %p74 = scmp.eq.s32.totalorder %s24, 3
      %p75 = scmp.ne.s32.totalorder %s70, %s72
      %p76 = scmp.eq.s32.totalorder %s24, 0
      %p77 = por %p75, %p76
      %p78 = scmp.ne.s32.totalorder %s70, %s72
      %p79 = scmp.eq.s32.totalorder %s29, 3
      %p80 = por %p78, %p79
      %p81 = scmp.ne.s32.totalorder %s72, %s73
      %p82 = scmp.eq.s32.totalorder %s29, 0
      %p83 = por %p81, %p82
      %p84 = scmp.ne.s32.totalorder %s72, %s73
      %p85 = scmp.eq.s32.totalorder %s30, 3
      %p86 = por %p84, %p85
      %p88 = scmp.ne.s32.totalorder %s73, %s87
      %p89 = scmp.eq.s32.totalorder %s30, 0
      %p90 = por %p88, %p89
      %s92 = sadd.s32 %s91, 1
      %p95 = scmp.eq.s32.totalorder %s24, 3
      %p96 = scmp.ne.s32.totalorder %s91, %s93
      %p97 = scmp.eq.s32.totalorder %s24, 0
      %p98 = por %p96, %p97
      %p99 = scmp.ne.s32.totalorder %s91, %s93
      %p100 = scmp.eq.s32.totalorder %s29, 3
      %p101 = por %p99, %p100
      %p102 = scmp.ne.s32.totalorder %s93, %s94
      %p103 = scmp.eq.s32.totalorder %s29, 0
      %p104 = por %p102, %p103
      %p105 = scmp.ne.s32.totalorder %s93, %s94
      %p106 = scmp.eq.s32.totalorder %s30, 3
      %p107 = por %p105, %p106
      %p109 = scmp.ne.s32.totalorder %s94, %s108
      %p110 = scmp.eq.s32.totalorder %s30, 0
      %p111 = por %p109, %p110
      %s113 = sadd.s32 %s112, 1
      %p116 = scmp.eq.s32.totalorder %s24, 3
      %p117 = scmp.ne.s32.totalorder %s112, %s114
      %p118 = scmp.eq.s32.totalorder %s24, 0
      %p119 = por %p117, %p118
      %p120 = scmp.ne.s32.totalorder %s112, %s114
      %p121 = scmp.eq.s32.totalorder %s29, 3
      %p122 = por %p120, %p121
      %p123 = scmp.ne.s32.totalorder %s114, %s115
      %p124 = scmp.eq.s32.totalorder %s29, 0
      %p125 = por %p123, %p124
      %p126 = scmp.ne.s32.totalorder %s114, %s115
      %p127 = scmp.eq.s32.totalorder %s30, 3
      %p128 = por %p126, %p127
      %p130 = scmp.ne.s32.totalorder %s115, %s129
      %p131 = scmp.eq.s32.totalorder %s30, 0
      %p132 = por %p130, %p131
      %s134 = sadd.s32 %s133, 1
      %p137 = scmp.eq.s32.totalorder %s24, 3
      %p138 = scmp.ne.s32.totalorder %s133, %s135
      %p139 = scmp.eq.s32.totalorder %s24, 0
      %p140 = por %p138, %p139
      %p141 = scmp.ne.s32.totalorder %s133, %s135
      %p142 = scmp.eq.s32.totalorder %s29, 3
      %p143 = por %p141, %p142
      %p144 = scmp.ne.s32.totalorder %s135, %s136
      %p145 = scmp.eq.s32.totalorder %s29, 0
      %p146 = por %p144, %p145
      %p147 = scmp.ne.s32.totalorder %s135, %s136
      %p148 = scmp.eq.s32.totalorder %s30, 3
      %p149 = por %p147, %p148
      %p151 = scmp.ne.s32.totalorder %s136, %s150
      %p152 = scmp.eq.s32.totalorder %s30, 0
      %p153 = por %p151, %p152
      %s155 = sadd.s32 %s154, 1
      %p158 = scmp.eq.s32.totalorder %s24, 3
      %p159 = scmp.ne.s32.totalorder %s154, %s156
      %p160 = scmp.eq.s32.totalorder %s24, 0
      %p161 = por %p159, %p160
      %p162 = scmp.ne.s32.totalorder %s154, %s156
      %p163 = scmp.eq.s32.totalorder %s29, 3
      %p164 = por %p162, %p163
      %p165 = scmp.ne.s32.totalorder %s156, %s157
      %p166 = scmp.eq.s32.totalorder %s29, 0
      %p167 = por %p165, %p166
      %p168 = scmp.ne.s32.totalorder %s156, %s157
      %p169 = scmp.eq.s32.totalorder %s30, 3
      %p170 = por %p168, %p169
      %p172 = scmp.ne.s32.totalorder %s157, %s171
      %p173 = scmp.eq.s32.totalorder %s30, 0
      %p174 = por %p172, %p173
      %s176 = sadd.s32 %s175, 1
      %p179 = scmp.eq.s32.totalorder %s24, 3
      %p180 = scmp.ne.s32.totalorder %s175, %s177
      %p181 = scmp.eq.s32.totalorder %s24, 0
      %p182 = por %p180, %p181
      %p183 = scmp.ne.s32.totalorder %s175, %s177
      %p184 = scmp.eq.s32.totalorder %s29, 3
      %p185 = por %p183, %p184
      %p186 = scmp.ne.s32.totalorder %s177, %s178
      %p187 = scmp.eq.s32.totalorder %s29, 0
      %p188 = por %p186, %p187
      %p189 = scmp.ne.s32.totalorder %s177, %s178
      %p190 = scmp.eq.s32.totalorder %s30, 3
      %p191 = por %p189, %p190
      %p193 = scmp.ne.s32.totalorder %s178, %s192
      %p194 = scmp.eq.s32.totalorder %s30, 0
      %p195 = por %p193, %p194
      %s197 = sadd.s32 %s196, 1
      %p200 = scmp.eq.s32.totalorder %s24, 3
      %p201 = scmp.ne.s32.totalorder %s196, %s198
      %p202 = scmp.eq.s32.totalorder %s24, 0
      %p203 = por %p201, %p202
      %p204 = scmp.ne.s32.totalorder %s196, %s198
      %p205 = scmp.eq.s32.totalorder %s29, 3
      %p206 = por %p204, %p205
      %p207 = scmp.ne.s32.totalorder %s198, %s199
      %p208 = scmp.eq.s32.totalorder %s29, 0
      %p209 = por %p207, %p208
      %p210 = scmp.ne.s32.totalorder %s198, %s199
      %p211 = scmp.eq.s32.totalorder %s30, 3
      %p212 = por %p210, %p211
      %p214 = scmp.ne.s32.totalorder %s199, %s213
      %p215 = scmp.eq.s32.totalorder %s30, 0
      %p216 = por %p214, %p215
      %s217 = ssub.s32 %s31, %s43
      %s218 = ssub.s32 %s32, %s39
      %s219 = sor.u32 %s217, %s218
      %p220 = scmp.eq.s32.totalorder %s219, 0
      %s222 = sadd.s32 %s221, 1
      %s223 = scalar_select %p220, %s221, %s222
      %p226 = pneg %p220
      %p227 = scmp.eq.s32.totalorder %s24, 3
      %p228 = por %p226, %p227
      %p229 = scmp.ne.s32.totalorder %s221, %s224
      %p230 = scmp.eq.s32.totalorder %s24, 0
      %p231 = por %p229, %p230
      %p232 = scmp.ne.s32.totalorder %s221, %s224
      %p233 = scmp.eq.s32.totalorder %s29, 3
      %p234 = por %p232, %p233
      %p235 = scmp.ne.s32.totalorder %s224, %s225
      %p236 = scmp.eq.s32.totalorder %s29, 0
      %p237 = por %p235, %p236
      %p238 = scmp.ne.s32.totalorder %s224, %s225
      %p239 = scmp.eq.s32.totalorder %s30, 3
      %p240 = por %p238, %p239
      %p242 = scmp.ne.s32.totalorder %s225, %s241
      %p243 = scmp.eq.s32.totalorder %s30, 0
      %p244 = por %p242, %p243
      %s245 = ssub.s32 %s31, %s43
      %s246 = ssub.s32 %s32, %s39
      %s247 = sor.u32 %s245, %s246
      %p248 = scmp.eq.s32.totalorder %s247, 0
      %s250 = sadd.s32 %s249, 1
      %s251 = scalar_select %p248, %s249, %s250
      %p254 = pneg %p248
      %p255 = scmp.eq.s32.totalorder %s24, 3
      %p256 = por %p254, %p255
      %p257 = scmp.ne.s32.totalorder %s249, %s252
      %p258 = scmp.eq.s32.totalorder %s24, 0
      %p259 = por %p257, %p258
      %p260 = scmp.ne.s32.totalorder %s249, %s252
      %p261 = scmp.eq.s32.totalorder %s29, 3
      %p262 = por %p260, %p261
      %p263 = scmp.ne.s32.totalorder %s252, %s253
      %p264 = scmp.eq.s32.totalorder %s29, 0
      %p265 = por %p263, %p264
      %p266 = scmp.ne.s32.totalorder %s252, %s253
      %p267 = scmp.eq.s32.totalorder %s30, 3
      %p268 = por %p266, %p267
      %p270 = scmp.ne.s32.totalorder %s253, %s269
      %p271 = scmp.eq.s32.totalorder %s30, 0
      %p272 = por %p270, %p271
      %p273 = scmp.le.s32.totalorder 1, %s24
      %p274 = scmp.lt.s32.totalorder %s24, 5
      %p275 = pnand %p273, %p274
      %p276 = pneg %p275
      // Predicated region
      $region9: #{tpu_custom_call.1} parent=5 // pred_check
        _
      $region10: #{tpu_custom_call.1} parent=5 // pred_check_branch
        %278 = sbr.rel (%p275) target = $region12
      $region11: #{tpu_custom_call.1} parent=5 // pred_region
        %s279 = ssub.s32 %s24, 1
        // Predicated region
        $region13: #{tpu_custom_call.1} parent=11 // pred_check
          %p280 = pneg %p83
        $region14: #{tpu_custom_call.1} parent=11 // pred_check_branch
          %282 = sbr.rel (%p280) target = $region16
        $region15: #{tpu_custom_call.1} parent=11 // pred_region
          %s284 = ssub.s32 5120, 5120
          %285 = vsyncadd [#allocation3], %s284
          %s286 = sshll.u32 [#allocation2], 4
          %s287 = int_to_ptr.vmem [resolvable:$true] %s286
          %292 = dma.hbm_to_vmem [thread:$0]  %s1, 5120, %s287, [#allocation3], 64, 64, 4
        $region16: #{tpu_custom_call.1} parent=11 // pred_fallthru
          _
        // Predicated region
        $region17: #{tpu_custom_call.1} parent=11 // pred_check
          %p293 = pneg %p104
        $region18: #{tpu_custom_call.1} parent=11 // pred_check_branch
          %295 = sbr.rel (%p293) target = $region20
        $region19: #{tpu_custom_call.1} parent=11 // pred_region
          _
        $region20: #{tpu_custom_call.1} parent=11 // pred_fallthru
          _
        // Predicated region
        $region21: #{tpu_custom_call.1} parent=11 // pred_check
          %p296 = pneg %p125
        $region22: #{tpu_custom_call.1} parent=11 // pred_check_branch
          %298 = sbr.rel (%p296) target = $region24
        $region23: #{tpu_custom_call.1} parent=11 // pred_region
          %s300 = ssub.s32 5120, 5120
          %301 = vsyncadd [#allocation6], %s300
          %s302 = sshll.u32 [#allocation5], 4
          %s303 = int_to_ptr.vmem [resolvable:$true] %s302
          %308 = dma.hbm_to_vmem [thread:$0]  %s3, 5120, %s303, [#allocation6], 64, 64, 4
        $region24: #{tpu_custom_call.1} parent=11 // pred_fallthru
          _
        // Predicated region
        $region25: #{tpu_custom_call.1} parent=11 // pred_check
          %p309 = pneg %p146
        $region26: #{tpu_custom_call.1} parent=11 // pred_check_branch
          %311 = sbr.rel (%p309) target = $region28
        $region27: #{tpu_custom_call.1} parent=11 // pred_region
          _
        $region28: #{tpu_custom_call.1} parent=11 // pred_fallthru
          _
        // Predicated region
        $region29: #{tpu_custom_call.1} parent=11 // pred_check
          %p312 = pneg %p167
        $region30: #{tpu_custom_call.1} parent=11 // pred_check_branch
          %314 = sbr.rel (%p312) target = $region32
        $region31: #{tpu_custom_call.1} parent=11 // pred_region
          %s316 = ssub.s32 5120, 5120
          %317 = vsyncadd [#allocation6], %s316
          %s318 = sshll.u32 [#allocation7], 4
          %s319 = int_to_ptr.vmem [resolvable:$true] %s318
          %324 = dma.hbm_to_vmem [thread:$0]  %s5, 5120, %s319, [#allocation6], 64, 64, 4
        $region32: #{tpu_custom_call.1} parent=11 // pred_fallthru
          _
        // Predicated region
        $region33: #{tpu_custom_call.1} parent=11 // pred_check
          %p325 = pneg %p188
        $region34: #{tpu_custom_call.1} parent=11 // pred_check_branch
          %327 = sbr.rel (%p325) target = $region36
        $region35: #{tpu_custom_call.1} parent=11 // pred_region
          _
        $region36: #{tpu_custom_call.1} parent=11 // pred_fallthru
          _
        // Predicated region
        $region37: #{tpu_custom_call.1} parent=11 // pred_check
          %p328 = pneg %p209
        $region38: #{tpu_custom_call.1} parent=11 // pred_check_branch
          %330 = sbr.rel (%p328) target = $region40
        $region39: #{tpu_custom_call.1} parent=11 // pred_region
          _
        $region40: #{tpu_custom_call.1} parent=11 // pred_fallthru
          _
      $region12: #{tpu_custom_call.1} parent=5 // pred_fallthru
        _
      %p331 = scmp.lt.s32.totalorder %s24, 4
      // Predicated region
      $region41: #{tpu_custom_call.1} parent=5 // pred_check
        %p332 = pneg %p331
      $region42: #{tpu_custom_call.1} parent=5 // pred_check_branch
        %334 = sbr.rel (%p332) target = $region44
      $region43: #{tpu_custom_call.1} parent=5 // pred_region
        // Predicated region
        $region45: #{tpu_custom_call.1} parent=43 // pred_check
          %p335 = pneg %p56
        $region46: #{tpu_custom_call.1} parent=43 // pred_check_branch
          %337 = sbr.rel (%p335) target = $region48
        $region47: #{tpu_custom_call.1} parent=43 // pred_region
          %p338 = scmp.lt.s32.totalorder %s31, 1
          %s339 = scalar_select %p338, %s31, 1
          %s340 = smul.addr %s339, 6
          %s341 = smul.addr %s340, 4
          %s342 = scalar_lea.vmem %s0, %s341
        $region48: #{tpu_custom_call.1} parent=43 // pred_fallthru
          _
      $region44: #{tpu_custom_call.1} parent=5 // pred_fallthru
        _
      %p343 = scmp.le.s32.totalorder 1, %s24
      %p344 = scmp.lt.s32.totalorder %s24, 5
      %p345 = pnand %p343, %p344
      %p346 = pneg %p345
      // Predicated region
      $region49: #{tpu_custom_call.1} parent=5 // pred_check
        _
      $region50: #{tpu_custom_call.1} parent=5 // pred_check_branch
        %348 = sbr.rel (%p345) target = $region52
      $region51: #{tpu_custom_call.1} parent=5 // pred_region
        %s349 = ssub.s32 %s24, 1
        // Predicated region
        $region53: #{tpu_custom_call.1} parent=51 // pred_check
          %p350 = pneg %p83
        $region54: #{tpu_custom_call.1} parent=51 // pred_check_branch
          %352 = sbr.rel (%p350) target = $region56
        $region55: #{tpu_custom_call.1} parent=51 // pred_region
          %353 = dma.done [#allocation3], 5120
        $region56: #{tpu_custom_call.1} parent=51 // pred_fallthru
          _
        // Predicated region
        $region57: #{tpu_custom_call.1} parent=51 // pred_check
          %p354 = pneg %p125
        $region58: #{tpu_custom_call.1} parent=51 // pred_check_branch
          %356 = sbr.rel (%p354) target = $region60
        $region59: #{tpu_custom_call.1} parent=51 // pred_region
          %357 = dma.done [#allocation6], 5120
        $region60: #{tpu_custom_call.1} parent=51 // pred_fallthru
          _
        // Predicated region
        $region61: #{tpu_custom_call.1} parent=51 // pred_check
          %p358 = pneg %p167
        $region62: #{tpu_custom_call.1} parent=51 // pred_check_branch
          %360 = sbr.rel (%p358) target = $region64
        $region63: #{tpu_custom_call.1} parent=51 // pred_region
          %361 = dma.done [#allocation6], 5120
        $region64: #{tpu_custom_call.1} parent=51 // pred_fallthru
          _
        %p362 = scmp.lt.s32.totalorder %s33, 1
        %s363 = scalar_select %p362, %s33, 1
        %s364 = smul.addr %s363, 6
        %s365 = smul.addr %s364, 4
        %s366 = scalar_lea.vmem %s0, %s365
        %p367 = pneg %p62
        %p368 = pneg %p59
        %p369 = pneg %p83
        %p370 = pneg %p80
        %p371 = pneg %p104
        %p372 = pneg %p101
        %p373 = pneg %p125
        %p374 = pneg %p122
        %p375 = pneg %p146
        %p376 = pneg %p143
        %p377 = pneg %p167
        %p378 = pneg %p164
        %p379 = pneg %p188
        %p380 = pneg %p185
        %p381 = pneg %p209
        %p382 = pneg %p206
        %p383 = pneg %p237
        %p384 = pneg %p234
        %s385 = sand.u32 %s224, 1
        %s386 = scalar_lea.sflag [#allocation4], %s385
        %s387 = sand.u32 %s224, 1
        %s388 = smul.addr %s387, 8
        %s389 = scalar_lea.vmem [#allocation8], %s388
        %p390 = pneg %p265
        %p391 = pneg %p262
        %s392 = sand.u32 %s252, 1
        %s393 = scalar_lea.sflag [#allocation10], %s392
        %s394 = sand.u32 %s252, 1
        %s395 = smul.addr %s394, 16
        %s396 = scalar_lea.vmem [#allocation9], %s395
        %p397 = scmp.lt.s32.totalorder %s33, 1
        %s398 = scalar_select %p397, %s33, 1
        %s399 = smul.addr %s398, 6
        %s400 = smul.addr %s399, 4
        %s401 = scalar_lea.vmem %s0, %s400
        %s402 = smul.u32 2, %s34
        %s403 = smul.u32 2, %s34
        %s405 = smul.u32 %s34, 16
        %s406 = sshra.s32 %s405, 3
        %s407 = sand.u32 %s405, 7
        %s408 = smul.addr %s406, 4
        %s409 = scalar_lea.vmem %s401, %s408
        %v410 = vld [vmem:[%s409] sm:$0xf]
        %v411 = vld [vmem:[%s409 + $0x4] sm:$0xf]
        %v412 = vld [vmem:[%s409 + $0x8] sm:$0xf]
        %v413 = vld [vmem:[%s409 + $0xc] sm:$0x3]
        %v414 = vlaneseq
        %v415 = vshrl.u32 %v414, 7
        %v416 = vadd.s32 %v415, 8
        %v417 = vadd.s32 %v415, 16
        %v418 = vadd.s32 %v415, 24
        %s419 = ssub.s32 %s405, 6
        %v420 = vstv %s419
        %v421 = vadd.s32 %v420, %v415
        %v422 = vadd.s32 %v420, %v416
        %v423 = vadd.s32 %v420, %v417
        %v424 = vadd.s32 %v420, %v418
        %v425 = vld [vmem:[%s2] sm:$0x1]
        %v426 = vld [vmem:[#allocation2] sm:$0xf]
        %v427 = vld [vmem:[#allocation2 + $0x4] sm:$0xf]
        %v428 = vld [vmem:[#allocation2 + $0x8] sm:$0xf]
        %v429 = vld [vmem:[#allocation2 + $0xc] sm:$0xf]
        %v430 = vld [vmem:[#allocation2 + $0x10] sm:$0xf]
        %v431 = vld [vmem:[#allocation2 + $0x14] sm:$0xf]
        %v432 = vld [vmem:[#allocation2 + $0x18] sm:$0xf]
        %v433 = vld [vmem:[#allocation2 + $0x1c] sm:$0xf]
        %v434 = vld [vmem:[#allocation2 + $0x20] sm:$0xf]
        %v435 = vld [vmem:[#allocation2 + $0x24] sm:$0xf]
        %v436 = vld [vmem:[#allocation2 + $0x28] sm:$0xf]
        %v437 = vld [vmem:[#allocation2 + $0x2c] sm:$0xf]
        %v438 = vld [vmem:[#allocation2 + $0x30] sm:$0xf]
        %v439 = vld [vmem:[#allocation2 + $0x34] sm:$0xf]
        %v440 = vld [vmem:[#allocation2 + $0x38] sm:$0xf]
        %v441 = vld [vmem:[#allocation2 + $0x3c] sm:$0xf]
        %s442 = scalar_lea.vmem [#allocation2], 64
        %v443 = vld [vmem:[%s442] sm:$0xf]
        %v444 = vld [vmem:[%s442 + $0x4] sm:$0xf]
        %v445 = vld [vmem:[%s442 + $0x8] sm:$0xf]
        %v446 = vld [vmem:[%s442 + $0xc] sm:$0xf]
        %v447 = vld [vmem:[%s442 + $0x10] sm:$0xf]
        %v448 = vld [vmem:[%s442 + $0x14] sm:$0xf]
        %v449 = vld [vmem:[%s442 + $0x18] sm:$0xf]
        %v450 = vld [vmem:[%s442 + $0x1c] sm:$0xf]
        %v451 = vld [vmem:[%s442 + $0x20] sm:$0xf]
        %v452 = vld [vmem:[%s442 + $0x24] sm:$0xf]
        %v453 = vld [vmem:[%s442 + $0x28] sm:$0xf]
        %v454 = vld [vmem:[%s442 + $0x2c] sm:$0xf]
        %v455 = vld [vmem:[%s442 + $0x30] sm:$0xf]
        %v456 = vld [vmem:[%s442 + $0x34] sm:$0xf]
        %v457 = vld [vmem:[%s442 + $0x38] sm:$0xf]
        %v458 = vld [vmem:[%s442 + $0x3c] sm:$0xf]
        %v463 = vunpack.c.l.b16 %v410
        %v464 = vunpack.c.l.b16 %v411
        %v465 = vunpack.c.l.b16 %v412
        %v466 = vunpack.c.l.b16 %v413
        %v467 = vpack.c.b16 %v464, %v463
        %v468 = vpack.c.b16 %v466, %v465
        %vm469 = vsmask.f32 7424
        %v471 = vshrl.u32 %v467, 16
        %v473 = vshll.u32 %v467, 16
        %v475 = vrot.slane %v473, 1
        %v476 = vor.u32 %v471, %v475
        %v478 = vshll.u32 %v468, 16
        %v480 = vrot.slane %v478, 1
        %v481 = vsel %vm469, %v476, %v480
        %v482 = vshrl.u32 %v468, 16
        %v484 = vor.u32 %v482, %v480
        %v503 = vunpack.c.l.b16 %v443
        %v504 = vunpack.c.l.b16 %v444
        %v505 = vunpack.c.l.b16 %v445
        %v506 = vunpack.c.l.b16 %v446
        %v507 = vunpack.c.l.b16 %v447
        %v508 = vunpack.c.l.b16 %v448
        %v509 = vunpack.c.l.b16 %v449
        %v510 = vunpack.c.l.b16 %v450
        %v511 = vunpack.c.l.b16 %v451
        %v512 = vunpack.c.l.b16 %v452
        %v513 = vunpack.c.l.b16 %v453
        %v514 = vunpack.c.l.b16 %v454
        %v515 = vunpack.c.l.b16 %v455
        %v516 = vunpack.c.l.b16 %v456
        %v517 = vunpack.c.l.b16 %v457
        %v518 = vunpack.c.l.b16 %v458
        %v519 = vpack.c.b16 %v504, %v503
        %v520 = vpack.c.b16 %v506, %v505
        %v521 = vpack.c.b16 %v508, %v507
        %v522 = vpack.c.b16 %v510, %v509
        %v523 = vpack.c.b16 %v512, %v511
        %v524 = vpack.c.b16 %v514, %v513
        %v525 = vpack.c.b16 %v516, %v515
        %v526 = vpack.c.b16 %v518, %v517
        %535 = vmatprep.subr.bf16.mxu0 0
        %536 = vmatpush1.bf16.msra.mxu0 %v519
        %537 = vmatprep.subr.bf16.mxu0 0
        %538 = vmatpush1.bf16.msra.mxu0 %v520
        %539 = vmatprep.subr.bf16.mxu0 0
        %540 = vmatpush1.bf16.msra.mxu0 %v521
        %541 = vmatprep.subr.bf16.mxu0 0
        %542 = vmatpush1.bf16.msra.mxu0 %v522
        %543 = vmatprep.subr.bf16.mxu0 0
        %544 = vmatpush1.bf16.msra.mxu0 %v523
        %545 = vmatprep.subr.bf16.mxu0 0
        %546 = vmatpush1.bf16.msra.mxu0 %v524
        %547 = vmatprep.subr.bf16.mxu0 0
        %548 = vmatpush1.bf16.msra.mxu0 %v525
        %549 = vmatprep.subr.bf16.mxu0 0
        %550 = vmatpush1.bf16.msra.mxu0 %v526
        %551 = vmatprep.subr.bf16.mxu0 0
        %552 = vmatpush1.bf16.msra.mxu0 0
        %553 = vmatprep.subr.bf16.mxu0 0
        %554 = vmatpush1.bf16.msra.mxu0 0
        %555 = vmatprep.subr.bf16.mxu0 0
        %556 = vmatpush1.bf16.msra.mxu0 0
        %557 = vmatprep.subr.bf16.mxu0 0
        %558 = vmatpush1.bf16.msra.mxu0 0
        %559 = vmatprep.subr.bf16.mxu0 0
        %560 = vmatpush1.bf16.msra.mxu0 0
        %561 = vmatprep.subr.bf16.mxu0 0
        %562 = vmatpush1.bf16.msra.mxu0 0
        %563 = vmatprep.subr.bf16.mxu0 0
        %564 = vmatpush1.bf16.msra.mxu0 0
        %565 = vmatprep.subr.bf16.mxu0 0
        %566 = vmatpush1.bf16.msra.mxu0 0
        %567 = vmatprep.mubr.bf16.mxu0 0
        %568 = vmatmul.mubr.bf16.gmra.mrb[0].mxu0 %v481
        %v569 = vpop.f32.mrb[0].mxu0
        %v570 = vadd.f32 0.0, %v569
        %v571 = vpop.f32.mrb[0].mxu0
        %v572 = vpop.f32.mrb[0].mxu0
        %v573 = vadd.f32 0.0, %v572
        %v574 = vpop.f32.mrb[0].mxu0
        %575 = vmatprep.mubr.bf16.mxu0 0
        %576 = vmatmul.mubr.bf16.gmra.mrb[0].mxu0 %v484
        %v577 = vpop.f32.mrb[0].mxu0
        %v578 = vadd.f32 0.0, %v577
        %v579 = vpop.f32.mrb[0].mxu0
        %v580 = vpop.f32.mrb[0].mxu0
        %v581 = vpop.f32.mrb[0].mxu0
        %582 = vdwg.mxu0
        %v583 = vpack.c.b16 %v465, %v465
        %v602 = vunpack.c.l.b16 %v426
        %v603 = vunpack.c.l.b16 %v427
        %v604 = vunpack.c.l.b16 %v428
        %v605 = vunpack.c.l.b16 %v429
        %v606 = vunpack.c.l.b16 %v430
        %v607 = vunpack.c.l.b16 %v431
        %v608 = vunpack.c.l.b16 %v432
        %v609 = vunpack.c.l.b16 %v433
        %v610 = vunpack.c.l.b16 %v434
        %v611 = vunpack.c.l.b16 %v435
        %v612 = vunpack.c.l.b16 %v436
        %v613 = vunpack.c.l.b16 %v437
        %v614 = vunpack.c.l.b16 %v438
        %v615 = vunpack.c.l.b16 %v439
        %v616 = vunpack.c.l.b16 %v440
        %v617 = vunpack.c.l.b16 %v441
        %v618 = vpack.c.b16 %v603, %v602
        %v619 = vpack.c.b16 %v605, %v604
        %v620 = vpack.c.b16 %v607, %v606
        %v621 = vpack.c.b16 %v609, %v608
        %v622 = vpack.c.b16 %v611, %v610
        %v623 = vpack.c.b16 %v613, %v612
        %v624 = vpack.c.b16 %v615, %v614
        %v625 = vpack.c.b16 %v617, %v616
        %634 = vmatprep.subr.bf16.mxu0 0
        %635 = vmatpush1.bf16.msra.mxu0 %v618
        %636 = vmatprep.subr.bf16.mxu0 0
        %637 = vmatpush1.bf16.msra.mxu0 %v619
        %638 = vmatprep.subr.bf16.mxu0 0
        %639 = vmatpush1.bf16.msra.mxu0 %v620
        %640 = vmatprep.subr.bf16.mxu0 0
        %641 = vmatpush1.bf16.msra.mxu0 %v621
        %642 = vmatprep.subr.bf16.mxu0 0
        %643 = vmatpush1.bf16.msra.mxu0 %v622
        %644 = vmatprep.subr.bf16.mxu0 0
        %645 = vmatpush1.bf16.msra.mxu0 %v623
        %646 = vmatprep.subr.bf16.mxu0 0
        %647 = vmatpush1.bf16.msra.mxu0 %v624
        %648 = vmatprep.subr.bf16.mxu0 0
        %649 = vmatpush1.bf16.msra.mxu0 %v625
        %650 = vmatprep.subr.bf16.mxu0 0
        %651 = vmatpush1.bf16.msra.mxu0 0
        %652 = vmatprep.subr.bf16.mxu0 0
        %653 = vmatpush1.bf16.msra.mxu0 0
        %654 = vmatprep.subr.bf16.mxu0 0
        %655 = vmatpush1.bf16.msra.mxu0 0
        %656 = vmatprep.subr.bf16.mxu0 0
        %657 = vmatpush1.bf16.msra.mxu0 0
        %658 = vmatprep.subr.bf16.mxu0 0
        %659 = vmatpush1.bf16.msra.mxu0 0
        %660 = vmatprep.subr.bf16.mxu0 0
        %661 = vmatpush1.bf16.msra.mxu0 0
        %662 = vmatprep.subr.bf16.mxu0 0
        %663 = vmatpush1.bf16.msra.mxu0 0
        %664 = vmatprep.subr.bf16.mxu0 0
        %665 = vmatpush1.bf16.msra.mxu0 0
        %666 = vmatprep.mubr.bf16.mxu0 0
        %667 = vmatmul.mubr.bf16.gmra.mrb[0].mxu0 %v467
        %v668 = vpop.f32.mrb[0].mxu0
        %v669 = vadd.f32 %v570, %v668
        %v670 = vpop.f32.mrb[0].mxu0
        %v671 = vpop.f32.mrb[0].mxu0
        %v672 = vadd.f32 %v573, %v671
        %v673 = vpop.f32.mrb[0].mxu0
        %674 = vmatprep.mubr.bf16.mxu0 0
        %675 = vmatmul.mubr.bf16.gmra.mrb[0].mxu0 %v583
        %v676 = vpop.f32.mrb[0].mxu0
        %v677 = vadd.f32 %v578, %v676
        %v678 = vpop.f32.mrb[0].mxu0
        %v679 = vpop.f32.mrb[0].mxu0
        %v680 = vpop.f32.mrb[0].mxu0
        %681 = vdwg.mxu0
        %s682 = scalar_lea.vmem [#allocation2], 128
        %v683 = vld [vmem:[%s682] sm:$0xf]
        %v684 = vld [vmem:[%s682 + $0x4] sm:$0xf]
        %v685 = vld [vmem:[%s682 + $0x8] sm:$0xf]
        %v686 = vld [vmem:[%s682 + $0xc] sm:$0xf]
        %v687 = vld [vmem:[%s682 + $0x10] sm:$0xf]
        %v688 = vld [vmem:[%s682 + $0x14] sm:$0xf]
        %v689 = vld [vmem:[%s682 + $0x18] sm:$0xf]
        %v690 = vld [vmem:[%s682 + $0x1c] sm:$0xf]
        %v691 = vld [vmem:[%s682 + $0x20] sm:$0xf]
        %v692 = vld [vmem:[%s682 + $0x24] sm:$0xf]
        %v693 = vld [vmem:[%s682 + $0x28] sm:$0xf]
        %v694 = vld [vmem:[%s682 + $0x2c] sm:$0xf]
        %v695 = vld [vmem:[%s682 + $0x30] sm:$0xf]
        %v696 = vld [vmem:[%s682 + $0x34] sm:$0xf]
        %v697 = vld [vmem:[%s682 + $0x38] sm:$0xf]
        %v698 = vld [vmem:[%s682 + $0x3c] sm:$0xf]
        %vm699 = vcmask 1046528
        %v700 = vrot.slane %v467, 1
        %v701 = vrot.slane %v468, 1
        %v702 = vsel %vm699, %v700, %v701
        %v721 = vunpack.c.l.b16 %v683
        %v722 = vunpack.c.l.b16 %v684
        %v723 = vunpack.c.l.b16 %v685
        %v724 = vunpack.c.l.b16 %v686
        %v725 = vunpack.c.l.b16 %v687
        %v726 = vunpack.c.l.b16 %v688
        %v727 = vunpack.c.l.b16 %v689
        %v728 = vunpack.c.l.b16 %v690
        %v729 = vunpack.c.l.b16 %v691
        %v730 = vunpack.c.l.b16 %v692
        %v731 = vunpack.c.l.b16 %v693
        %v732 = vunpack.c.l.b16 %v694
        %v733 = vunpack.c.l.b16 %v695
        %v734 = vunpack.c.l.b16 %v696
        %v735 = vunpack.c.l.b16 %v697
        %v736 = vunpack.c.l.b16 %v698
        %v737 = vpack.c.b16 %v722, %v721
        %v738 = vpack.c.b16 %v724, %v723
        %v739 = vpack.c.b16 %v726, %v725
        %v740 = vpack.c.b16 %v728, %v727
        %v741 = vpack.c.b16 %v730, %v729
        %v742 = vpack.c.b16 %v732, %v731
        %v743 = vpack.c.b16 %v734, %v733
        %v744 = vpack.c.b16 %v736, %v735
        %753 = vmatprep.subr.bf16.mxu0 0
        %754 = vmatpush1.bf16.msra.mxu0 %v737
        %755 = vmatprep.subr.bf16.mxu0 0
        %756 = vmatpush1.bf16.msra.mxu0 %v738
        %757 = vmatprep.subr.bf16.mxu0 0
        %758 = vmatpush1.bf16.msra.mxu0 %v739
        %759 = vmatprep.subr.bf16.mxu0 0
        %760 = vmatpush1.bf16.msra.mxu0 %v740
        %761 = vmatprep.subr.bf16.mxu0 0
        %762 = vmatpush1.bf16.msra.mxu0 %v741
        %763 = vmatprep.subr.bf16.mxu0 0
        %764 = vmatpush1.bf16.msra.mxu0 %v742
        %765 = vmatprep.subr.bf16.mxu0 0
        %766 = vmatpush1.bf16.msra.mxu0 %v743
        %767 = vmatprep.subr.bf16.mxu0 0
        %768 = vmatpush1.bf16.msra.mxu0 %v744
        %769 = vmatprep.subr.bf16.mxu0 0
        %770 = vmatpush1.bf16.msra.mxu0 0
        %771 = vmatprep.subr.bf16.mxu0 0
        %772 = vmatpush1.bf16.msra.mxu0 0
        %773 = vmatprep.subr.bf16.mxu0 0
        %774 = vmatpush1.bf16.msra.mxu0 0
        %775 = vmatprep.subr.bf16.mxu0 0
        %776 = vmatpush1.bf16.msra.mxu0 0
        %777 = vmatprep.subr.bf16.mxu0 0
        %778 = vmatpush1.bf16.msra.mxu0 0
        %779 = vmatprep.subr.bf16.mxu0 0
        %780 = vmatpush1.bf16.msra.mxu0 0
        %781 = vmatprep.subr.bf16.mxu0 0
        %782 = vmatpush1.bf16.msra.mxu0 0
        %783 = vmatprep.subr.bf16.mxu0 0
        %784 = vmatpush1.bf16.msra.mxu0 0
        %785 = vmatprep.mubr.bf16.mxu0 0
        %786 = vmatmul.mubr.bf16.gmra.mrb[0].mxu0 %v702
        %v787 = vpop.f32.mrb[0].mxu0
        %v788 = vadd.f32 0.0, %v787
        %v789 = vpop.f32.mrb[0].mxu0
        %v790 = vpop.f32.mrb[0].mxu0
        %v791 = vadd.f32 0.0, %v790
        %v792 = vpop.f32.mrb[0].mxu0
        %793 = vmatprep.mubr.bf16.mxu0 0
        %794 = vmatmul.mubr.bf16.gmra.mrb[0].mxu0 %v701
        %v795 = vpop.f32.mrb[0].mxu0
        %v796 = vadd.f32 0.0, %v795
        %v797 = vpop.f32.mrb[0].mxu0
        %v798 = vpop.f32.mrb[0].mxu0
        %v799 = vpop.f32.mrb[0].mxu0
        %800 = vdwg.mxu0
        %v801 = vadd.f32 %v669, %v788
        %v802 = vadd.f32 %v672, %v791
        %v803 = vadd.f32 %v677, %v796
        %s804 = scalar_lea.vmem [#allocation2], 192
        %v805 = vld [vmem:[%s804] sm:$0xf]
        %v806 = vld [vmem:[%s804 + $0x4] sm:$0xf]
        %v807 = vld [vmem:[%s804 + $0x8] sm:$0xf]
        %v808 = vld [vmem:[%s804 + $0xc] sm:$0xf]
        %v809 = vld [vmem:[%s804 + $0x10] sm:$0xf]
        %v810 = vld [vmem:[%s804 + $0x14] sm:$0xf]
        %v811 = vld [vmem:[%s804 + $0x18] sm:$0xf]
        %v812 = vld [vmem:[%s804 + $0x1c] sm:$0xf]
        %v813 = vld [vmem:[%s804 + $0x20] sm:$0xf]
        %v814 = vld [vmem:[%s804 + $0x24] sm:$0xf]
        %v815 = vld [vmem:[%s804 + $0x28] sm:$0xf]
        %v816 = vld [vmem:[%s804 + $0x2c] sm:$0xf]
        %v817 = vld [vmem:[%s804 + $0x30] sm:$0xf]
        %v818 = vld [vmem:[%s804 + $0x34] sm:$0xf]
        %v819 = vld [vmem:[%s804 + $0x38] sm:$0xf]
        %v820 = vld [vmem:[%s804 + $0x3c] sm:$0xf]
        %vm821 = vsmask.f32 6400
        %v822 = vrot.slane %v471, 1
        %v823 = vrot.slane %v473, 2
        %v824 = vor.u32 %v822, %v823
        %v825 = vrot.slane %v482, 1
        %v826 = vrot.slane %v478, 2
        %v827 = vor.u32 %v825, %v826
        %v828 = vsel %vm821, %v824, %v827
        %v847 = vunpack.c.l.b16 %v805
        %v848 = vunpack.c.l.b16 %v806
        %v849 = vunpack.c.l.b16 %v807
        %v850 = vunpack.c.l.b16 %v808
        %v851 = vunpack.c.l.b16 %v809
        %v852 = vunpack.c.l.b16 %v810
        %v853 = vunpack.c.l.b16 %v811
        %v854 = vunpack.c.l.b16 %v812
        %v855 = vunpack.c.l.b16 %v813
        %v856 = vunpack.c.l.b16 %v814
        %v857 = vunpack.c.l.b16 %v815
        %v858 = vunpack.c.l.b16 %v816
        %v859 = vunpack.c.l.b16 %v817
        %v860 = vunpack.c.l.b16 %v818
        %v861 = vunpack.c.l.b16 %v819
        %v862 = vunpack.c.l.b16 %v820
        %v863 = vpack.c.b16 %v848, %v847
        %v864 = vpack.c.b16 %v850, %v849
        %v865 = vpack.c.b16 %v852, %v851
        %v866 = vpack.c.b16 %v854, %v853
        %v867 = vpack.c.b16 %v856, %v855
        %v868 = vpack.c.b16 %v858, %v857
        %v869 = vpack.c.b16 %v860, %v859
        %v870 = vpack.c.b16 %v862, %v861
        %879 = vmatprep.subr.bf16.mxu0 0
        %880 = vmatpush1.bf16.msra.mxu0 %v863
        %881 = vmatprep.subr.bf16.mxu0 0
        %882 = vmatpush1.bf16.msra.mxu0 %v864
        %883 = vmatprep.subr.bf16.mxu0 0
        %884 = vmatpush1.bf16.msra.mxu0 %v865
        %885 = vmatprep.subr.bf16.mxu0 0
        %886 = vmatpush1.bf16.msra.mxu0 %v866
        %887 = vmatprep.subr.bf16.mxu0 0
        %888 = vmatpush1.bf16.msra.mxu0 %v867
        %889 = vmatprep.subr.bf16.mxu0 0
        %890 = vmatpush1.bf16.msra.mxu0 %v868
        %891 = vmatprep.subr.bf16.mxu0 0
        %892 = vmatpush1.bf16.msra.mxu0 %v869
        %893 = vmatprep.subr.bf16.mxu0 0
        %894 = vmatpush1.bf16.msra.mxu0 %v870
        %895 = vmatprep.subr.bf16.mxu0 0
        %896 = vmatpush1.bf16.msra.mxu0 0
        %897 = vmatprep.subr.bf16.mxu0 0
        %898 = vmatpush1.bf16.msra.mxu0 0
        %899 = vmatprep.subr.bf16.mxu0 0
        %900 = vmatpush1.bf16.msra.mxu0 0
        %901 = vmatprep.subr.bf16.mxu0 0
        %902 = vmatpush1.bf16.msra.mxu0 0
        %903 = vmatprep.subr.bf16.mxu0 0
        %904 = vmatpush1.bf16.msra.mxu0 0
        %905 = vmatprep.subr.bf16.mxu0 0
        %906 = vmatpush1.bf16.msra.mxu0 0
        %907 = vmatprep.subr.bf16.mxu0 0
        %908 = vmatpush1.bf16.msra.mxu0 0
        %909 = vmatprep.subr.bf16.mxu0 0
        %910 = vmatpush1.bf16.msra.mxu0 0
        %911 = vmatprep.mubr.bf16.mxu0 0
        %912 = vmatmul.mubr.bf16.gmra.mrb[0].mxu0 %v828
        %v913 = vpop.f32.mrb[0].mxu0
        %v914 = vadd.f32 0.0, %v913
        %v915 = vpop.f32.mrb[0].mxu0
        %v916 = vpop.f32.mrb[0].mxu0
        %v917 = vadd.f32 0.0, %v916
        %v918 = vpop.f32.mrb[0].mxu0
        %919 = vmatprep.mubr.bf16.mxu0 0
        %920 = vmatmul.mubr.bf16.gmra.mrb[0].mxu0 %v827
        %v921 = vpop.f32.mrb[0].mxu0
        %v922 = vadd.f32 0.0, %v921
        %v923 = vpop.f32.mrb[0].mxu0
        %v924 = vpop.f32.mrb[0].mxu0
        %v925 = vpop.f32.mrb[0].mxu0
        %926 = vdwg.mxu0
        %v927 = vadd.f32 %v801, %v914
        %v928 = vadd.f32 %v802, %v917
        %v929 = vadd.f32 %v803, %v922
        %s930 = scalar_lea.vmem [#allocation2], 256
        %v931 = vld [vmem:[%s930] sm:$0xf]
        %v932 = vld [vmem:[%s930 + $0x4] sm:$0xf]
        %v933 = vld [vmem:[%s930 + $0x8] sm:$0xf]
        %v934 = vld [vmem:[%s930 + $0xc] sm:$0xf]
        %v935 = vld [vmem:[%s930 + $0x10] sm:$0xf]
        %v936 = vld [vmem:[%s930 + $0x14] sm:$0xf]
        %v937 = vld [vmem:[%s930 + $0x18] sm:$0xf]
        %v938 = vld [vmem:[%s930 + $0x1c] sm:$0xf]
        %v939 = vld [vmem:[%s930 + $0x20] sm:$0xf]
        %v940 = vld [vmem:[%s930 + $0x24] sm:$0xf]
        %v941 = vld [vmem:[%s930 + $0x28] sm:$0xf]
        %v942 = vld [vmem:[%s930 + $0x2c] sm:$0xf]
        %v943 = vld [vmem:[%s930 + $0x30] sm:$0xf]
        %v944 = vld [vmem:[%s930 + $0x34] sm:$0xf]
        %v945 = vld [vmem:[%s930 + $0x38] sm:$0xf]
        %v946 = vld [vmem:[%s930 + $0x3c] sm:$0xf]
        %vm947 = vcmask 1045504
        %v948 = vrot.slane %v467, 2
        %v949 = vrot.slane %v468, 2
        %v950 = vsel %vm947, %v948, %v949
        %v969 = vunpack.c.l.b16 %v931
        %v970 = vunpack.c.l.b16 %v932
        %v971 = vunpack.c.l.b16 %v933
        %v972 = vunpack.c.l.b16 %v934
        %v973 = vunpack.c.l.b16 %v935
        %v974 = vunpack.c.l.b16 %v936
        %v975 = vunpack.c.l.b16 %v937
        %v976 = vunpack.c.l.b16 %v938
        %v977 = vunpack.c.l.b16 %v939
        %v978 = vunpack.c.l.b16 %v940
        %v979 = vunpack.c.l.b16 %v941
        %v980 = vunpack.c.l.b16 %v942
        %v981 = vunpack.c.l.b16 %v943
        %v982 = vunpack.c.l.b16 %v944
        %v983 = vunpack.c.l.b16 %v945
        %v984 = vunpack.c.l.b16 %v946
        %v985 = vpack.c.b16 %v970, %v969
        %v986 = vpack.c.b16 %v972, %v971
        %v987 = vpack.c.b16 %v974, %v973
        %v988 = vpack.c.b16 %v976, %v975
        %v989 = vpack.c.b16 %v978, %v977
        %v990 = vpack.c.b16 %v980, %v979
        %v991 = vpack.c.b16 %v982, %v981
        %v992 = vpack.c.b16 %v984, %v983
        %1001 = vmatprep.subr.bf16.mxu0 0
        %1002 = vmatpush1.bf16.msra.mxu0 %v985
        %1003 = vmatprep.subr.bf16.mxu0 0
        %1004 = vmatpush1.bf16.msra.mxu0 %v986
        %1005 = vmatprep.subr.bf16.mxu0 0
        %1006 = vmatpush1.bf16.msra.mxu0 %v987
        %1007 = vmatprep.subr.bf16.mxu0 0
        %1008 = vmatpush1.bf16.msra.mxu0 %v988
        %1009 = vmatprep.subr.bf16.mxu0 0
        %1010 = vmatpush1.bf16.msra.mxu0 %v989
        %1011 = vmatprep.subr.bf16.mxu0 0
        %1012 = vmatpush1.bf16.msra.mxu0 %v990
        %1013 = vmatprep.subr.bf16.mxu0 0
        %1014 = vmatpush1.bf16.msra.mxu0 %v991
        %1015 = vmatprep.subr.bf16.mxu0 0
        %1016 = vmatpush1.bf16.msra.mxu0 %v992
        %1017 = vmatprep.subr.bf16.mxu0 0
        %1018 = vmatpush1.bf16.msra.mxu0 0
        %1019 = vmatprep.subr.bf16.mxu0 0
        %1020 = vmatpush1.bf16.msra.mxu0 0
        %1021 = vmatprep.subr.bf16.mxu0 0
        %1022 = vmatpush1.bf16.msra.mxu0 0
        %1023 = vmatprep.subr.bf16.mxu0 0
        %1024 = vmatpush1.bf16.msra.mxu0 0
        %1025 = vmatprep.subr.bf16.mxu0 0
        %1026 = vmatpush1.bf16.msra.mxu0 0
        %1027 = vmatprep.subr.bf16.mxu0 0
        %1028 = vmatpush1.bf16.msra.mxu0 0
        %1029 = vmatprep.subr.bf16.mxu0 0
        %1030 = vmatpush1.bf16.msra.mxu0 0
        %1031 = vmatprep.subr.bf16.mxu0 0
        %1032 = vmatpush1.bf16.msra.mxu0 0
        %1033 = vmatprep.mubr.bf16.mxu0 0
        %1034 = vmatmul.mubr.bf16.gmra.mrb[0].mxu0 %v950
        %v1035 = vpop.f32.mrb[0].mxu0
        %v1036 = vadd.f32 0.0, %v1035
        %v1037 = vpop.f32.mrb[0].mxu0
        %v1038 = vpop.f32.mrb[0].mxu0
        %v1039 = vadd.f32 0.0, %v1038
        %v1040 = vpop.f32.mrb[0].mxu0
        %1041 = vmatprep.mubr.bf16.mxu0 0
        %1042 = vmatmul.mubr.bf16.gmra.mrb[0].mxu0 %v949
        %v1043 = vpop.f32.mrb[0].mxu0
        %v1044 = vadd.f32 0.0, %v1043
        %v1045 = vpop.f32.mrb[0].mxu0
        %v1046 = vpop.f32.mrb[0].mxu0
        %v1047 = vpop.f32.mrb[0].mxu0
        %1048 = vdwg.mxu0
        %v1049 = vadd.f32 %v927, %v1036
        %v1050 = vadd.f32 %v928, %v1039
        %v1051 = vadd.f32 %v929, %v1044
        %v1053 = vlaneseq
        %v1054 = vshrl.u32 %v1053, 7
        %v1055 = vsub.s32 0, %v1054
        %v1056 = vrot.slane %v425, %v1055
        %v1058 = vadd.f32 %v1049, %v1056
        %v1059 = vadd.f32 %v1050, %v1056
        %v1060 = vadd.f32 %v1051, %v1056
        %v1061 = vxor.u32 %v1058, 2147483648
        %v1062 = vxor.u32 %v1059, 2147483648
        %v1063 = vxor.u32 %v1060, 2147483648
        %v1064 = vmul.f32 %v1061, 1.442695
        %v1065 = vpow.pop %v1064
        %v1066 = vmul.f32 %v1062, 1.442695
        %v1067 = vpow.pop %v1066
        %v1068 = vmul.f32 %v1063, 1.442695
        %v1069 = vpow.pop %v1068
        %v1070 = vadd.f32 %v1065, 1.0
        %v1071 = vadd.f32 %v1067, 1.0
        %v1072 = vadd.f32 %v1069, 1.0
        %v1073 = vrcp.pop %v1070
        %v1074 = vmul.f32 1.0, %v1073
        %v1075 = vrcp.pop %v1071
        %v1076 = vmul.f32 1.0, %v1075
        %v1077 = vrcp.pop %v1072
        %v1078 = vmul.f32 1.0, %v1077
        %v1079 = vmul.f32 %v1058, %v1074
        %v1080 = vmul.f32 %v1059, %v1076
        %v1081 = vmul.f32 %v1060, %v1078
        %vm1082 = vcmp.ge.s32.totalorder %v421, 0
        %vm1083 = vcmp.ge.s32.totalorder %v422, 0
        %vm1084 = vcmp.ge.s32.totalorder %v423, 0
        %vm1085 = vcmp.ge.s32.totalorder %v424, 0
        %vm1086 = vcmp.lt.s32.totalorder %v421, 32
        %vm1087 = vcmp.lt.s32.totalorder %v422, 32
        %vm1088 = vcmp.lt.s32.totalorder %v423, 32
        %vm1089 = vcmp.lt.s32.totalorder %v424, 32
        %vm1090 = vmand %vm1082, %vm1086
        %vm1091 = vmand %vm1083, %vm1087
        %vm1092 = vmand %vm1084, %vm1088
        %vm1093 = vmand %vm1085, %vm1089
        %v1094 = vsel %vm1090, 1, 0
        %v1095 = vsel %vm1091, 1, 0
        %v1096 = vsel %vm1092, 1, 0
        %v1097 = vsel %vm1093, 1, 0
        %vm1098 = vcmp.eq.s32.totalorder %v1094, 1
        %vm1099 = vcmp.eq.s32.totalorder %v1095, 1
        %vm1100 = vcmp.eq.s32.totalorder %v1096, 1
        %vm1101 = vcmp.eq.s32.totalorder %v1097, 1
        %vm1105 = vcmask 1041408
        %v1106 = vrot.slane %v1079, 6
        %v1107 = vrot.slane %v1080, 6
        %v1108 = vsel %vm1105, %v1106, %v1107
        %v1109 = vrot.slane %v1081, 6
        %v1110 = vsel %vm1105, %v1107, %v1109
        %v1115 = vsel %vm1098, %v1106, 0.0
        %v1116 = vsel %vm1099, %v1108, 0.0
        %v1117 = vsel %vm1100, %v1110, 0.0
        %v1118 = vsel %vm1101, %v1109, 0.0
        %v1119 = vpack.c.bf16 %v1116, %v1115
        %v1120 = vpack.c.bf16 %v1118, %v1117
        %v1121 = vld [vmem:[%s4] sm:$0x1]
        %v1122 = vld [vmem:[#allocation5] sm:$0xf]
        %v1123 = vld [vmem:[#allocation5 + $0x4] sm:$0xf]
        %v1124 = vld [vmem:[#allocation5 + $0x8] sm:$0xf]
        %v1125 = vld [vmem:[#allocation5 + $0xc] sm:$0xf]
        %v1126 = vld [vmem:[#allocation5 + $0x10] sm:$0xf]
        %v1127 = vld [vmem:[#allocation5 + $0x14] sm:$0xf]
        %v1128 = vld [vmem:[#allocation5 + $0x18] sm:$0xf]
        %v1129 = vld [vmem:[#allocation5 + $0x1c] sm:$0xf]
        %v1130 = vld [vmem:[#allocation5 + $0x20] sm:$0xf]
        %v1131 = vld [vmem:[#allocation5 + $0x24] sm:$0xf]
        %v1132 = vld [vmem:[#allocation5 + $0x28] sm:$0xf]
        %v1133 = vld [vmem:[#allocation5 + $0x2c] sm:$0xf]
        %v1134 = vld [vmem:[#allocation5 + $0x30] sm:$0xf]
        %v1135 = vld [vmem:[#allocation5 + $0x34] sm:$0xf]
        %v1136 = vld [vmem:[#allocation5 + $0x38] sm:$0xf]
        %v1137 = vld [vmem:[#allocation5 + $0x3c] sm:$0xf]
        %s1138 = scalar_lea.vmem [#allocation5], 64
        %v1139 = vld [vmem:[%s1138] sm:$0xf]
        %v1140 = vld [vmem:[%s1138 + $0x4] sm:$0xf]
        %v1141 = vld [vmem:[%s1138 + $0x8] sm:$0xf]
        %v1142 = vld [vmem:[%s1138 + $0xc] sm:$0xf]
        %v1143 = vld [vmem:[%s1138 + $0x10] sm:$0xf]
        %v1144 = vld [vmem:[%s1138 + $0x14] sm:$0xf]
        %v1145 = vld [vmem:[%s1138 + $0x18] sm:$0xf]
        %v1146 = vld [vmem:[%s1138 + $0x1c] sm:$0xf]
        %v1147 = vld [vmem:[%s1138 + $0x20] sm:$0xf]
        %v1148 = vld [vmem:[%s1138 + $0x24] sm:$0xf]
        %v1149 = vld [vmem:[%s1138 + $0x28] sm:$0xf]
        %v1150 = vld [vmem:[%s1138 + $0x2c] sm:$0xf]
        %v1151 = vld [vmem:[%s1138 + $0x30] sm:$0xf]
        %v1152 = vld [vmem:[%s1138 + $0x34] sm:$0xf]
        %v1153 = vld [vmem:[%s1138 + $0x38] sm:$0xf]
        %v1154 = vld [vmem:[%s1138 + $0x3c] sm:$0xf]
        %v1156 = vshrl.u32 %v1119, 16
        %v1158 = vrot.slane %v1156, 1
        %v1159 = vshll.u32 %v1119, 16
        %v1161 = vrot.slane %v1159, 2
        %v1162 = vor.u32 %v1158, %v1161
        %v1164 = vshrl.u32 %v1120, 16
        %v1166 = vrot.slane %v1164, 1
        %v1167 = vshll.u32 %v1120, 16
        %v1169 = vrot.slane %v1167, 2
        %v1170 = vor.u32 %v1166, %v1169
        %v1171 = vsel %vm821, %v1162, %v1170
        %v1190 = vunpack.c.l.b16 %v1139
        %v1191 = vunpack.c.l.b16 %v1140
        %v1192 = vunpack.c.l.b16 %v1141
        %v1193 = vunpack.c.l.b16 %v1142
        %v1194 = vunpack.c.l.b16 %v1143
        %v1195 = vunpack.c.l.b16 %v1144
        %v1196 = vunpack.c.l.b16 %v1145
        %v1197 = vunpack.c.l.b16 %v1146
        %v1198 = vunpack.c.l.b16 %v1147
        %v1199 = vunpack.c.l.b16 %v1148
        %v1200 = vunpack.c.l.b16 %v1149
        %v1201 = vunpack.c.l.b16 %v1150
        %v1202 = vunpack.c.l.b16 %v1151
        %v1203 = vunpack.c.l.b16 %v1152
        %v1204 = vunpack.c.l.b16 %v1153
        %v1205 = vunpack.c.l.b16 %v1154
        %v1206 = vpack.c.b16 %v1191, %v1190
        %v1207 = vpack.c.b16 %v1193, %v1192
        %v1208 = vpack.c.b16 %v1195, %v1194
        %v1209 = vpack.c.b16 %v1197, %v1196
        %v1210 = vpack.c.b16 %v1199, %v1198
        %v1211 = vpack.c.b16 %v1201, %v1200
        %v1212 = vpack.c.b16 %v1203, %v1202
        %v1213 = vpack.c.b16 %v1205, %v1204
        %1222 = vmatprep.subr.bf16.mxu0 0
        %1223 = vmatpush1.bf16.msra.mxu0 %v1206
        %1224 = vmatprep.subr.bf16.mxu0 0
        %1225 = vmatpush1.bf16.msra.mxu0 %v1207
        %1226 = vmatprep.subr.bf16.mxu0 0
        %1227 = vmatpush1.bf16.msra.mxu0 %v1208
        %1228 = vmatprep.subr.bf16.mxu0 0
        %1229 = vmatpush1.bf16.msra.mxu0 %v1209
        %1230 = vmatprep.subr.bf16.mxu0 0
        %1231 = vmatpush1.bf16.msra.mxu0 %v1210
        %1232 = vmatprep.subr.bf16.mxu0 0
        %1233 = vmatpush1.bf16.msra.mxu0 %v1211
        %1234 = vmatprep.subr.bf16.mxu0 0
        %1235 = vmatpush1.bf16.msra.mxu0 %v1212
        %1236 = vmatprep.subr.bf16.mxu0 0
        %1237 = vmatpush1.bf16.msra.mxu0 %v1213
        %1238 = vmatprep.subr.bf16.mxu0 0
        %1239 = vmatpush1.bf16.msra.mxu0 0
        %1240 = vmatprep.subr.bf16.mxu0 0
        %1241 = vmatpush1.bf16.msra.mxu0 0
        %1242 = vmatprep.subr.bf16.mxu0 0
        %1243 = vmatpush1.bf16.msra.mxu0 0
        %1244 = vmatprep.subr.bf16.mxu0 0
        %1245 = vmatpush1.bf16.msra.mxu0 0
        %1246 = vmatprep.subr.bf16.mxu0 0
        %1247 = vmatpush1.bf16.msra.mxu0 0
        %1248 = vmatprep.subr.bf16.mxu0 0
        %1249 = vmatpush1.bf16.msra.mxu0 0
        %1250 = vmatprep.subr.bf16.mxu0 0
        %1251 = vmatpush1.bf16.msra.mxu0 0
        %1252 = vmatprep.subr.bf16.mxu0 0
        %1253 = vmatpush1.bf16.msra.mxu0 0
        %1254 = vmatprep.mubr.bf16.mxu0 0
        %1255 = vmatmul.mubr.bf16.gmra.mrb[0].mxu0 %v1171
        %v1256 = vpop.f32.mrb[0].mxu0
        %v1257 = vadd.f32 0.0, %v1256
        %v1258 = vpop.f32.mrb[0].mxu0
        %v1259 = vpop.f32.mrb[0].mxu0
        %v1260 = vadd.f32 0.0, %v1259
        %v1261 = vpop.f32.mrb[0].mxu0
        %1262 = vmatprep.mubr.bf16.mxu0 0
        %1263 = vmatmul.mubr.bf16.gmra.mrb[0].mxu0 %v1170
        %v1264 = vpop.f32.mrb[0].mxu0
        %v1265 = vadd.f32 0.0, %v1264
        %v1266 = vpop.f32.mrb[0].mxu0
        %v1267 = vpop.f32.mrb[0].mxu0
        %v1268 = vpop.f32.mrb[0].mxu0
        %1269 = vdwg.mxu0
        %v1272 = vrot.slane %v1119, 1
        %v1273 = vrot.slane %v1120, 1
        %v1274 = vsel %vm699, %v1272, %v1273
        %v1293 = vunpack.c.l.b16 %v1122
        %v1294 = vunpack.c.l.b16 %v1123
        %v1295 = vunpack.c.l.b16 %v1124
        %v1296 = vunpack.c.l.b16 %v1125
        %v1297 = vunpack.c.l.b16 %v1126
        %v1298 = vunpack.c.l.b16 %v1127
        %v1299 = vunpack.c.l.b16 %v1128
        %v1300 = vunpack.c.l.b16 %v1129
        %v1301 = vunpack.c.l.b16 %v1130
        %v1302 = vunpack.c.l.b16 %v1131
        %v1303 = vunpack.c.l.b16 %v1132
        %v1304 = vunpack.c.l.b16 %v1133
        %v1305 = vunpack.c.l.b16 %v1134
        %v1306 = vunpack.c.l.b16 %v1135
        %v1307 = vunpack.c.l.b16 %v1136
        %v1308 = vunpack.c.l.b16 %v1137
        %v1309 = vpack.c.b16 %v1294, %v1293
        %v1310 = vpack.c.b16 %v1296, %v1295
        %v1311 = vpack.c.b16 %v1298, %v1297
        %v1312 = vpack.c.b16 %v1300, %v1299
        %v1313 = vpack.c.b16 %v1302, %v1301
        %v1314 = vpack.c.b16 %v1304, %v1303
        %v1315 = vpack.c.b16 %v1306, %v1305
        %v1316 = vpack.c.b16 %v1308, %v1307
        %1325 = vmatprep.subr.bf16.mxu0 0
        %1326 = vmatpush1.bf16.msra.mxu0 %v1309
        %1327 = vmatprep.subr.bf16.mxu0 0
        %1328 = vmatpush1.bf16.msra.mxu0 %v1310
        %1329 = vmatprep.subr.bf16.mxu0 0
        %1330 = vmatpush1.bf16.msra.mxu0 %v1311
        %1331 = vmatprep.subr.bf16.mxu0 0
        %1332 = vmatpush1.bf16.msra.mxu0 %v1312
        %1333 = vmatprep.subr.bf16.mxu0 0
        %1334 = vmatpush1.bf16.msra.mxu0 %v1313
        %1335 = vmatprep.subr.bf16.mxu0 0
        %1336 = vmatpush1.bf16.msra.mxu0 %v1314
        %1337 = vmatprep.subr.bf16.mxu0 0
        %1338 = vmatpush1.bf16.msra.mxu0 %v1315
        %1339 = vmatprep.subr.bf16.mxu0 0
        %1340 = vmatpush1.bf16.msra.mxu0 %v1316
        %1341 = vmatprep.subr.bf16.mxu0 0
        %1342 = vmatpush1.bf16.msra.mxu0 0
        %1343 = vmatprep.subr.bf16.mxu0 0
        %1344 = vmatpush1.bf16.msra.mxu0 0
        %1345 = vmatprep.subr.bf16.mxu0 0
        %1346 = vmatpush1.bf16.msra.mxu0 0
        %1347 = vmatprep.subr.bf16.mxu0 0
        %1348 = vmatpush1.bf16.msra.mxu0 0
        %1349 = vmatprep.subr.bf16.mxu0 0
        %1350 = vmatpush1.bf16.msra.mxu0 0
        %1351 = vmatprep.subr.bf16.mxu0 0
        %1352 = vmatpush1.bf16.msra.mxu0 0
        %1353 = vmatprep.subr.bf16.mxu0 0
        %1354 = vmatpush1.bf16.msra.mxu0 0
        %1355 = vmatprep.subr.bf16.mxu0 0
        %1356 = vmatpush1.bf16.msra.mxu0 0
        %1357 = vmatprep.mubr.bf16.mxu0 0
        %1358 = vmatmul.mubr.bf16.gmra.mrb[0].mxu0 %v1274
        %v1359 = vpop.f32.mrb[0].mxu0
        %v1360 = vadd.f32 %v1257, %v1359
        %v1361 = vpop.f32.mrb[0].mxu0
        %v1362 = vpop.f32.mrb[0].mxu0
        %v1363 = vadd.f32 %v1260, %v1362
        %v1364 = vpop.f32.mrb[0].mxu0
        %1365 = vmatprep.mubr.bf16.mxu0 0
        %1366 = vmatmul.mubr.bf16.gmra.mrb[0].mxu0 %v1273
        %v1367 = vpop.f32.mrb[0].mxu0
        %v1368 = vadd.f32 %v1265, %v1367
        %v1369 = vpop.f32.mrb[0].mxu0
        %v1370 = vpop.f32.mrb[0].mxu0
        %v1371 = vpop.f32.mrb[0].mxu0
        %1372 = vdwg.mxu0
        %s1373 = scalar_lea.vmem [#allocation5], 128
        %v1374 = vld [vmem:[%s1373] sm:$0xf]
        %v1375 = vld [vmem:[%s1373 + $0x4] sm:$0xf]
        %v1376 = vld [vmem:[%s1373 + $0x8] sm:$0xf]
        %v1377 = vld [vmem:[%s1373 + $0xc] sm:$0xf]
        %v1378 = vld [vmem:[%s1373 + $0x10] sm:$0xf]
        %v1379 = vld [vmem:[%s1373 + $0x14] sm:$0xf]
        %v1380 = vld [vmem:[%s1373 + $0x18] sm:$0xf]
        %v1381 = vld [vmem:[%s1373 + $0x1c] sm:$0xf]
        %v1382 = vld [vmem:[%s1373 + $0x20] sm:$0xf]
        %v1383 = vld [vmem:[%s1373 + $0x24] sm:$0xf]
        %v1384 = vld [vmem:[%s1373 + $0x28] sm:$0xf]
        %v1385 = vld [vmem:[%s1373 + $0x2c] sm:$0xf]
        %v1386 = vld [vmem:[%s1373 + $0x30] sm:$0xf]
        %v1387 = vld [vmem:[%s1373 + $0x34] sm:$0xf]
        %v1388 = vld [vmem:[%s1373 + $0x38] sm:$0xf]
        %v1389 = vld [vmem:[%s1373 + $0x3c] sm:$0xf]
        %v1390 = vrot.slane %v1119, 2
        %v1391 = vrot.slane %v1120, 2
        %v1392 = vsel %vm947, %v1390, %v1391
        %v1411 = vunpack.c.l.b16 %v1374
        %v1412 = vunpack.c.l.b16 %v1375
        %v1413 = vunpack.c.l.b16 %v1376
        %v1414 = vunpack.c.l.b16 %v1377
        %v1415 = vunpack.c.l.b16 %v1378
        %v1416 = vunpack.c.l.b16 %v1379
        %v1417 = vunpack.c.l.b16 %v1380
        %v1418 = vunpack.c.l.b16 %v1381
        %v1419 = vunpack.c.l.b16 %v1382
        %v1420 = vunpack.c.l.b16 %v1383
        %v1421 = vunpack.c.l.b16 %v1384
        %v1422 = vunpack.c.l.b16 %v1385
        %v1423 = vunpack.c.l.b16 %v1386
        %v1424 = vunpack.c.l.b16 %v1387
        %v1425 = vunpack.c.l.b16 %v1388
        %v1426 = vunpack.c.l.b16 %v1389
        %v1427 = vpack.c.b16 %v1412, %v1411
        %v1428 = vpack.c.b16 %v1414, %v1413
        %v1429 = vpack.c.b16 %v1416, %v1415
        %v1430 = vpack.c.b16 %v1418, %v1417
        %v1431 = vpack.c.b16 %v1420, %v1419
        %v1432 = vpack.c.b16 %v1422, %v1421
        %v1433 = vpack.c.b16 %v1424, %v1423
        %v1434 = vpack.c.b16 %v1426, %v1425
        %1443 = vmatprep.subr.bf16.mxu0 0
        %1444 = vmatpush1.bf16.msra.mxu0 %v1427
        %1445 = vmatprep.subr.bf16.mxu0 0
        %1446 = vmatpush1.bf16.msra.mxu0 %v1428
        %1447 = vmatprep.subr.bf16.mxu0 0
        %1448 = vmatpush1.bf16.msra.mxu0 %v1429
        %1449 = vmatprep.subr.bf16.mxu0 0
        %1450 = vmatpush1.bf16.msra.mxu0 %v1430
        %1451 = vmatprep.subr.bf16.mxu0 0
        %1452 = vmatpush1.bf16.msra.mxu0 %v1431
        %1453 = vmatprep.subr.bf16.mxu0 0
        %1454 = vmatpush1.bf16.msra.mxu0 %v1432
        %1455 = vmatprep.subr.bf16.mxu0 0
        %1456 = vmatpush1.bf16.msra.mxu0 %v1433
        %1457 = vmatprep.subr.bf16.mxu0 0
        %1458 = vmatpush1.bf16.msra.mxu0 %v1434
        %1459 = vmatprep.subr.bf16.mxu0 0
        %1460 = vmatpush1.bf16.msra.mxu0 0
        %1461 = vmatprep.subr.bf16.mxu0 0
        %1462 = vmatpush1.bf16.msra.mxu0 0
        %1463 = vmatprep.subr.bf16.mxu0 0
        %1464 = vmatpush1.bf16.msra.mxu0 0
        %1465 = vmatprep.subr.bf16.mxu0 0
        %1466 = vmatpush1.bf16.msra.mxu0 0
        %1467 = vmatprep.subr.bf16.mxu0 0
        %1468 = vmatpush1.bf16.msra.mxu0 0
        %1469 = vmatprep.subr.bf16.mxu0 0
        %1470 = vmatpush1.bf16.msra.mxu0 0
        %1471 = vmatprep.subr.bf16.mxu0 0
        %1472 = vmatpush1.bf16.msra.mxu0 0
        %1473 = vmatprep.subr.bf16.mxu0 0
        %1474 = vmatpush1.bf16.msra.mxu0 0
        %1475 = vmatprep.mubr.bf16.mxu0 0
        %1476 = vmatmul.mubr.bf16.gmra.mrb[0].mxu0 %v1392
        %v1477 = vpop.f32.mrb[0].mxu0
        %v1478 = vadd.f32 0.0, %v1477
        %v1479 = vpop.f32.mrb[0].mxu0
        %v1480 = vpop.f32.mrb[0].mxu0
        %v1481 = vadd.f32 0.0, %v1480
        %v1482 = vpop.f32.mrb[0].mxu0
        %1483 = vmatprep.mubr.bf16.mxu0 0
        %1484 = vmatmul.mubr.bf16.gmra.mrb[0].mxu0 %v1391
        %v1485 = vpop.f32.mrb[0].mxu0
        %v1486 = vadd.f32 0.0, %v1485
        %v1487 = vpop.f32.mrb[0].mxu0
        %v1488 = vpop.f32.mrb[0].mxu0
        %v1489 = vpop.f32.mrb[0].mxu0
        %1490 = vdwg.mxu0
        %v1491 = vadd.f32 %v1360, %v1478
        %v1492 = vadd.f32 %v1363, %v1481
        %v1493 = vadd.f32 %v1368, %v1486
        %s1494 = scalar_lea.vmem [#allocation5], 192
        %v1495 = vld [vmem:[%s1494] sm:$0xf]
        %v1496 = vld [vmem:[%s1494 + $0x4] sm:$0xf]
        %v1497 = vld [vmem:[%s1494 + $0x8] sm:$0xf]
        %v1498 = vld [vmem:[%s1494 + $0xc] sm:$0xf]
        %v1499 = vld [vmem:[%s1494 + $0x10] sm:$0xf]
        %v1500 = vld [vmem:[%s1494 + $0x14] sm:$0xf]
        %v1501 = vld [vmem:[%s1494 + $0x18] sm:$0xf]
        %v1502 = vld [vmem:[%s1494 + $0x1c] sm:$0xf]
        %v1503 = vld [vmem:[%s1494 + $0x20] sm:$0xf]
        %v1504 = vld [vmem:[%s1494 + $0x24] sm:$0xf]
        %v1505 = vld [vmem:[%s1494 + $0x28] sm:$0xf]
        %v1506 = vld [vmem:[%s1494 + $0x2c] sm:$0xf]
        %v1507 = vld [vmem:[%s1494 + $0x30] sm:$0xf]
        %v1508 = vld [vmem:[%s1494 + $0x34] sm:$0xf]
        %v1509 = vld [vmem:[%s1494 + $0x38] sm:$0xf]
        %v1510 = vld [vmem:[%s1494 + $0x3c] sm:$0xf]
        %vm1511 = vsmask.f32 5376
        %v1512 = vrot.slane %v1156, 2
        %v1513 = vrot.slane %v1159, 3
        %v1514 = vor.u32 %v1512, %v1513
        %v1515 = vrot.slane %v1164, 2
        %v1516 = vrot.slane %v1167, 3
        %v1517 = vor.u32 %v1515, %v1516
        %v1518 = vsel %vm1511, %v1514, %v1517
        %v1537 = vunpack.c.l.b16 %v1495
        %v1538 = vunpack.c.l.b16 %v1496
        %v1539 = vunpack.c.l.b16 %v1497
        %v1540 = vunpack.c.l.b16 %v1498
        %v1541 = vunpack.c.l.b16 %v1499
        %v1542 = vunpack.c.l.b16 %v1500
        %v1543 = vunpack.c.l.b16 %v1501
        %v1544 = vunpack.c.l.b16 %v1502
        %v1545 = vunpack.c.l.b16 %v1503
        %v1546 = vunpack.c.l.b16 %v1504
        %v1547 = vunpack.c.l.b16 %v1505
        %v1548 = vunpack.c.l.b16 %v1506
        %v1549 = vunpack.c.l.b16 %v1507
        %v1550 = vunpack.c.l.b16 %v1508
        %v1551 = vunpack.c.l.b16 %v1509
        %v1552 = vunpack.c.l.b16 %v1510
        %v1553 = vpack.c.b16 %v1538, %v1537
        %v1554 = vpack.c.b16 %v1540, %v1539
        %v1555 = vpack.c.b16 %v1542, %v1541
        %v1556 = vpack.c.b16 %v1544, %v1543
        %v1557 = vpack.c.b16 %v1546, %v1545
        %v1558 = vpack.c.b16 %v1548, %v1547
        %v1559 = vpack.c.b16 %v1550, %v1549
        %v1560 = vpack.c.b16 %v1552, %v1551
        %1569 = vmatprep.subr.bf16.mxu0 0
        %1570 = vmatpush1.bf16.msra.mxu0 %v1553
        %1571 = vmatprep.subr.bf16.mxu0 0
        %1572 = vmatpush1.bf16.msra.mxu0 %v1554
        %1573 = vmatprep.subr.bf16.mxu0 0
        %1574 = vmatpush1.bf16.msra.mxu0 %v1555
        %1575 = vmatprep.subr.bf16.mxu0 0
        %1576 = vmatpush1.bf16.msra.mxu0 %v1556
        %1577 = vmatprep.subr.bf16.mxu0 0
        %1578 = vmatpush1.bf16.msra.mxu0 %v1557
        %1579 = vmatprep.subr.bf16.mxu0 0
        %1580 = vmatpush1.bf16.msra.mxu0 %v1558
        %1581 = vmatprep.subr.bf16.mxu0 0
        %1582 = vmatpush1.bf16.msra.mxu0 %v1559
        %1583 = vmatprep.subr.bf16.mxu0 0
        %1584 = vmatpush1.bf16.msra.mxu0 %v1560
        %1585 = vmatprep.subr.bf16.mxu0 0
        %1586 = vmatpush1.bf16.msra.mxu0 0
        %1587 = vmatprep.subr.bf16.mxu0 0
        %1588 = vmatpush1.bf16.msra.mxu0 0
        %1589 = vmatprep.subr.bf16.mxu0 0
        %1590 = vmatpush1.bf16.msra.mxu0 0
        %1591 = vmatprep.subr.bf16.mxu0 0
        %1592 = vmatpush1.bf16.msra.mxu0 0
        %1593 = vmatprep.subr.bf16.mxu0 0
        %1594 = vmatpush1.bf16.msra.mxu0 0
        %1595 = vmatprep.subr.bf16.mxu0 0
        %1596 = vmatpush1.bf16.msra.mxu0 0
        %1597 = vmatprep.subr.bf16.mxu0 0
        %1598 = vmatpush1.bf16.msra.mxu0 0
        %1599 = vmatprep.subr.bf16.mxu0 0
        %1600 = vmatpush1.bf16.msra.mxu0 0
        %1601 = vmatprep.mubr.bf16.mxu0 0
        %1602 = vmatmul.mubr.bf16.gmra.mrb[0].mxu0 %v1518
        %v1603 = vpop.f32.mrb[0].mxu0
        %v1604 = vadd.f32 0.0, %v1603
        %v1605 = vpop.f32.mrb[0].mxu0
        %v1606 = vpop.f32.mrb[0].mxu0
        %v1607 = vadd.f32 0.0, %v1606
        %v1608 = vpop.f32.mrb[0].mxu0
        %1609 = vmatprep.mubr.bf16.mxu0 0
        %1610 = vmatmul.mubr.bf16.gmra.mrb[0].mxu0 %v1517
        %v1611 = vpop.f32.mrb[0].mxu0
        %v1612 = vadd.f32 0.0, %v1611
        %v1613 = vpop.f32.mrb[0].mxu0
        %v1614 = vpop.f32.mrb[0].mxu0
        %v1615 = vpop.f32.mrb[0].mxu0
        %1616 = vdwg.mxu0
        %v1617 = vadd.f32 %v1491, %v1604
        %v1618 = vadd.f32 %v1492, %v1607
        %v1619 = vadd.f32 %v1493, %v1612
        %s1620 = scalar_lea.vmem [#allocation5], 256
        %v1621 = vld [vmem:[%s1620] sm:$0xf]
        %v1622 = vld [vmem:[%s1620 + $0x4] sm:$0xf]
        %v1623 = vld [vmem:[%s1620 + $0x8] sm:$0xf]
        %v1624 = vld [vmem:[%s1620 + $0xc] sm:$0xf]
        %v1625 = vld [vmem:[%s1620 + $0x10] sm:$0xf]
        %v1626 = vld [vmem:[%s1620 + $0x14] sm:$0xf]
        %v1627 = vld [vmem:[%s1620 + $0x18] sm:$0xf]
        %v1628 = vld [vmem:[%s1620 + $0x1c] sm:$0xf]
        %v1629 = vld [vmem:[%s1620 + $0x20] sm:$0xf]
        %v1630 = vld [vmem:[%s1620 + $0x24] sm:$0xf]
        %v1631 = vld [vmem:[%s1620 + $0x28] sm:$0xf]
        %v1632 = vld [vmem:[%s1620 + $0x2c] sm:$0xf]
        %v1633 = vld [vmem:[%s1620 + $0x30] sm:$0xf]
        %v1634 = vld [vmem:[%s1620 + $0x34] sm:$0xf]
        %v1635 = vld [vmem:[%s1620 + $0x38] sm:$0xf]
        %v1636 = vld [vmem:[%s1620 + $0x3c] sm:$0xf]
        %vm1637 = vcmask 1044480
        %v1638 = vrot.slane %v1119, 3
        %v1639 = vrot.slane %v1120, 3
        %v1640 = vsel %vm1637, %v1638, %v1639
        %v1659 = vunpack.c.l.b16 %v1621
        %v1660 = vunpack.c.l.b16 %v1622
        %v1661 = vunpack.c.l.b16 %v1623
        %v1662 = vunpack.c.l.b16 %v1624
        %v1663 = vunpack.c.l.b16 %v1625
        %v1664 = vunpack.c.l.b16 %v1626
        %v1665 = vunpack.c.l.b16 %v1627
        %v1666 = vunpack.c.l.b16 %v1628
        %v1667 = vunpack.c.l.b16 %v1629
        %v1668 = vunpack.c.l.b16 %v1630
        %v1669 = vunpack.c.l.b16 %v1631
        %v1670 = vunpack.c.l.b16 %v1632
        %v1671 = vunpack.c.l.b16 %v1633
        %v1672 = vunpack.c.l.b16 %v1634
        %v1673 = vunpack.c.l.b16 %v1635
        %v1674 = vunpack.c.l.b16 %v1636
        %v1675 = vpack.c.b16 %v1660, %v1659
        %v1676 = vpack.c.b16 %v1662, %v1661
        %v1677 = vpack.c.b16 %v1664, %v1663
        %v1678 = vpack.c.b16 %v1666, %v1665
        %v1679 = vpack.c.b16 %v1668, %v1667
        %v1680 = vpack.c.b16 %v1670, %v1669
        %v1681 = vpack.c.b16 %v1672, %v1671
        %v1682 = vpack.c.b16 %v1674, %v1673
        %1691 = vmatprep.subr.bf16.mxu0 0
        %1692 = vmatpush1.bf16.msra.mxu0 %v1675
        %1693 = vmatprep.subr.bf16.mxu0 0
        %1694 = vmatpush1.bf16.msra.mxu0 %v1676
        %1695 = vmatprep.subr.bf16.mxu0 0
        %1696 = vmatpush1.bf16.msra.mxu0 %v1677
        %1697 = vmatprep.subr.bf16.mxu0 0
        %1698 = vmatpush1.bf16.msra.mxu0 %v1678
        %1699 = vmatprep.subr.bf16.mxu0 0
        %1700 = vmatpush1.bf16.msra.mxu0 %v1679
        %1701 = vmatprep.subr.bf16.mxu0 0
        %1702 = vmatpush1.bf16.msra.mxu0 %v1680
        %1703 = vmatprep.subr.bf16.mxu0 0
        %1704 = vmatpush1.bf16.msra.mxu0 %v1681
        %1705 = vmatprep.subr.bf16.mxu0 0
        %1706 = vmatpush1.bf16.msra.mxu0 %v1682
        %1707 = vmatprep.subr.bf16.mxu0 0
        %1708 = vmatpush1.bf16.msra.mxu0 0
        %1709 = vmatprep.subr.bf16.mxu0 0
        %1710 = vmatpush1.bf16.msra.mxu0 0
        %1711 = vmatprep.subr.bf16.mxu0 0
        %1712 = vmatpush1.bf16.msra.mxu0 0
        %1713 = vmatprep.subr.bf16.mxu0 0
        %1714 = vmatpush1.bf16.msra.mxu0 0
        %1715 = vmatprep.subr.bf16.mxu0 0
        %1716 = vmatpush1.bf16.msra.mxu0 0
        %1717 = vmatprep.subr.bf16.mxu0 0
        %1718 = vmatpush1.bf16.msra.mxu0 0
        %1719 = vmatprep.subr.bf16.mxu0 0
        %1720 = vmatpush1.bf16.msra.mxu0 0
        %1721 = vmatprep.subr.bf16.mxu0 0
        %1722 = vmatpush1.bf16.msra.mxu0 0
        %1723 = vmatprep.mubr.bf16.mxu0 0
        %1724 = vmatmul.mubr.bf16.gmra.mrb[0].mxu0 %v1640
        %v1725 = vpop.f32.mrb[0].mxu0
        %v1726 = vadd.f32 0.0, %v1725
        %v1727 = vpop.f32.mrb[0].mxu0
        %v1728 = vpop.f32.mrb[0].mxu0
        %v1729 = vadd.f32 0.0, %v1728
        %v1730 = vpop.f32.mrb[0].mxu0
        %1731 = vmatprep.mubr.bf16.mxu0 0
        %1732 = vmatmul.mubr.bf16.gmra.mrb[0].mxu0 %v1639
        %v1733 = vpop.f32.mrb[0].mxu0
        %v1734 = vadd.f32 0.0, %v1733
        %v1735 = vpop.f32.mrb[0].mxu0
        %v1736 = vpop.f32.mrb[0].mxu0
        %v1737 = vpop.f32.mrb[0].mxu0
        %1738 = vdwg.mxu0
        %v1739 = vadd.f32 %v1617, %v1726
        %v1740 = vadd.f32 %v1618, %v1729
        %v1741 = vadd.f32 %v1619, %v1734
        %v1743 = vlaneseq
        %v1744 = vshrl.u32 %v1743, 7
        %v1745 = vsub.s32 0, %v1744
        %v1746 = vrot.slane %v1121, %v1745
        %v1748 = vadd.f32 %v1739, %v1746
        %v1749 = vadd.f32 %v1740, %v1746
        %v1750 = vadd.f32 %v1741, %v1746
        %v1751 = vxor.u32 %v1748, 2147483648
        %v1752 = vxor.u32 %v1749, 2147483648
        %v1753 = vxor.u32 %v1750, 2147483648
        %v1754 = vmul.f32 %v1751, 1.442695
        %v1755 = vpow.pop %v1754
        %v1756 = vmul.f32 %v1752, 1.442695
        %v1757 = vpow.pop %v1756
        %v1758 = vmul.f32 %v1753, 1.442695
        %v1759 = vpow.pop %v1758
        %v1760 = vadd.f32 %v1755, 1.0
        %v1761 = vadd.f32 %v1757, 1.0
        %v1762 = vadd.f32 %v1759, 1.0
        %v1763 = vrcp.pop %v1760
        %v1764 = vmul.f32 1.0, %v1763
        %v1765 = vrcp.pop %v1761
        %v1766 = vmul.f32 1.0, %v1765
        %v1767 = vrcp.pop %v1762
        %v1768 = vmul.f32 1.0, %v1767
        %v1769 = vmul.f32 %v1748, %v1764
        %v1770 = vmul.f32 %v1749, %v1766
        %v1771 = vmul.f32 %v1750, %v1768
        %vm1775 = vcmask 1043456
        %v1776 = vrot.slane %v1769, 4
        %v1777 = vrot.slane %v1770, 4
        %v1778 = vsel %vm1775, %v1776, %v1777
        %v1779 = vrot.slane %v1771, 4
        %v1780 = vsel %vm1775, %v1777, %v1779
        %v1784 = vsel %vm1098, %v1776, 0.0
        %v1785 = vsel %vm1099, %v1778, 0.0
        %v1786 = vsel %vm1100, %v1780, 0.0
        %v1787 = vpack.c.bf16 %v1785, %v1784
        %v1788 = vpack.c.bf16 %v1786, %v1786
        %v1789 = vld [vmem:[%s6] sm:$0x1]
        %v1790 = vld [vmem:[#allocation7] sm:$0xf]
        %v1791 = vld [vmem:[#allocation7 + $0x4] sm:$0xf]
        %v1792 = vld [vmem:[#allocation7 + $0x8] sm:$0xf]
        %v1793 = vld [vmem:[#allocation7 + $0xc] sm:$0xf]
        %v1794 = vld [vmem:[#allocation7 + $0x10] sm:$0xf]
        %v1795 = vld [vmem:[#allocation7 + $0x14] sm:$0xf]
        %v1796 = vld [vmem:[#allocation7 + $0x18] sm:$0xf]
        %v1797 = vld [vmem:[#allocation7 + $0x1c] sm:$0xf]
        %v1798 = vld [vmem:[#allocation7 + $0x20] sm:$0xf]
        %v1799 = vld [vmem:[#allocation7 + $0x24] sm:$0xf]
        %v1800 = vld [vmem:[#allocation7 + $0x28] sm:$0xf]
        %v1801 = vld [vmem:[#allocation7 + $0x2c] sm:$0xf]
        %v1802 = vld [vmem:[#allocation7 + $0x30] sm:$0xf]
        %v1803 = vld [vmem:[#allocation7 + $0x34] sm:$0xf]
        %v1804 = vld [vmem:[#allocation7 + $0x38] sm:$0xf]
        %v1805 = vld [vmem:[#allocation7 + $0x3c] sm:$0xf]
        %s1806 = scalar_lea.vmem [#allocation7], 64
        %v1807 = vld [vmem:[%s1806] sm:$0xf]
        %v1808 = vld [vmem:[%s1806 + $0x4] sm:$0xf]
        %v1809 = vld [vmem:[%s1806 + $0x8] sm:$0xf]
        %v1810 = vld [vmem:[%s1806 + $0xc] sm:$0xf]
        %v1811 = vld [vmem:[%s1806 + $0x10] sm:$0xf]
        %v1812 = vld [vmem:[%s1806 + $0x14] sm:$0xf]
        %v1813 = vld [vmem:[%s1806 + $0x18] sm:$0xf]
        %v1814 = vld [vmem:[%s1806 + $0x1c] sm:$0xf]
        %v1815 = vld [vmem:[%s1806 + $0x20] sm:$0xf]
        %v1816 = vld [vmem:[%s1806 + $0x24] sm:$0xf]
        %v1817 = vld [vmem:[%s1806 + $0x28] sm:$0xf]
        %v1818 = vld [vmem:[%s1806 + $0x2c] sm:$0xf]
        %v1819 = vld [vmem:[%s1806 + $0x30] sm:$0xf]
        %v1820 = vld [vmem:[%s1806 + $0x34] sm:$0xf]
        %v1821 = vld [vmem:[%s1806 + $0x38] sm:$0xf]
        %v1822 = vld [vmem:[%s1806 + $0x3c] sm:$0xf]
        %v1824 = vshrl.u32 %v1787, 16
        %v1826 = vrot.slane %v1824, 2
        %v1827 = vshll.u32 %v1787, 16
        %v1829 = vrot.slane %v1827, 3
        %v1830 = vor.u32 %v1826, %v1829
        %v1832 = vshrl.u32 %v1788, 16
        %v1834 = vrot.slane %v1832, 2
        %v1835 = vshll.u32 %v1788, 16
        %v1837 = vrot.slane %v1835, 3
        %v1838 = vor.u32 %v1834, %v1837
        %v1839 = vsel %vm1511, %v1830, %v1838
        %v1857 = vunpack.c.l.b16 %v1807
        %v1858 = vunpack.c.l.b16 %v1808
        %v1859 = vunpack.c.l.b16 %v1809
        %v1860 = vunpack.c.l.b16 %v1810
        %v1861 = vunpack.c.l.b16 %v1811
        %v1862 = vunpack.c.l.b16 %v1812
        %v1863 = vunpack.c.l.b16 %v1813
        %v1864 = vunpack.c.l.b16 %v1814
        %v1865 = vunpack.c.l.b16 %v1815
        %v1866 = vunpack.c.l.b16 %v1816
        %v1867 = vunpack.c.l.b16 %v1817
        %v1868 = vunpack.c.l.b16 %v1818
        %v1869 = vunpack.c.l.b16 %v1819
        %v1870 = vunpack.c.l.b16 %v1820
        %v1871 = vunpack.c.l.b16 %v1821
        %v1872 = vunpack.c.l.b16 %v1822
        %v1873 = vpack.c.b16 %v1858, %v1857
        %v1874 = vpack.c.b16 %v1860, %v1859
        %v1875 = vpack.c.b16 %v1862, %v1861
        %v1876 = vpack.c.b16 %v1864, %v1863
        %v1877 = vpack.c.b16 %v1866, %v1865
        %v1878 = vpack.c.b16 %v1868, %v1867
        %v1879 = vpack.c.b16 %v1870, %v1869
        %v1880 = vpack.c.b16 %v1872, %v1871
        %1889 = vmatprep.subr.bf16.mxu0 0
        %1890 = vmatpush1.bf16.msra.mxu0 %v1873
        %1891 = vmatprep.subr.bf16.mxu0 0
        %1892 = vmatpush1.bf16.msra.mxu0 %v1874
        %1893 = vmatprep.subr.bf16.mxu0 0
        %1894 = vmatpush1.bf16.msra.mxu0 %v1875
        %1895 = vmatprep.subr.bf16.mxu0 0
        %1896 = vmatpush1.bf16.msra.mxu0 %v1876
        %1897 = vmatprep.subr.bf16.mxu0 0
        %1898 = vmatpush1.bf16.msra.mxu0 %v1877
        %1899 = vmatprep.subr.bf16.mxu0 0
        %1900 = vmatpush1.bf16.msra.mxu0 %v1878
        %1901 = vmatprep.subr.bf16.mxu0 0
        %1902 = vmatpush1.bf16.msra.mxu0 %v1879
        %1903 = vmatprep.subr.bf16.mxu0 0
        %1904 = vmatpush1.bf16.msra.mxu0 %v1880
        %1905 = vmatprep.subr.bf16.mxu0 0
        %1906 = vmatpush1.bf16.msra.mxu0 0
        %1907 = vmatprep.subr.bf16.mxu0 0
        %1908 = vmatpush1.bf16.msra.mxu0 0
        %1909 = vmatprep.subr.bf16.mxu0 0
        %1910 = vmatpush1.bf16.msra.mxu0 0
        %1911 = vmatprep.subr.bf16.mxu0 0
        %1912 = vmatpush1.bf16.msra.mxu0 0
        %1913 = vmatprep.subr.bf16.mxu0 0
        %1914 = vmatpush1.bf16.msra.mxu0 0
        %1915 = vmatprep.subr.bf16.mxu0 0
        %1916 = vmatpush1.bf16.msra.mxu0 0
        %1917 = vmatprep.subr.bf16.mxu0 0
        %1918 = vmatpush1.bf16.msra.mxu0 0
        %1919 = vmatprep.subr.bf16.mxu0 0
        %1920 = vmatpush1.bf16.msra.mxu0 0
        %1921 = vmatprep.mubr.bf16.mxu0 0
        %1922 = vmatmul.mubr.bf16.gmra.mrb[0].mxu0 %v1839
        %v1923 = vpop.f32.mrb[0].mxu0
        %v1924 = vadd.f32 0.0, %v1923
        %v1925 = vpop.f32.mrb[0].mxu0
        %v1926 = vpop.f32.mrb[0].mxu0
        %v1927 = vadd.f32 0.0, %v1926
        %v1928 = vpop.f32.mrb[0].mxu0
        %1929 = vdwg.mxu0
        %v1932 = vrot.slane %v1787, 2
        %v1933 = vrot.slane %v1788, 2
        %v1934 = vsel %vm947, %v1932, %v1933
        %v1952 = vunpack.c.l.b16 %v1790
        %v1953 = vunpack.c.l.b16 %v1791
        %v1954 = vunpack.c.l.b16 %v1792
        %v1955 = vunpack.c.l.b16 %v1793
        %v1956 = vunpack.c.l.b16 %v1794
        %v1957 = vunpack.c.l.b16 %v1795
        %v1958 = vunpack.c.l.b16 %v1796
        %v1959 = vunpack.c.l.b16 %v1797
        %v1960 = vunpack.c.l.b16 %v1798
        %v1961 = vunpack.c.l.b16 %v1799
        %v1962 = vunpack.c.l.b16 %v1800
        %v1963 = vunpack.c.l.b16 %v1801
        %v1964 = vunpack.c.l.b16 %v1802
        %v1965 = vunpack.c.l.b16 %v1803
        %v1966 = vunpack.c.l.b16 %v1804
        %v1967 = vunpack.c.l.b16 %v1805
        %v1968 = vpack.c.b16 %v1953, %v1952
        %v1969 = vpack.c.b16 %v1955, %v1954
        %v1970 = vpack.c.b16 %v1957, %v1956
        %v1971 = vpack.c.b16 %v1959, %v1958
        %v1972 = vpack.c.b16 %v1961, %v1960
        %v1973 = vpack.c.b16 %v1963, %v1962
        %v1974 = vpack.c.b16 %v1965, %v1964
        %v1975 = vpack.c.b16 %v1967, %v1966
        %1984 = vmatprep.subr.bf16.mxu0 0
        %1985 = vmatpush1.bf16.msra.mxu0 %v1968
        %1986 = vmatprep.subr.bf16.mxu0 0
        %1987 = vmatpush1.bf16.msra.mxu0 %v1969
        %1988 = vmatprep.subr.bf16.mxu0 0
        %1989 = vmatpush1.bf16.msra.mxu0 %v1970
        %1990 = vmatprep.subr.bf16.mxu0 0
        %1991 = vmatpush1.bf16.msra.mxu0 %v1971
        %1992 = vmatprep.subr.bf16.mxu0 0
        %1993 = vmatpush1.bf16.msra.mxu0 %v1972
        %1994 = vmatprep.subr.bf16.mxu0 0
        %1995 = vmatpush1.bf16.msra.mxu0 %v1973
        %1996 = vmatprep.subr.bf16.mxu0 0
        %1997 = vmatpush1.bf16.msra.mxu0 %v1974
        %1998 = vmatprep.subr.bf16.mxu0 0
        %1999 = vmatpush1.bf16.msra.mxu0 %v1975
        %2000 = vmatprep.subr.bf16.mxu0 0
        %2001 = vmatpush1.bf16.msra.mxu0 0
        %2002 = vmatprep.subr.bf16.mxu0 0
        %2003 = vmatpush1.bf16.msra.mxu0 0
        %2004 = vmatprep.subr.bf16.mxu0 0
        %2005 = vmatpush1.bf16.msra.mxu0 0
        %2006 = vmatprep.subr.bf16.mxu0 0
        %2007 = vmatpush1.bf16.msra.mxu0 0
        %2008 = vmatprep.subr.bf16.mxu0 0
        %2009 = vmatpush1.bf16.msra.mxu0 0
        %2010 = vmatprep.subr.bf16.mxu0 0
        %2011 = vmatpush1.bf16.msra.mxu0 0
        %2012 = vmatprep.subr.bf16.mxu0 0
        %2013 = vmatpush1.bf16.msra.mxu0 0
        %2014 = vmatprep.subr.bf16.mxu0 0
        %2015 = vmatpush1.bf16.msra.mxu0 0
        %2016 = vmatprep.mubr.bf16.mxu0 0
        %2017 = vmatmul.mubr.bf16.gmra.mrb[0].mxu0 %v1934
        %v2018 = vpop.f32.mrb[0].mxu0
        %v2019 = vadd.f32 %v1924, %v2018
        %v2020 = vpop.f32.mrb[0].mxu0
        %v2021 = vpop.f32.mrb[0].mxu0
        %v2022 = vadd.f32 %v1927, %v2021
        %v2023 = vpop.f32.mrb[0].mxu0
        %2024 = vdwg.mxu0
        %s2025 = scalar_lea.vmem [#allocation7], 128
        %v2026 = vld [vmem:[%s2025] sm:$0xf]
        %v2027 = vld [vmem:[%s2025 + $0x4] sm:$0xf]
        %v2028 = vld [vmem:[%s2025 + $0x8] sm:$0xf]
        %v2029 = vld [vmem:[%s2025 + $0xc] sm:$0xf]
        %v2030 = vld [vmem:[%s2025 + $0x10] sm:$0xf]
        %v2031 = vld [vmem:[%s2025 + $0x14] sm:$0xf]
        %v2032 = vld [vmem:[%s2025 + $0x18] sm:$0xf]
        %v2033 = vld [vmem:[%s2025 + $0x1c] sm:$0xf]
        %v2034 = vld [vmem:[%s2025 + $0x20] sm:$0xf]
        %v2035 = vld [vmem:[%s2025 + $0x24] sm:$0xf]
        %v2036 = vld [vmem:[%s2025 + $0x28] sm:$0xf]
        %v2037 = vld [vmem:[%s2025 + $0x2c] sm:$0xf]
        %v2038 = vld [vmem:[%s2025 + $0x30] sm:$0xf]
        %v2039 = vld [vmem:[%s2025 + $0x34] sm:$0xf]
        %v2040 = vld [vmem:[%s2025 + $0x38] sm:$0xf]
        %v2041 = vld [vmem:[%s2025 + $0x3c] sm:$0xf]
        %v2042 = vrot.slane %v1787, 3
        %v2043 = vrot.slane %v1788, 3
        %v2044 = vsel %vm1637, %v2042, %v2043
        %v2062 = vunpack.c.l.b16 %v2026
        %v2063 = vunpack.c.l.b16 %v2027
        %v2064 = vunpack.c.l.b16 %v2028
        %v2065 = vunpack.c.l.b16 %v2029
        %v2066 = vunpack.c.l.b16 %v2030
        %v2067 = vunpack.c.l.b16 %v2031
        %v2068 = vunpack.c.l.b16 %v2032
        %v2069 = vunpack.c.l.b16 %v2033
        %v2070 = vunpack.c.l.b16 %v2034
        %v2071 = vunpack.c.l.b16 %v2035
        %v2072 = vunpack.c.l.b16 %v2036
        %v2073 = vunpack.c.l.b16 %v2037
        %v2074 = vunpack.c.l.b16 %v2038
        %v2075 = vunpack.c.l.b16 %v2039
        %v2076 = vunpack.c.l.b16 %v2040
        %v2077 = vunpack.c.l.b16 %v2041
        %v2078 = vpack.c.b16 %v2063, %v2062
        %v2079 = vpack.c.b16 %v2065, %v2064
        %v2080 = vpack.c.b16 %v2067, %v2066
        %v2081 = vpack.c.b16 %v2069, %v2068
        %v2082 = vpack.c.b16 %v2071, %v2070
        %v2083 = vpack.c.b16 %v2073, %v2072
        %v2084 = vpack.c.b16 %v2075, %v2074
        %v2085 = vpack.c.b16 %v2077, %v2076
        %2094 = vmatprep.subr.bf16.mxu0 0
        %2095 = vmatpush1.bf16.msra.mxu0 %v2078
        %2096 = vmatprep.subr.bf16.mxu0 0
        %2097 = vmatpush1.bf16.msra.mxu0 %v2079
        %2098 = vmatprep.subr.bf16.mxu0 0
        %2099 = vmatpush1.bf16.msra.mxu0 %v2080
        %2100 = vmatprep.subr.bf16.mxu0 0
        %2101 = vmatpush1.bf16.msra.mxu0 %v2081
        %2102 = vmatprep.subr.bf16.mxu0 0
        %2103 = vmatpush1.bf16.msra.mxu0 %v2082
        %2104 = vmatprep.subr.bf16.mxu0 0
        %2105 = vmatpush1.bf16.msra.mxu0 %v2083
        %2106 = vmatprep.subr.bf16.mxu0 0
        %2107 = vmatpush1.bf16.msra.mxu0 %v2084
        %2108 = vmatprep.subr.bf16.mxu0 0
        %2109 = vmatpush1.bf16.msra.mxu0 %v2085
        %2110 = vmatprep.subr.bf16.mxu0 0
        %2111 = vmatpush1.bf16.msra.mxu0 0
        %2112 = vmatprep.subr.bf16.mxu0 0
        %2113 = vmatpush1.bf16.msra.mxu0 0
        %2114 = vmatprep.subr.bf16.mxu0 0
        %2115 = vmatpush1.bf16.msra.mxu0 0
        %2116 = vmatprep.subr.bf16.mxu0 0
        %2117 = vmatpush1.bf16.msra.mxu0 0
        %2118 = vmatprep.subr.bf16.mxu0 0
        %2119 = vmatpush1.bf16.msra.mxu0 0
        %2120 = vmatprep.subr.bf16.mxu0 0
        %2121 = vmatpush1.bf16.msra.mxu0 0
        %2122 = vmatprep.subr.bf16.mxu0 0
        %2123 = vmatpush1.bf16.msra.mxu0 0
        %2124 = vmatprep.subr.bf16.mxu0 0
        %2125 = vmatpush1.bf16.msra.mxu0 0
        %2126 = vmatprep.mubr.bf16.mxu0 0
        %2127 = vmatmul.mubr.bf16.gmra.mrb[0].mxu0 %v2044
        %v2128 = vpop.f32.mrb[0].mxu0
        %v2129 = vadd.f32 0.0, %v2128
        %v2130 = vpop.f32.mrb[0].mxu0
        %v2131 = vpop.f32.mrb[0].mxu0
        %v2132 = vadd.f32 0.0, %v2131
        %v2133 = vpop.f32.mrb[0].mxu0
        %2134 = vdwg.mxu0
        %v2135 = vadd.f32 %v2019, %v2129
        %v2136 = vadd.f32 %v2022, %v2132
        %s2137 = scalar_lea.vmem [#allocation7], 192
        %v2138 = vld [vmem:[%s2137] sm:$0xf]
        %v2139 = vld [vmem:[%s2137 + $0x4] sm:$0xf]
        %v2140 = vld [vmem:[%s2137 + $0x8] sm:$0xf]
        %v2141 = vld [vmem:[%s2137 + $0xc] sm:$0xf]
        %v2142 = vld [vmem:[%s2137 + $0x10] sm:$0xf]
        %v2143 = vld [vmem:[%s2137 + $0x14] sm:$0xf]
        %v2144 = vld [vmem:[%s2137 + $0x18] sm:$0xf]
        %v2145 = vld [vmem:[%s2137 + $0x1c] sm:$0xf]
        %v2146 = vld [vmem:[%s2137 + $0x20] sm:$0xf]
        %v2147 = vld [vmem:[%s2137 + $0x24] sm:$0xf]
        %v2148 = vld [vmem:[%s2137 + $0x28] sm:$0xf]
        %v2149 = vld [vmem:[%s2137 + $0x2c] sm:$0xf]
        %v2150 = vld [vmem:[%s2137 + $0x30] sm:$0xf]
        %v2151 = vld [vmem:[%s2137 + $0x34] sm:$0xf]
        %v2152 = vld [vmem:[%s2137 + $0x38] sm:$0xf]
        %v2153 = vld [vmem:[%s2137 + $0x3c] sm:$0xf]
        %vm2154 = vsmask.f32 4352
        %v2155 = vrot.slane %v1824, 3
        %v2156 = vrot.slane %v1827, 4
        %v2157 = vor.u32 %v2155, %v2156
        %v2158 = vrot.slane %v1832, 3
        %v2159 = vrot.slane %v1835, 4
        %v2160 = vor.u32 %v2158, %v2159
        %v2161 = vsel %vm2154, %v2157, %v2160
        %v2179 = vunpack.c.l.b16 %v2138
        %v2180 = vunpack.c.l.b16 %v2139
        %v2181 = vunpack.c.l.b16 %v2140
        %v2182 = vunpack.c.l.b16 %v2141
        %v2183 = vunpack.c.l.b16 %v2142
        %v2184 = vunpack.c.l.b16 %v2143
        %v2185 = vunpack.c.l.b16 %v2144
        %v2186 = vunpack.c.l.b16 %v2145
        %v2187 = vunpack.c.l.b16 %v2146
        %v2188 = vunpack.c.l.b16 %v2147
        %v2189 = vunpack.c.l.b16 %v2148
        %v2190 = vunpack.c.l.b16 %v2149
        %v2191 = vunpack.c.l.b16 %v2150
        %v2192 = vunpack.c.l.b16 %v2151
        %v2193 = vunpack.c.l.b16 %v2152
        %v2194 = vunpack.c.l.b16 %v2153
        %v2195 = vpack.c.b16 %v2180, %v2179
        %v2196 = vpack.c.b16 %v2182, %v2181
        %v2197 = vpack.c.b16 %v2184, %v2183
        %v2198 = vpack.c.b16 %v2186, %v2185
        %v2199 = vpack.c.b16 %v2188, %v2187
        %v2200 = vpack.c.b16 %v2190, %v2189
        %v2201 = vpack.c.b16 %v2192, %v2191
        %v2202 = vpack.c.b16 %v2194, %v2193
        %2211 = vmatprep.subr.bf16.mxu0 0
        %2212 = vmatpush1.bf16.msra.mxu0 %v2195
        %2213 = vmatprep.subr.bf16.mxu0 0
        %2214 = vmatpush1.bf16.msra.mxu0 %v2196
        %2215 = vmatprep.subr.bf16.mxu0 0
        %2216 = vmatpush1.bf16.msra.mxu0 %v2197
        %2217 = vmatprep.subr.bf16.mxu0 0
        %2218 = vmatpush1.bf16.msra.mxu0 %v2198
        %2219 = vmatprep.subr.bf16.mxu0 0
        %2220 = vmatpush1.bf16.msra.mxu0 %v2199
        %2221 = vmatprep.subr.bf16.mxu0 0
        %2222 = vmatpush1.bf16.msra.mxu0 %v2200
        %2223 = vmatprep.subr.bf16.mxu0 0
        %2224 = vmatpush1.bf16.msra.mxu0 %v2201
        %2225 = vmatprep.subr.bf16.mxu0 0
        %2226 = vmatpush1.bf16.msra.mxu0 %v2202
        %2227 = vmatprep.subr.bf16.mxu0 0
        %2228 = vmatpush1.bf16.msra.mxu0 0
        %2229 = vmatprep.subr.bf16.mxu0 0
        %2230 = vmatpush1.bf16.msra.mxu0 0
        %2231 = vmatprep.subr.bf16.mxu0 0
        %2232 = vmatpush1.bf16.msra.mxu0 0
        %2233 = vmatprep.subr.bf16.mxu0 0
        %2234 = vmatpush1.bf16.msra.mxu0 0
        %2235 = vmatprep.subr.bf16.mxu0 0
        %2236 = vmatpush1.bf16.msra.mxu0 0
        %2237 = vmatprep.subr.bf16.mxu0 0
        %2238 = vmatpush1.bf16.msra.mxu0 0
        %2239 = vmatprep.subr.bf16.mxu0 0
        %2240 = vmatpush1.bf16.msra.mxu0 0
        %2241 = vmatprep.subr.bf16.mxu0 0
        %2242 = vmatpush1.bf16.msra.mxu0 0
        %2243 = vmatprep.mubr.bf16.mxu0 0
        %2244 = vmatmul.mubr.bf16.gmra.mrb[0].mxu0 %v2161
        %v2245 = vpop.f32.mrb[0].mxu0
        %v2246 = vadd.f32 0.0, %v2245
        %v2247 = vpop.f32.mrb[0].mxu0
        %v2248 = vpop.f32.mrb[0].mxu0
        %v2249 = vadd.f32 0.0, %v2248
        %v2250 = vpop.f32.mrb[0].mxu0
        %2251 = vdwg.mxu0
        %v2252 = vadd.f32 %v2135, %v2246
        %v2253 = vadd.f32 %v2136, %v2249
        %s2254 = scalar_lea.vmem [#allocation7], 256
        %v2255 = vld [vmem:[%s2254] sm:$0xf]
        %v2256 = vld [vmem:[%s2254 + $0x4] sm:$0xf]
        %v2257 = vld [vmem:[%s2254 + $0x8] sm:$0xf]
        %v2258 = vld [vmem:[%s2254 + $0xc] sm:$0xf]
        %v2259 = vld [vmem:[%s2254 + $0x10] sm:$0xf]
        %v2260 = vld [vmem:[%s2254 + $0x14] sm:$0xf]
        %v2261 = vld [vmem:[%s2254 + $0x18] sm:$0xf]
        %v2262 = vld [vmem:[%s2254 + $0x1c] sm:$0xf]
        %v2263 = vld [vmem:[%s2254 + $0x20] sm:$0xf]
        %v2264 = vld [vmem:[%s2254 + $0x24] sm:$0xf]
        %v2265 = vld [vmem:[%s2254 + $0x28] sm:$0xf]
        %v2266 = vld [vmem:[%s2254 + $0x2c] sm:$0xf]
        %v2267 = vld [vmem:[%s2254 + $0x30] sm:$0xf]
        %v2268 = vld [vmem:[%s2254 + $0x34] sm:$0xf]
        %v2269 = vld [vmem:[%s2254 + $0x38] sm:$0xf]
        %v2270 = vld [vmem:[%s2254 + $0x3c] sm:$0xf]
        %vm2271 = vcmask 1043456
        %v2272 = vrot.slane %v1787, 4
        %v2273 = vrot.slane %v1788, 4
        %v2274 = vsel %vm2271, %v2272, %v2273
        %v2292 = vunpack.c.l.b16 %v2255
        %v2293 = vunpack.c.l.b16 %v2256
        %v2294 = vunpack.c.l.b16 %v2257
        %v2295 = vunpack.c.l.b16 %v2258
        %v2296 = vunpack.c.l.b16 %v2259
        %v2297 = vunpack.c.l.b16 %v2260
        %v2298 = vunpack.c.l.b16 %v2261
        %v2299 = vunpack.c.l.b16 %v2262
        %v2300 = vunpack.c.l.b16 %v2263
        %v2301 = vunpack.c.l.b16 %v2264
        %v2302 = vunpack.c.l.b16 %v2265
        %v2303 = vunpack.c.l.b16 %v2266
        %v2304 = vunpack.c.l.b16 %v2267
        %v2305 = vunpack.c.l.b16 %v2268
        %v2306 = vunpack.c.l.b16 %v2269
        %v2307 = vunpack.c.l.b16 %v2270
        %v2308 = vpack.c.b16 %v2293, %v2292
        %v2309 = vpack.c.b16 %v2295, %v2294
        %v2310 = vpack.c.b16 %v2297, %v2296
        %v2311 = vpack.c.b16 %v2299, %v2298
        %v2312 = vpack.c.b16 %v2301, %v2300
        %v2313 = vpack.c.b16 %v2303, %v2302
        %v2314 = vpack.c.b16 %v2305, %v2304
        %v2315 = vpack.c.b16 %v2307, %v2306
        %2324 = vmatprep.subr.bf16.mxu0 0
        %2325 = vmatpush1.bf16.msra.mxu0 %v2308
        %2326 = vmatprep.subr.bf16.mxu0 0
        %2327 = vmatpush1.bf16.msra.mxu0 %v2309
        %2328 = vmatprep.subr.bf16.mxu0 0
        %2329 = vmatpush1.bf16.msra.mxu0 %v2310
        %2330 = vmatprep.subr.bf16.mxu0 0
        %2331 = vmatpush1.bf16.msra.mxu0 %v2311
        %2332 = vmatprep.subr.bf16.mxu0 0
        %2333 = vmatpush1.bf16.msra.mxu0 %v2312
        %2334 = vmatprep.subr.bf16.mxu0 0
        %2335 = vmatpush1.bf16.msra.mxu0 %v2313
        %2336 = vmatprep.subr.bf16.mxu0 0
        %2337 = vmatpush1.bf16.msra.mxu0 %v2314
        %2338 = vmatprep.subr.bf16.mxu0 0
        %2339 = vmatpush1.bf16.msra.mxu0 %v2315
        %2340 = vmatprep.subr.bf16.mxu0 0
        %2341 = vmatpush1.bf16.msra.mxu0 0
        %2342 = vmatprep.subr.bf16.mxu0 0
        %2343 = vmatpush1.bf16.msra.mxu0 0
        %2344 = vmatprep.subr.bf16.mxu0 0
        %2345 = vmatpush1.bf16.msra.mxu0 0
        %2346 = vmatprep.subr.bf16.mxu0 0
        %2347 = vmatpush1.bf16.msra.mxu0 0
        %2348 = vmatprep.subr.bf16.mxu0 0
        %2349 = vmatpush1.bf16.msra.mxu0 0
        %2350 = vmatprep.subr.bf16.mxu0 0
        %2351 = vmatpush1.bf16.msra.mxu0 0
        %2352 = vmatprep.subr.bf16.mxu0 0
        %2353 = vmatpush1.bf16.msra.mxu0 0
        %2354 = vmatprep.subr.bf16.mxu0 0
        %2355 = vmatpush1.bf16.msra.mxu0 0
        %2356 = vmatprep.mubr.bf16.mxu0 0
        %2357 = vmatmul.mubr.bf16.gmra.mrb[0].mxu0 %v2274
        %v2358 = vpop.f32.mrb[0].mxu0
        %v2359 = vadd.f32 0.0, %v2358
        %v2360 = vpop.f32.mrb[0].mxu0
        %v2361 = vpop.f32.mrb[0].mxu0
        %v2362 = vadd.f32 0.0, %v2361
        %v2363 = vpop.f32.mrb[0].mxu0
        %2364 = vdwg.mxu0
        %v2365 = vadd.f32 %v2252, %v2359
        %v2366 = vadd.f32 %v2253, %v2362
        %v2368 = vlaneseq
        %v2369 = vshrl.u32 %v2368, 7
        %v2370 = vsub.s32 0, %v2369
        %v2371 = vrot.slane %v1789, %v2370
        %v2373 = vadd.f32 %v2365, %v2371
        %v2374 = vadd.f32 %v2366, %v2371
        %v2375 = vxor.u32 %v2373, 2147483648
        %v2376 = vxor.u32 %v2374, 2147483648
        %v2377 = vmul.f32 %v2375, 1.442695
        %v2378 = vpow.pop %v2377
        %v2379 = vmul.f32 %v2376, 1.442695
        %v2380 = vpow.pop %v2379
        %v2381 = vadd.f32 %v2378, 1.0
        %v2382 = vadd.f32 %v2380, 1.0
        %v2383 = vrcp.pop %v2381
        %v2384 = vmul.f32 1.0, %v2383
        %v2385 = vrcp.pop %v2382
        %v2386 = vmul.f32 1.0, %v2385
        %v2387 = vmul.f32 %v2373, %v2384
        %v2388 = vmul.f32 %v2374, %v2386
        %v2389 = vpack.c.bf16 %v2388, %v2387
        %v2391 = vunpack.c.l.b16 %v2389
        %v2392 = vunpack.c.h.b16 %v2389
        %v2393 = vpack.c.b16 %v2391, %v2391
        %v2394 = vpack.c.b16 %v2392, %v2392
        %2397 = vst [vmem:[%s389] sm:$0xf] %v2393
        %2398 = vst [vmem:[%s389 + $0x4] sm:$0xf] %v2394
        %v2399 = vld [vmem:[%s7] sm:$0xf]
        %v2400 = vld [vmem:[%s7 + $0x4] sm:$0xf]
        %v2401 = vld [vmem:[%s7 + $0x8] sm:$0xf]
        %v2402 = vld [vmem:[%s7 + $0xc] sm:$0xf]
        %v2403 = vld [vmem:[%s7 + $0x10] sm:$0xf]
        %v2404 = vld [vmem:[%s7 + $0x14] sm:$0xf]
        %v2405 = vld [vmem:[%s7 + $0x18] sm:$0xf]
        %v2406 = vld [vmem:[%s7 + $0x1c] sm:$0xf]
        %v2407 = vld [vmem:[%s7 + $0x20] sm:$0xf]
        %v2408 = vld [vmem:[%s7 + $0x24] sm:$0xf]
        %v2409 = vld [vmem:[%s7 + $0x28] sm:$0xf]
        %v2410 = vld [vmem:[%s7 + $0x2c] sm:$0xf]
        %v2411 = vld [vmem:[%s7 + $0x30] sm:$0xf]
        %v2412 = vld [vmem:[%s7 + $0x34] sm:$0xf]
        %v2413 = vld [vmem:[%s7 + $0x38] sm:$0xf]
        %v2414 = vld [vmem:[%s7 + $0x3c] sm:$0xf]
        %v2431 = vunpack.c.l.b16 %v2399
        %v2432 = vunpack.c.l.b16 %v2400
        %v2433 = vunpack.c.l.b16 %v2401
        %v2434 = vunpack.c.l.b16 %v2402
        %v2435 = vunpack.c.l.b16 %v2403
        %v2436 = vunpack.c.l.b16 %v2404
        %v2437 = vunpack.c.l.b16 %v2405
        %v2438 = vunpack.c.l.b16 %v2406
        %v2439 = vunpack.c.l.b16 %v2407
        %v2440 = vunpack.c.l.b16 %v2408
        %v2441 = vunpack.c.l.b16 %v2409
        %v2442 = vunpack.c.l.b16 %v2410
        %v2443 = vunpack.c.l.b16 %v2411
        %v2444 = vunpack.c.l.b16 %v2412
        %v2445 = vunpack.c.l.b16 %v2413
        %v2446 = vunpack.c.l.b16 %v2414
        %v2447 = vpack.c.b16 %v2432, %v2431
        %v2448 = vpack.c.b16 %v2434, %v2433
        %v2449 = vpack.c.b16 %v2436, %v2435
        %v2450 = vpack.c.b16 %v2438, %v2437
        %v2451 = vpack.c.b16 %v2440, %v2439
        %v2452 = vpack.c.b16 %v2442, %v2441
        %v2453 = vpack.c.b16 %v2444, %v2443
        %v2454 = vpack.c.b16 %v2446, %v2445
        %2463 = vmatprep.subr.bf16.mxu0 0
        %2464 = vmatpush1.bf16.msra.mxu0 %v2447
        %2465 = vmatprep.subr.bf16.mxu0 0
        %2466 = vmatpush1.bf16.msra.mxu0 %v2448
        %2467 = vmatprep.subr.bf16.mxu0 0
        %2468 = vmatpush1.bf16.msra.mxu0 %v2449
        %2469 = vmatprep.subr.bf16.mxu0 0
        %2470 = vmatpush1.bf16.msra.mxu0 %v2450
        %2471 = vmatprep.subr.bf16.mxu0 0
        %2472 = vmatpush1.bf16.msra.mxu0 %v2451
        %2473 = vmatprep.subr.bf16.mxu0 0
        %2474 = vmatpush1.bf16.msra.mxu0 %v2452
        %2475 = vmatprep.subr.bf16.mxu0 0
        %2476 = vmatpush1.bf16.msra.mxu0 %v2453
        %2477 = vmatprep.subr.bf16.mxu0 0
        %2478 = vmatpush1.bf16.msra.mxu0 %v2454
        %2479 = vmatprep.subr.bf16.mxu0 0
        %2480 = vmatpush1.bf16.msra.mxu0 0
        %2481 = vmatprep.subr.bf16.mxu0 0
        %2482 = vmatpush1.bf16.msra.mxu0 0
        %2483 = vmatprep.subr.bf16.mxu0 0
        %2484 = vmatpush1.bf16.msra.mxu0 0
        %2485 = vmatprep.subr.bf16.mxu0 0
        %2486 = vmatpush1.bf16.msra.mxu0 0
        %2487 = vmatprep.subr.bf16.mxu0 0
        %2488 = vmatpush1.bf16.msra.mxu0 0
        %2489 = vmatprep.subr.bf16.mxu0 0
        %2490 = vmatpush1.bf16.msra.mxu0 0
        %2491 = vmatprep.subr.bf16.mxu0 0
        %2492 = vmatpush1.bf16.msra.mxu0 0
        %2493 = vmatprep.subr.bf16.mxu0 0
        %2494 = vmatpush1.bf16.msra.mxu0 0
        %2495 = vmatprep.mubr.bf16.mxu0 0
        %2496 = vmatmul.mubr.bf16.gmra.mrb[0].mxu0 %v2389
        %v2497 = vpop.f32.mrb[0].mxu0
        %v2498 = vadd.f32 0.0, %v2497
        %v2499 = vpop.f32.mrb[0].mxu0
        %v2500 = vpop.f32.mrb[0].mxu0
        %v2501 = vadd.f32 0.0, %v2500
        %v2502 = vpop.f32.mrb[0].mxu0
        %2503 = vdwg.mxu0
        %v2504 = vlaneseq
        %v2505 = vand.u32 %v2504, 127
        %vm2506 = vcmp.lt.s32.totalorder %v2505, 10
        %v2507 = vsel %vm2506, 1, 0
        %vm2508 = vcmp.eq.s32.totalorder %v2507, 1
        %v2509 = vsel %vm2508, %v2498, -1e+30
        %v2510 = vsel %vm2508, %v2501, -1e+30
        %2511 = vmax.xlane.f32.xlu0 %v2509
        %v2512 = vpop.xlane.xlu0 %2511
        %2513 = vmax.xlane.f32.xlu0 %v2510
        %v2514 = vpop.xlane.xlu0 %2513
        %v2515 = vsub.f32 %v2509, %v2512
        %v2516 = vsub.f32 %v2510, %v2514
        %v2517 = vmul.f32 %v2515, 1.442695
        %v2518 = vpow.pop %v2517
        %v2519 = vmul.f32 %v2516, 1.442695
        %v2520 = vpow.pop %v2519
        %2521 = vadd.xlane.f32.xlu0 %v2518
        %v2522 = vpop.xlane.xlu0 %2521
        %2523 = vadd.xlane.f32.xlu0 %v2520
        %v2524 = vpop.xlane.xlu0 %2523
        %v2525 = vlog2.pop %v2522
        %v2526 = vmul.f32 %v2525, 0.6931472
        %v2527 = vlog2.pop %v2524
        %v2528 = vmul.f32 %v2527, 0.6931472
        %v2529 = vsub.f32 %v2515, %v2526
        %v2530 = vsub.f32 %v2516, %v2528
        %2531 = vst [vmem:[%s396] sm:$0xff] %v2529
        %2532 = vst [vmem:[%s396 + $0x8] sm:$0xff] %v2530
        %s2533 = sand.u32 %s224, 1
        %s2534 = scalar_lea.sflag [#allocation4], %s2533
        %s2535 = sand.u32 %s224, 1
        %s2536 = smul.addr %s2535, 8
        %s2537 = scalar_lea.vmem [#allocation8], %s2536
        %s2538 = sand.u32 %s252, 1
        %s2539 = scalar_lea.sflag [#allocation10], %s2538
        %s2540 = sand.u32 %s252, 1
        %s2541 = smul.addr %s2540, 16
        %s2542 = scalar_lea.vmem [#allocation9], %s2541
        // Predicated region
        $region65: #{tpu_custom_call.1} parent=51 // pred_check
          %p2543 = pneg %p234
        $region66: #{tpu_custom_call.1} parent=51 // pred_check_branch
          %2545 = sbr.rel (%p2543) target = $region68
        $region67: #{tpu_custom_call.1} parent=51 // pred_region
          %s2546 = smul.u32 2, %s34
          %s2548 = ssub.s32 128, 128
          %2549 = vsyncadd %s2534, %s2548
          %s2550 = smul.addr %s33, 4
          %s2551 = sadd.s32 %s2546, %s2550
          %s2552 = smul.addr %s2551, 64
          %s2553 = scalar_lea.hbm %s8, %s2552
          %s2554 = sshll.u32 %s2537, 4
          %s2555 = int_to_ptr.vmem [resolvable:$true] %s2554
          %2560 = dma.vmem_to_hbm [thread:$0]  %s2555, 128, %s2553, %s2534, 64, 64, 4
        $region68: #{tpu_custom_call.1} parent=51 // pred_fallthru
          _
        // Predicated region
        $region69: #{tpu_custom_call.1} parent=51 // pred_check
          %p2561 = pneg %p262
        $region70: #{tpu_custom_call.1} parent=51 // pred_check_branch
          %2563 = sbr.rel (%p2561) target = $region72
        $region71: #{tpu_custom_call.1} parent=51 // pred_region
          %s2564 = smul.u32 2, %s34
          %s2566 = ssub.s32 256, 256
          %2567 = vsyncadd %s2539, %s2566
          %s2568 = smul.addr %s33, 4
          %s2569 = sadd.s32 %s2564, %s2568
          %s2570 = smul.addr %s2569, 128
          %s2571 = scalar_lea.hbm %s9, %s2570
          %s2572 = sshll.u32 %s2542, 4
          %s2573 = int_to_ptr.vmem [resolvable:$true] %s2572
          %2578 = dma.vmem_to_hbm [thread:$0]  %s2573, 256, %s2571, %s2539, 128, 128, 8
        $region72: #{tpu_custom_call.1} parent=51 // pred_fallthru
          _
      $region52: #{tpu_custom_call.1} parent=5 // pred_fallthru
        _
      %p2579 = scmp.le.s32.totalorder 2, %s24
      // Predicated region
      $region73: #{tpu_custom_call.1} parent=5 // pred_check
        %p2580 = pneg %p2579
      $region74: #{tpu_custom_call.1} parent=5 // pred_check_branch
        %2582 = sbr.rel (%p2580) target = $region76
      $region75: #{tpu_custom_call.1} parent=5 // pred_region
        %s2583 = ssub.s32 %s24, 2
        // Predicated region
        $region77: #{tpu_custom_call.1} parent=75 // pred_check
          %p2584 = pneg %p240
        $region78: #{tpu_custom_call.1} parent=75 // pred_check_branch
          %2586 = sbr.rel (%p2584) target = $region80
        $region79: #{tpu_custom_call.1} parent=75 // pred_region
          %s2587 = sand.u32 %s225, 1
          %s2588 = scalar_lea.sflag [#allocation4], %s2587
          %s2589 = sand.u32 %s225, 1
          %s2590 = smul.addr %s2589, 8
          %s2591 = scalar_lea.vmem [#allocation8], %s2590
          %2592 = dma.done %s2588, 128
        $region80: #{tpu_custom_call.1} parent=75 // pred_fallthru
          _
        // Predicated region
        $region81: #{tpu_custom_call.1} parent=75 // pred_check
          %p2593 = pneg %p268
        $region82: #{tpu_custom_call.1} parent=75 // pred_check_branch
          %2595 = sbr.rel (%p2593) target = $region84
        $region83: #{tpu_custom_call.1} parent=75 // pred_region
          %s2596 = sand.u32 %s253, 1
          %s2597 = scalar_lea.sflag [#allocation10], %s2596
          %s2598 = sand.u32 %s253, 1
          %s2599 = smul.addr %s2598, 16
          %s2600 = scalar_lea.vmem [#allocation9], %s2599
          %2601 = dma.done %s2597, 256
        $region84: #{tpu_custom_call.1} parent=75 // pred_fallthru
          _
      $region76: #{tpu_custom_call.1} parent=5 // pred_fallthru
        _
    $region6: #{tpu_custom_call.1} parent=1 // loop_footer
      %s28 = sadd.s32 1, %s24
    $region7: #{tpu_custom_call.1} parent=1 // loop_footer_branch
      %23 = sbr.rel target = $region3
    $region8: #{tpu_custom_call.1} parent=1 // loop_exit
      _
    %2602 = vsyncpa [#allocation3], 1
    %s2603 = scalar_lea.sflag [#allocation3], 1
    %2604 = vsyncpa %s2603, 1
    %2605 = vsyncpa [#allocation6], 1
    %2606 = vsyncpa [#allocation4], 1
    %s2607 = scalar_lea.sflag [#allocation4], 1
    %2608 = vsyncpa %s2607, 1
    %2609 = vsyncpa [#allocation10], 1
    %s2610 = scalar_lea.sflag [#allocation10], 1
    %2611 = vsyncpa %s2610, 1

// kernel: tpu_custom_call.1
$region0: #{tpu_custom_call.1}
  #allocation0 [shape = 'u32[]', space=smem, size = 0x4, offset = 0x4, fixed_abs, tag = 'smem constant byte address 0x4 - core index']
  #allocation1 [shape = 'u32[144,128]{1,0:T(1,128)}', space=vmem, size = 0x12000, scoped, tag = 'internal scratch']
  %s0 = inlined_call_operand.vmem [shape: bf16[2,44,128], index: 0, kind: input, shape index: {}]
  %s1 = inlined_call_operand.hbm [shape: bf16[5,128,128], index: 1, kind: input, shape index: {}]
  %s2 = inlined_call_operand.vmem [shape: f32[1,128], index: 2, kind: input, shape index: {}]
  %s3 = inlined_call_operand.hbm [shape: bf16[5,128,128], index: 3, kind: input, shape index: {}]
  %s4 = inlined_call_operand.vmem [shape: f32[1,128], index: 4, kind: input, shape index: {}]
  %s5 = inlined_call_operand.hbm [shape: bf16[5,128,128], index: 5, kind: input, shape index: {}]
  %s6 = inlined_call_operand.vmem [shape: f32[1,128], index: 6, kind: input, shape index: {}]
  %s7 = inlined_call_operand.vmem [shape: bf16[128,128], index: 7, kind: input, shape index: {}]
  %s8 = inlined_call_operand.hbm [shape: bf16[2,32,128], index: 8, kind: output, shape index: {0}]
  %s9 = inlined_call_operand.hbm [shape: f32[2,32,128], index: 9, kind: output, shape index: {1}]
  %10 = xla_tuple %s8, %s9
  %s11 = sld [smem:[#allocation0]]
  $region85: #{tpu_custom_call.1} parent=0
    _
  %s13 = ssub.s32 1, %s11
  %s14 = scalar_select 0, %s13, %s11
  $region1: #{tpu_custom_call.1} parent=0
    #allocation2 [shape = 'u8[163840]{0}', space=vmem, size = 0x28000, scoped, tag = 'input window, operand 1, single buffered']
    #allocation3 [shape = 's32[2]{0}', space=sflag, size = 0x8, scoped, tag = 'scoped memory for tpu_custom_call.1']
    #allocation4 [shape = 's32[2]{0}', space=sflag, size = 0x8, scoped, tag = 'scoped memory for tpu_custom_call.1']
    #allocation5 [shape = 'u8[163840]{0}', space=vmem, size = 0x28000, scoped, tag = 'input window, operand 3, single buffered']
    #allocation6 [shape = 's32[1]{0}', space=sflag, size = 0x4, scoped, tag = 'scoped memory for tpu_custom_call.1']
    #allocation7 [shape = 'u8[163840]{0}', space=vmem, size = 0x28000, scoped, tag = 'input window, operand 5, single buffered']
    #allocation8 [shape = 'u8[8192]{0}', space=vmem, size = 0x2000, scoped, tag = 'output window, operand 0']
    #allocation9 [shape = 'u8[16384]{0}', space=vmem, size = 0x4000, scoped, tag = 'output window, operand 1']
    #allocation10 [shape = 's32[2]{0}', space=sflag, size = 0x8, scoped, tag = 'scoped memory for tpu_custom_call.1']
    %15 = vsyncpa [#allocation3], 0
    %16 = vsyncpa [#allocation6], 0
    %17 = vsyncpa [#allocation4], 0
    %s18 = scalar_lea.sflag [#allocation4], 1
    %19 = vsyncpa %s18, 0
    %20 = vsyncpa [#allocation10], 0
    %s21 = scalar_lea.sflag [#allocation10], 1
    %22 = vsyncpa %s21, 0
    loop: start=0, step=1, limit=6
    $region2: #{tpu_custom_call.1} parent=1 // loop_pre_header
      _
    $region3: #{tpu_custom_call.1} parent=1 // loop_header
      %s24 = sphi 0, %s28
      %p25 = scmp.ge.s32.totalorder %s24, 6
      %s31 = sphi 0, %s43
      %s32 = sphi 0, %s39
      %s33 = sphi 0, %s31
      %s34 = sphi 0, %s32
      %s35 = sphi 0, %s33
      %s36 = sphi 0, %s34
      %s46 = sphi 0, %s48
      %s49 = sphi 0, %s46
      %s50 = sphi 0, %s49
      %s66 = sphi 0, %s50
      %s70 = sphi 0, %s70
      %s72 = sphi 0, %s70
      %s73 = sphi 0, %s72
      %s87 = sphi 0, %s73
      %s91 = sphi 0, %s91
      %s93 = sphi 0, %s91
      %s94 = sphi 0, %s93
      %s108 = sphi 0, %s94
      %s112 = sphi 0, %s112
      %s114 = sphi 0, %s112
      %s115 = sphi 0, %s114
      %s129 = sphi 0, %s115
      %s133 = sphi 0, %s133
      %s135 = sphi 0, %s133
      %s136 = sphi 0, %s135
      %s150 = sphi 0, %s136
      %s154 = sphi 0, %s154
      %s156 = sphi 0, %s154
      %s157 = sphi 0, %s156
      %s171 = sphi 0, %s157
      %s175 = sphi 0, %s175
      %s177 = sphi 0, %s175
      %s178 = sphi 0, %s177
      %s192 = sphi 0, %s178
      %s196 = sphi 0, %s196
      %s198 = sphi 0, %s196
      %s199 = sphi 0, %s198
      %s213 = sphi 0, %s199
      %s221 = sphi 0, %s223
      %s224 = sphi 0, %s221
      %s225 = sphi 0, %s224
      %s241 = sphi 0, %s225
      %s249 = sphi 0, %s251
      %s252 = sphi 0, %s249
      %s253 = sphi 0, %s252
      %s269 = sphi 0, %s253
    $region4: #{tpu_custom_call.1} parent=1 // loop_header_branch
      %27 = sbr.rel (%p25) target = $region8
    $region5: #{tpu_custom_call.1} parent=1 // loop_body
      %s29 = ssub.s32 %s24, 1
      %s30 = ssub.s32 %s24, 2
      %s37 = sadd.s32 1, %s32
      %p38 = scmp.ge.s32.totalorder %s37, 2
      %s39 = scalar_select %p38, 0, %s37
      %s40 = sadd.s32 1, %s31
      %s41 = scalar_select %p38, %s40, %s31
      %p42 = scmp.ge.s32.totalorder %s41, 2
      %s43 = scalar_select %p42, 0, %s41
      %s44 = ssub.s32 %s31, %s43
      %p45 = scmp.eq.s32.totalorder %s44, 0
      %s47 = sadd.s32 %s46, 1
      %s48 = scalar_select %p45, %s46, %s47
      %p51 = pneg %p45
      %p52 = scmp.eq.s32.totalorder %s24, 3
      %p53 = por %p51, %p52
      %p54 = scmp.ne.s32.totalorder %s46, %s49
      %p55 = scmp.eq.s32.totalorder %s24, 0
      %p56 = por %p54, %p55
      %p57 = scmp.ne.s32.totalorder %s46, %s49
      %p58 = scmp.eq.s32.totalorder %s29, 3
      %p59 = por %p57, %p58
      %p60 = scmp.ne.s32.totalorder %s49, %s50
      %p61 = scmp.eq.s32.totalorder %s29, 0
      %p62 = por %p60, %p61
      %p63 = scmp.ne.s32.totalorder %s49, %s50
      %p64 = scmp.eq.s32.totalorder %s30, 3
      %p65 = por %p63, %p64
      %p67 = scmp.ne.s32.totalorder %s50, %s66
      %p68 = scmp.eq.s32.totalorder %s30, 0
      %p69 = por %p67, %p68
      %s71 = sadd.s32 %s70, 1
      %p74 = scmp.eq.s32.totalorder %s24, 3
      %p75 = scmp.ne.s32.totalorder %s70, %s72
      %p76 = scmp.eq.s32.totalorder %s24, 0
      %p77 = por %p75, %p76
      %p78 = scmp.ne.s32.totalorder %s70, %s72
      %p79 = scmp.eq.s32.totalorder %s29, 3
      %p80 = por %p78, %p79
      %p81 = scmp.ne.s32.totalorder %s72, %s73
      %p82 = scmp.eq.s32.totalorder %s29, 0
      %p83 = por %p81, %p82
      %p84 = scmp.ne.s32.totalorder %s72, %s73
      %p85 = scmp.eq.s32.totalorder %s30, 3
      %p86 = por %p84, %p85
      %p88 = scmp.ne.s32.totalorder %s73, %s87
      %p89 = scmp.eq.s32.totalorder %s30, 0
      %p90 = por %p88, %p89
      %s92 = sadd.s32 %s91, 1
      %p95 = scmp.eq.s32.totalorder %s24, 3
      %p96 = scmp.ne.s32.totalorder %s91, %s93
      %p97 = scmp.eq.s32.totalorder %s24, 0
      %p98 = por %p96, %p97
      %p99 = scmp.ne.s32.totalorder %s91, %s93
      %p100 = scmp.eq.s32.totalorder %s29, 3
      %p101 = por %p99, %p100
      %p102 = scmp.ne.s32.totalorder %s93, %s94
      %p103 = scmp.eq.s32.totalorder %s29, 0
      %p104 = por %p102, %p103
      %p105 = scmp.ne.s32.totalorder %s93, %s94
      %p106 = scmp.eq.s32.totalorder %s30, 3
      %p107 = por %p105, %p106
      %p109 = scmp.ne.s32.totalorder %s94, %s108
      %p110 = scmp.eq.s32.totalorder %s30, 0
      %p111 = por %p109, %p110
      %s113 = sadd.s32 %s112, 1
      %p116 = scmp.eq.s32.totalorder %s24, 3
      %p117 = scmp.ne.s32.totalorder %s112, %s114
      %p118 = scmp.eq.s32.totalorder %s24, 0
      %p119 = por %p117, %p118
      %p120 = scmp.ne.s32.totalorder %s112, %s114
      %p121 = scmp.eq.s32.totalorder %s29, 3
      %p122 = por %p120, %p121
      %p123 = scmp.ne.s32.totalorder %s114, %s115
      %p124 = scmp.eq.s32.totalorder %s29, 0
      %p125 = por %p123, %p124
      %p126 = scmp.ne.s32.totalorder %s114, %s115
      %p127 = scmp.eq.s32.totalorder %s30, 3
      %p128 = por %p126, %p127
      %p130 = scmp.ne.s32.totalorder %s115, %s129
      %p131 = scmp.eq.s32.totalorder %s30, 0
      %p132 = por %p130, %p131
      %s134 = sadd.s32 %s133, 1
      %p137 = scmp.eq.s32.totalorder %s24, 3
      %p138 = scmp.ne.s32.totalorder %s133, %s135
      %p139 = scmp.eq.s32.totalorder %s24, 0
      %p140 = por %p138, %p139
      %p141 = scmp.ne.s32.totalorder %s133, %s135
      %p142 = scmp.eq.s32.totalorder %s29, 3
      %p143 = por %p141, %p142
      %p144 = scmp.ne.s32.totalorder %s135, %s136
      %p145 = scmp.eq.s32.totalorder %s29, 0
      %p146 = por %p144, %p145
      %p147 = scmp.ne.s32.totalorder %s135, %s136
      %p148 = scmp.eq.s32.totalorder %s30, 3
      %p149 = por %p147, %p148
      %p151 = scmp.ne.s32.totalorder %s136, %s150
      %p152 = scmp.eq.s32.totalorder %s30, 0
      %p153 = por %p151, %p152
      %s155 = sadd.s32 %s154, 1
      %p158 = scmp.eq.s32.totalorder %s24, 3
      %p159 = scmp.ne.s32.totalorder %s154, %s156
      %p160 = scmp.eq.s32.totalorder %s24, 0
      %p161 = por %p159, %p160
      %p162 = scmp.ne.s32.totalorder %s154, %s156
      %p163 = scmp.eq.s32.totalorder %s29, 3
      %p164 = por %p162, %p163
      %p165 = scmp.ne.s32.totalorder %s156, %s157
      %p166 = scmp.eq.s32.totalorder %s29, 0
      %p167 = por %p165, %p166
      %p168 = scmp.ne.s32.totalorder %s156, %s157
      %p169 = scmp.eq.s32.totalorder %s30, 3
      %p170 = por %p168, %p169
      %p172 = scmp.ne.s32.totalorder %s157, %s171
      %p173 = scmp.eq.s32.totalorder %s30, 0
      %p174 = por %p172, %p173
      %s176 = sadd.s32 %s175, 1
      %p179 = scmp.eq.s32.totalorder %s24, 3
      %p180 = scmp.ne.s32.totalorder %s175, %s177
      %p181 = scmp.eq.s32.totalorder %s24, 0
      %p182 = por %p180, %p181
      %p183 = scmp.ne.s32.totalorder %s175, %s177
      %p184 = scmp.eq.s32.totalorder %s29, 3
      %p185 = por %p183, %p184
      %p186 = scmp.ne.s32.totalorder %s177, %s178
      %p187 = scmp.eq.s32.totalorder %s29, 0
      %p188 = por %p186, %p187
      %p189 = scmp.ne.s32.totalorder %s177, %s178
      %p190 = scmp.eq.s32.totalorder %s30, 3
      %p191 = por %p189, %p190
      %p193 = scmp.ne.s32.totalorder %s178, %s192
      %p194 = scmp.eq.s32.totalorder %s30, 0
      %p195 = por %p193, %p194
      %s197 = sadd.s32 %s196, 1
      %p200 = scmp.eq.s32.totalorder %s24, 3
      %p201 = scmp.ne.s32.totalorder %s196, %s198
      %p202 = scmp.eq.s32.totalorder %s24, 0
      %p203 = por %p201, %p202
      %p204 = scmp.ne.s32.totalorder %s196, %s198
      %p205 = scmp.eq.s32.totalorder %s29, 3
      %p206 = por %p204, %p205
      %p207 = scmp.ne.s32.totalorder %s198, %s199
      %p208 = scmp.eq.s32.totalorder %s29, 0
      %p209 = por %p207, %p208
      %p210 = scmp.ne.s32.totalorder %s198, %s199
      %p211 = scmp.eq.s32.totalorder %s30, 3
      %p212 = por %p210, %p211
      %p214 = scmp.ne.s32.totalorder %s199, %s213
      %p215 = scmp.eq.s32.totalorder %s30, 0
      %p216 = por %p214, %p215
      %s217 = ssub.s32 %s31, %s43
      %s218 = ssub.s32 %s32, %s39
      %s219 = sor.u32 %s217, %s218
      %p220 = scmp.eq.s32.totalorder %s219, 0
      %s222 = sadd.s32 %s221, 1
      %s223 = scalar_select %p220, %s221, %s222
      %p226 = pneg %p220
      %p227 = scmp.eq.s32.totalorder %s24, 3
      %p228 = por %p226, %p227
      %p229 = scmp.ne.s32.totalorder %s221, %s224
      %p230 = scmp.eq.s32.totalorder %s24, 0
      %p231 = por %p229, %p230
      %p232 = scmp.ne.s32.totalorder %s221, %s224
      %p233 = scmp.eq.s32.totalorder %s29, 3
      %p234 = por %p232, %p233
      %p235 = scmp.ne.s32.totalorder %s224, %s225
      %p236 = scmp.eq.s32.totalorder %s29, 0
      %p237 = por %p235, %p236
      %p238 = scmp.ne.s32.totalorder %s224, %s225
      %p239 = scmp.eq.s32.totalorder %s30, 3
      %p240 = por %p238, %p239
      %p242 = scmp.ne.s32.totalorder %s225, %s241
      %p243 = scmp.eq.s32.totalorder %s30, 0
      %p244 = por %p242, %p243
      %s245 = ssub.s32 %s31, %s43
      %s246 = ssub.s32 %s32, %s39
      %s247 = sor.u32 %s245, %s246
      %p248 = scmp.eq.s32.totalorder %s247, 0
      %s250 = sadd.s32 %s249, 1
      %s251 = scalar_select %p248, %s249, %s250
      %p254 = pneg %p248
      %p255 = scmp.eq.s32.totalorder %s24, 3
      %p256 = por %p254, %p255
      %p257 = scmp.ne.s32.totalorder %s249, %s252
      %p258 = scmp.eq.s32.totalorder %s24, 0
      %p259 = por %p257, %p258
      %p260 = scmp.ne.s32.totalorder %s249, %s252
      %p261 = scmp.eq.s32.totalorder %s29, 3
      %p262 = por %p260, %p261
      %p263 = scmp.ne.s32.totalorder %s252, %s253
      %p264 = scmp.eq.s32.totalorder %s29, 0
      %p265 = por %p263, %p264
      %p266 = scmp.ne.s32.totalorder %s252, %s253
      %p267 = scmp.eq.s32.totalorder %s30, 3
      %p268 = por %p266, %p267
      %p270 = scmp.ne.s32.totalorder %s253, %s269
      %p271 = scmp.eq.s32.totalorder %s30, 0
      %p272 = por %p270, %p271
      %p273 = scmp.le.s32.totalorder 1, %s24
      %p274 = scmp.lt.s32.totalorder %s24, 5
      %p275 = pnand %p273, %p274
      %p276 = pneg %p275
      // Predicated region
      $region9: #{tpu_custom_call.1} parent=5 // pred_check
        _
      $region10: #{tpu_custom_call.1} parent=5 // pred_check_branch
        %278 = sbr.rel (%p275) target = $region12
      $region11: #{tpu_custom_call.1} parent=5 // pred_region
        %s279 = ssub.s32 %s24, 1
        // Predicated region
        $region13: #{tpu_custom_call.1} parent=11 // pred_check
          %p280 = pneg %p83
        $region14: #{tpu_custom_call.1} parent=11 // pred_check_branch
          %282 = sbr.rel (%p280) target = $region16
        $region15: #{tpu_custom_call.1} parent=11 // pred_region
          %s284 = ssub.s32 5120, 5120
          %285 = vsyncadd [#allocation3], %s284
          %s286 = sshll.u32 [#allocation2], 4
          %s287 = int_to_ptr.vmem [resolvable:$true] %s286
          %292 = dma.hbm_to_vmem [thread:$0]  %s1, 5120, %s287, [#allocation3], 64, 64, 4
        $region16: #{tpu_custom_call.1} parent=11 // pred_fallthru
          _
        // Predicated region
        $region17: #{tpu_custom_call.1} parent=11 // pred_check
          %p293 = pneg %p104
        $region18: #{tpu_custom_call.1} parent=11 // pred_check_branch
          %295 = sbr.rel (%p293) target = $region20
        $region19: #{tpu_custom_call.1} parent=11 // pred_region
          _
        $region20: #{tpu_custom_call.1} parent=11 // pred_fallthru
          _
        // Predicated region
        $region21: #{tpu_custom_call.1} parent=11 // pred_check
          %p296 = pneg %p125
        $region22: #{tpu_custom_call.1} parent=11 // pred_check_branch
          %298 = sbr.rel (%p296) target = $region24
        $region23: #{tpu_custom_call.1} parent=11 // pred_region
          %s300 = ssub.s32 5120, 5120
          %301 = vsyncadd [#allocation6], %s300
          %s302 = sshll.u32 [#allocation5], 4
          %s303 = int_to_ptr.vmem [resolvable:$true] %s302
          %308 = dma.hbm_to_vmem [thread:$0]  %s3, 5120, %s303, [#allocation6], 64, 64, 4
        $region24: #{tpu_custom_call.1} parent=11 // pred_fallthru
          _
        // Predicated region
        $region25: #{tpu_custom_call.1} parent=11 // pred_check
          %p309 = pneg %p146
        $region26: #{tpu_custom_call.1} parent=11 // pred_check_branch
          %311 = sbr.rel (%p309) target = $region28
        $region27: #{tpu_custom_call.1} parent=11 // pred_region
          _
        $region28: #{tpu_custom_call.1} parent=11 // pred_fallthru
          _
        // Predicated region
        $region29: #{tpu_custom_call.1} parent=11 // pred_check
          %p312 = pneg %p167
        $region30: #{tpu_custom_call.1} parent=11 // pred_check_branch
          %314 = sbr.rel (%p312) target = $region32
        $region31: #{tpu_custom_call.1} parent=11 // pred_region
          %s316 = ssub.s32 5120, 5120
          %317 = vsyncadd [#allocation6], %s316
          %s318 = sshll.u32 [#allocation7], 4
          %s319 = int_to_ptr.vmem [resolvable:$true] %s318
          %324 = dma.hbm_to_vmem [thread:$0]  %s5, 5120, %s319, [#allocation6], 64, 64, 4
        $region32: #{tpu_custom_call.1} parent=11 // pred_fallthru
          _
        // Predicated region
        $region33: #{tpu_custom_call.1} parent=11 // pred_check
          %p325 = pneg %p188
        $region34: #{tpu_custom_call.1} parent=11 // pred_check_branch
          %327 = sbr.rel (%p325) target = $region36
        $region35: #{tpu_custom_call.1} parent=11 // pred_region
          _
        $region36: #{tpu_custom_call.1} parent=11 // pred_fallthru
          _
        // Predicated region
        $region37: #{tpu_custom_call.1} parent=11 // pred_check
          %p328 = pneg %p209
        $region38: #{tpu_custom_call.1} parent=11 // pred_check_branch
          %330 = sbr.rel (%p328) target = $region40
        $region39: #{tpu_custom_call.1} parent=11 // pred_region
          _
        $region40: #{tpu_custom_call.1} parent=11 // pred_fallthru
          _
      $region12: #{tpu_custom_call.1} parent=5 // pred_fallthru
        _
      %p331 = scmp.lt.s32.totalorder %s24, 4
      // Predicated region
      $region41: #{tpu_custom_call.1} parent=5 // pred_check
        %p332 = pneg %p331
      $region42: #{tpu_custom_call.1} parent=5 // pred_check_branch
        %334 = sbr.rel (%p332) target = $region44
      $region43: #{tpu_custom_call.1} parent=5 // pred_region
        // Predicated region
        $region45: #{tpu_custom_call.1} parent=43 // pred_check
          %p335 = pneg %p56
        $region46: #{tpu_custom_call.1} parent=43 // pred_check_branch
          %337 = sbr.rel (%p335) target = $region48
        $region47: #{tpu_custom_call.1} parent=43 // pred_region
          %p338 = scmp.lt.s32.totalorder %s31, 1
          %s339 = scalar_select %p338, %s31, 1
          %s340 = smul.addr %s339, 6
          %s341 = smul.addr %s340, 4
          %s342 = scalar_lea.vmem %s0, %s341
        $region48: #{tpu_custom_call.1} parent=43 // pred_fallthru
          _
      $region44: #{tpu_custom_call.1} parent=5 // pred_fallthru
        _
      %p343 = scmp.le.s32.totalorder 1, %s24
      %p344 = scmp.lt.s32.totalorder %s24, 5
      %p345 = pnand %p343, %p344
      %p346 = pneg %p345
      // Predicated region
      $region49: #{tpu_custom_call.1} parent=5 // pred_check
        _
      $region50: #{tpu_custom_call.1} parent=5 // pred_check_branch
        %348 = sbr.rel (%p345) target = $region52
      $region51: #{tpu_custom_call.1} parent=5 // pred_region
        %s349 = ssub.s32 %s24, 1
        // Predicated region
        $region53: #{tpu_custom_call.1} parent=51 // pred_check
          %p350 = pneg %p83
        $region54: #{tpu_custom_call.1} parent=51 // pred_check_branch
          %352 = sbr.rel (%p350) target = $region56
        $region55: #{tpu_custom_call.1} parent=51 // pred_region
          %353 = dma.done [#allocation3], 5120
        $region56: #{tpu_custom_call.1} parent=51 // pred_fallthru
          _
        // Predicated region
        $region57: #{tpu_custom_call.1} parent=51 // pred_check
          %p354 = pneg %p125
        $region58: #{tpu_custom_call.1} parent=51 // pred_check_branch
          %356 = sbr.rel (%p354) target = $region60
        $region59: #{tpu_custom_call.1} parent=51 // pred_region
          %357 = dma.done [#allocation6], 5120
        $region60: #{tpu_custom_call.1} parent=51 // pred_fallthru
          _
        // Predicated region
        $region61: #{tpu_custom_call.1} parent=51 // pred_check
          %p358 = pneg %p167
        $region62: #{tpu_custom_call.1} parent=51 // pred_check_branch
          %360 = sbr.rel (%p358) target = $region64
        $region63: #{tpu_custom_call.1} parent=51 // pred_region
          %361 = dma.done [#allocation6], 5120
        $region64: #{tpu_custom_call.1} parent=51 // pred_fallthru
          _
        %p362 = scmp.lt.s32.totalorder %s33, 1
        %s363 = scalar_select %p362, %s33, 1
        %s364 = smul.addr %s363, 6
        %s365 = smul.addr %s364, 4
        %s366 = scalar_lea.vmem %s0, %s365
        %p367 = pneg %p62
        %p368 = pneg %p59
        %p369 = pneg %p83
        %p370 = pneg %p80
        %p371 = pneg %p104
        %p372 = pneg %p101
        %p373 = pneg %p125
        %p374 = pneg %p122
        %p375 = pneg %p146
        %p376 = pneg %p143
        %p377 = pneg %p167
        %p378 = pneg %p164
        %p379 = pneg %p188
        %p380 = pneg %p185
        %p381 = pneg %p209
        %p382 = pneg %p206
        %p383 = pneg %p237
        %p384 = pneg %p234
        %s385 = sand.u32 %s224, 1
        %s386 = scalar_lea.sflag [#allocation4], %s385
        %s387 = sand.u32 %s224, 1
        %s388 = smul.addr %s387, 8
        %s389 = scalar_lea.vmem [#allocation8], %s388
        %p390 = pneg %p265
        %p391 = pneg %p262
        %s392 = sand.u32 %s252, 1
        %s393 = scalar_lea.sflag [#allocation10], %s392
        %s394 = sand.u32 %s252, 1
        %s395 = smul.addr %s394, 16
        %s396 = scalar_lea.vmem [#allocation9], %s395
        %p397 = scmp.lt.s32.totalorder %s33, 1
        %s398 = scalar_select %p397, %s33, 1
        %s399 = smul.addr %s398, 6
        %s400 = smul.addr %s399, 4
        %s401 = scalar_lea.vmem %s0, %s400
        %s402 = smul.u32 2, %s34
        %s403 = smul.u32 2, %s34
        %s405 = smul.u32 %s34, 16
        %s406 = sshra.s32 %s405, 3
        %s407 = sand.u32 %s405, 7
        %s408 = smul.addr %s406, 4
        %s409 = scalar_lea.vmem %s401, %s408
        %v410 = vld [vmem:[%s409] sm:$0xf]
        %v411 = vld [vmem:[%s409 + $0x4] sm:$0xf]
        %v412 = vld [vmem:[%s409 + $0x8] sm:$0xf]
        %v413 = vld [vmem:[%s409 + $0xc] sm:$0x3]
        %v414 = vlaneseq
        %v415 = vshrl.u32 %v414, 7
        %v416 = vadd.s32 %v415, 8
        %v417 = vadd.s32 %v415, 16
        %v418 = vadd.s32 %v415, 24
        %s419 = ssub.s32 %s405, 6
        %v420 = vstv %s419
        %v421 = vadd.s32 %v420, %v415
        %v422 = vadd.s32 %v420, %v416
        %v423 = vadd.s32 %v420, %v417
        %v424 = vadd.s32 %v420, %v418
        %v425 = vld [vmem:[%s2] sm:$0x1]
        %v426 = vld [vmem:[#allocation2] sm:$0xf]
        %v427 = vld [vmem:[#allocation2 + $0x4] sm:$0xf]
        %v428 = vld [vmem:[#allocation2 + $0x8] sm:$0xf]
        %v429 = vld [vmem:[#allocation2 + $0xc] sm:$0xf]
        %v430 = vld [vmem:[#allocation2 + $0x10] sm:$0xf]
        %v431 = vld [vmem:[#allocation2 + $0x14] sm:$0xf]
        %v432 = vld [vmem:[#allocation2 + $0x18] sm:$0xf]
        %v433 = vld [vmem:[#allocation2 + $0x1c] sm:$0xf]
        %v434 = vld [vmem:[#allocation2 + $0x20] sm:$0xf]
        %v435 = vld [vmem:[#allocation2 + $0x24] sm:$0xf]
        %v436 = vld [vmem:[#allocation2 + $0x28] sm:$0xf]
        %v437 = vld [vmem:[#allocation2 + $0x2c] sm:$0xf]
        %v438 = vld [vmem:[#allocation2 + $0x30] sm:$0xf]
        %v439 = vld [vmem:[#allocation2 + $0x34] sm:$0xf]
        %v440 = vld [vmem:[#allocation2 + $0x38] sm:$0xf]
        %v441 = vld [vmem:[#allocation2 + $0x3c] sm:$0xf]
        %s442 = scalar_lea.vmem [#allocation2], 64
        %v443 = vld [vmem:[%s442] sm:$0xf]
        %v444 = vld [vmem:[%s442 + $0x4] sm:$0xf]
        %v445 = vld [vmem:[%s442 + $0x8] sm:$0xf]
        %v446 = vld [vmem:[%s442 + $0xc] sm:$0xf]
        %v447 = vld [vmem:[%s442 + $0x10] sm:$0xf]
        %v448 = vld [vmem:[%s442 + $0x14] sm:$0xf]
        %v449 = vld [vmem:[%s442 + $0x18] sm:$0xf]
        %v450 = vld [vmem:[%s442 + $0x1c] sm:$0xf]
        %v451 = vld [vmem:[%s442 + $0x20] sm:$0xf]
        %v452 = vld [vmem:[%s442 + $0x24] sm:$0xf]
        %v453 = vld [vmem:[%s442 + $0x28] sm:$0xf]
        %v454 = vld [vmem:[%s442 + $0x2c] sm:$0xf]
        %v455 = vld [vmem:[%s442 + $0x30] sm:$0xf]
        %v456 = vld [vmem:[%s442 + $0x34] sm:$0xf]
        %v457 = vld [vmem:[%s442 + $0x38] sm:$0xf]
        %v458 = vld [vmem:[%s442 + $0x3c] sm:$0xf]
        %v463 = vunpack.c.l.b16 %v410
        %v464 = vunpack.c.l.b16 %v411
        %v465 = vunpack.c.l.b16 %v412
        %v466 = vunpack.c.l.b16 %v413
        %v467 = vpack.c.b16 %v464, %v463
        %v468 = vpack.c.b16 %v466, %v465
        %vm469 = vsmask.f32 7424
        %v471 = vshrl.u32 %v467, 16
        %v473 = vshll.u32 %v467, 16
        %v475 = vrot.slane %v473, 1
        %v476 = vor.u32 %v471, %v475
        %v478 = vshll.u32 %v468, 16
        %v480 = vrot.slane %v478, 1
        %v481 = vsel %vm469, %v476, %v480
        %v482 = vshrl.u32 %v468, 16
        %v484 = vor.u32 %v482, %v480
        %v503 = vunpack.c.l.b16 %v443
        %v504 = vunpack.c.l.b16 %v444
        %v505 = vunpack.c.l.b16 %v445
        %v506 = vunpack.c.l.b16 %v446
        %v507 = vunpack.c.l.b16 %v447
        %v508 = vunpack.c.l.b16 %v448
        %v509 = vunpack.c.l.b16 %v449
        %v510 = vunpack.c.l.b16 %v450
        %v511 = vunpack.c.l.b16 %v451
        %v512 = vunpack.c.l.b16 %v452
        %v513 = vunpack.c.l.b16 %v453
        %v514 = vunpack.c.l.b16 %v454
        %v515 = vunpack.c.l.b16 %v455
        %v516 = vunpack.c.l.b16 %v456
        %v517 = vunpack.c.l.b16 %v457
        %v518 = vunpack.c.l.b16 %v458
        %v519 = vpack.c.b16 %v504, %v503
        %v520 = vpack.c.b16 %v506, %v505
        %v521 = vpack.c.b16 %v508, %v507
        %v522 = vpack.c.b16 %v510, %v509
        %v523 = vpack.c.b16 %v512, %v511
        %v524 = vpack.c.b16 %v514, %v513
        %v525 = vpack.c.b16 %v516, %v515
        %v526 = vpack.c.b16 %v518, %v517
        %535 = vmatprep.subr.bf16.mxu0 0
        %536 = vmatpush1.bf16.msra.mxu0 %v519
        %537 = vmatprep.subr.bf16.mxu0 0
        %538 = vmatpush1.bf16.msra.mxu0 %v520
        %539 = vmatprep.subr.bf16.mxu0 0
        %540 = vmatpush1.bf16.msra.mxu0 %v521
        %541 = vmatprep.subr.bf16.mxu0 0
        %542 = vmatpush1.bf16.msra.mxu0 %v522
        %543 = vmatprep.subr.bf16.mxu0 0
        %544 = vmatpush1.bf16.msra.mxu0 %v523
        %545 = vmatprep.subr.bf16.mxu0 0
        %546 = vmatpush1.bf16.msra.mxu0 %v524
        %547 = vmatprep.subr.bf16.mxu0 0
        %548 = vmatpush1.bf16.msra.mxu0 %v525
        %549 = vmatprep.subr.bf16.mxu0 0
        %550 = vmatpush1.bf16.msra.mxu0 %v526
        %551 = vmatprep.subr.bf16.mxu0 0
        %552 = vmatpush1.bf16.msra.mxu0 0
        %553 = vmatprep.subr.bf16.mxu0 0
        %554 = vmatpush1.bf16.msra.mxu0 0
        %555 = vmatprep.subr.bf16.mxu0 0
        %556 = vmatpush1.bf16.msra.mxu0 0
        %557 = vmatprep.subr.bf16.mxu0 0
        %558 = vmatpush1.bf16.msra.mxu0 0
        %559 = vmatprep.subr.bf16.mxu0 0
        %560 = vmatpush1.bf16.msra.mxu0 0
        %561 = vmatprep.subr.bf16.mxu0 0
        %562 = vmatpush1.bf16.msra.mxu0 0
        %563 = vmatprep.subr.bf16.mxu0 0
        %564 = vmatpush1.bf16.msra.mxu0 0
        %565 = vmatprep.subr.bf16.mxu0 0
        %566 = vmatpush1.bf16.msra.mxu0 0
        %567 = vmatprep.mubr.bf16.mxu0 0
        %568 = vmatmul.mubr.bf16.gmra.mrb[0].mxu0 %v481
        %v569 = vpop.f32.mrb[0].mxu0
        %v570 = vadd.f32 0.0, %v569
        %v571 = vpop.f32.mrb[0].mxu0
        %v572 = vpop.f32.mrb[0].mxu0
        %v573 = vadd.f32 0.0, %v572
        %v574 = vpop.f32.mrb[0].mxu0
        %575 = vmatprep.mubr.bf16.mxu0 0
        %576 = vmatmul.mubr.bf16.gmra.mrb[0].mxu0 %v484
        %v577 = vpop.f32.mrb[0].mxu0
        %v578 = vadd.f32 0.0, %v577
        %v579 = vpop.f32.mrb[0].mxu0
        %v580 = vpop.f32.mrb[0].mxu0
        %v581 = vpop.f32.mrb[0].mxu0
        %582 = vdwg.mxu0
        %v583 = vpack.c.b16 %v465, %v465
        %v602 = vunpack.c.l.b16 %v426
        %v603 = vunpack.c.l.b16 %v427
        %v604 = vunpack.c.l.b16 %v428
        %v605 = vunpack.c.l.b16 %v429
        %v606 = vunpack.c.l.b16 %v430
        %v607 = vunpack.c.l.b16 %v431
        %v608 = vunpack.c.l.b16 %v432
        %v609 = vunpack.c.l.b16 %v433
        %v610 = vunpack.c.l.b16 %v434
        %v611 = vunpack.c.l.b16 %v435
        %v612 = vunpack.c.l.b16 %v436
        %v613 = vunpack.c.l.b16 %v437
        %v614 = vunpack.c.l.b16 %v438
        %v615 = vunpack.c.l.b16 %v439
        %v616 = vunpack.c.l.b16 %v440
        %v617 = vunpack.c.l.b16 %v441
        %v618 = vpack.c.b16 %v603, %v602
        %v619 = vpack.c.b16 %v605, %v604
        %v620 = vpack.c.b16 %v607, %v606
        %v621 = vpack.c.b16 %v609, %v608
        %v622 = vpack.c.b16 %v611, %v610
        %v623 = vpack.c.b16 %v613, %v612
        %v624 = vpack.c.b16 %v615, %v614
        %v625 = vpack.c.b16 %v617, %v616
        %634 = vmatprep.subr.bf16.mxu0 0
        %635 = vmatpush1.bf16.msra.mxu0 %v618
        %636 = vmatprep.subr.bf16.mxu0 0
        %637 = vmatpush1.bf16.msra.mxu0 %v619
        %638 = vmatprep.subr.bf16.mxu0 0
        %639 = vmatpush1.bf16.msra.mxu0 %v620
        %640 = vmatprep.subr.bf16.mxu0 0
        %641 = vmatpush1.bf16.msra.mxu0 %v621
        %642 = vmatprep.subr.bf16.mxu0 0
        %643 = vmatpush1.bf16.msra.mxu0 %v622
        %644 = vmatprep.subr.bf16.mxu0 0
        %645 = vmatpush1.bf16.msra.mxu0 %v623
        %646 = vmatprep.subr.bf16.mxu0 0
        %647 = vmatpush1.bf16.msra.mxu0 %v624
        %648 = vmatprep.subr.bf16.mxu0 0
        %649 = vmatpush1.bf16.msra.mxu0 %v625
        %650 = vmatprep.subr.bf16.mxu0 0
        %651 = vmatpush1.bf16.msra.mxu0 0
        %652 = vmatprep.subr.bf16.mxu0 0
        %653 = vmatpush1.bf16.msra.mxu0 0
        %654 = vmatprep.subr.bf16.mxu0 0
        %655 = vmatpush1.bf16.msra.mxu0 0
        %656 = vmatprep.subr.bf16.mxu0 0
        %657 = vmatpush1.bf16.msra.mxu0 0
        %658 = vmatprep.subr.bf16.mxu0 0
        %659 = vmatpush1.bf16.msra.mxu0 0
        %660 = vmatprep.subr.bf16.mxu0 0
        %661 = vmatpush1.bf16.msra.mxu0 0
        %662 = vmatprep.subr.bf16.mxu0 0
        %663 = vmatpush1.bf16.msra.mxu0 0
        %664 = vmatprep.subr.bf16.mxu0 0
        %665 = vmatpush1.bf16.msra.mxu0 0
        %666 = vmatprep.mubr.bf16.mxu0 0
        %667 = vmatmul.mubr.bf16.gmra.mrb[0].mxu0 %v467
        %v668 = vpop.f32.mrb[0].mxu0
        %v669 = vadd.f32 %v570, %v668
        %v670 = vpop.f32.mrb[0].mxu0
        %v671 = vpop.f32.mrb[0].mxu0
        %v672 = vadd.f32 %v573, %v671
        %v673 = vpop.f32.mrb[0].mxu0
        %674 = vmatprep.mubr.bf16.mxu0 0
        %675 = vmatmul.mubr.bf16.gmra.mrb[0].mxu0 %v583
        %v676 = vpop.f32.mrb[0].mxu0
        %v677 = vadd.f32 %v578, %v676
        %v678 = vpop.f32.mrb[0].mxu0
        %v679 = vpop.f32.mrb[0].mxu0
        %v680 = vpop.f32.mrb[0].mxu0
        %681 = vdwg.mxu0
        %s682 = scalar_lea.vmem [#allocation2], 128
        %v683 = vld [vmem:[%s682] sm:$0xf]
        %v684 = vld [vmem:[%s682 + $0x4] sm:$0xf]
        %v685 = vld [vmem:[%s682 + $0x8] sm:$0xf]
        %v686 = vld [vmem:[%s682 + $0xc] sm:$0xf]
        %v687 = vld [vmem:[%s682 + $0x10] sm:$0xf]
        %v688 = vld [vmem:[%s682 + $0x14] sm:$0xf]
        %v689 = vld [vmem:[%s682 + $0x18] sm:$0xf]
        %v690 = vld [vmem:[%s682 + $0x1c] sm:$0xf]
        %v691 = vld [vmem:[%s682 + $0x20] sm:$0xf]
        %v692 = vld [vmem:[%s682 + $0x24] sm:$0xf]
        %v693 = vld [vmem:[%s682 + $0x28] sm:$0xf]
        %v694 = vld [vmem:[%s682 + $0x2c] sm:$0xf]
        %v695 = vld [vmem:[%s682 + $0x30] sm:$0xf]
        %v696 = vld [vmem:[%s682 + $0x34] sm:$0xf]
        %v697 = vld [vmem:[%s682 + $0x38] sm:$0xf]
        %v698 = vld [vmem:[%s682 + $0x3c] sm:$0xf]
        %vm699 = vcmask 1046528
        %v700 = vrot.slane %v467, 1
        %v701 = vrot.slane %v468, 1
        %v702 = vsel %vm699, %v700, %v701
        %v721 = vunpack.c.l.b16 %v683
        %v722 = vunpack.c.l.b16 %v684
        %v723 = vunpack.c.l.b16 %v685
        %v724 = vunpack.c.l.b16 %v686
        %v725 = vunpack.c.l.b16 %v687
        %v726 = vunpack.c.l.b16 %v688
        %v727 = vunpack.c.l.b16 %v689
        %v728 = vunpack.c.l.b16 %v690
        %v729 = vunpack.c.l.b16 %v691
        %v730 = vunpack.c.l.b16 %v692
        %v731 = vunpack.c.l.b16 %v693
        %v732 = vunpack.c.l.b16 %v694
        %v733 = vunpack.c.l.b16 %v695
        %v734 = vunpack.c.l.b16 %v696
        %v735 = vunpack.c.l.b16 %v697
        %v736 = vunpack.c.l.b16 %v698
        %v737 = vpack.c.b16 %v722, %v721
        %v738 = vpack.c.b16 %v724, %v723
        %v739 = vpack.c.b16 %v726, %v725
        %v740 = vpack.c.b16 %v728, %v727
        %v741 = vpack.c.b16 %v730, %v729
        %v742 = vpack.c.b16 %v732, %v731
        %v743 = vpack.c.b16 %v734, %v733
        %v744 = vpack.c.b16 %v736, %v735
        %753 = vmatprep.subr.bf16.mxu0 0
        %754 = vmatpush1.bf16.msra.mxu0 %v737
        %755 = vmatprep.subr.bf16.mxu0 0
        %756 = vmatpush1.bf16.msra.mxu0 %v738
        %757 = vmatprep.subr.bf16.mxu0 0
        %758 = vmatpush1.bf16.msra.mxu0 %v739
        %759 = vmatprep.subr.bf16.mxu0 0
        %760 = vmatpush1.bf16.msra.mxu0 %v740
        %761 = vmatprep.subr.bf16.mxu0 0
        %762 = vmatpush1.bf16.msra.mxu0 %v741
        %763 = vmatprep.subr.bf16.mxu0 0
        %764 = vmatpush1.bf16.msra.mxu0 %v742
        %765 = vmatprep.subr.bf16.mxu0 0
        %766 = vmatpush1.bf16.msra.mxu0 %v743
        %767 = vmatprep.subr.bf16.mxu0 0
        %768 = vmatpush1.bf16.msra.mxu0 %v744
        %769 = vmatprep.subr.bf16.mxu0 0
        %770 = vmatpush1.bf16.msra.mxu0 0
        %771 = vmatprep.subr.bf16.mxu0 0
        %772 = vmatpush1.bf16.msra.mxu0 0
        %773 = vmatprep.subr.bf16.mxu0 0
        %774 = vmatpush1.bf16.msra.mxu0 0
        %775 = vmatprep.subr.bf16.mxu0 0
        %776 = vmatpush1.bf16.msra.mxu0 0
        %777 = vmatprep.subr.bf16.mxu0 0
        %778 = vmatpush1.bf16.msra.mxu0 0
        %779 = vmatprep.subr.bf16.mxu0 0
        %780 = vmatpush1.bf16.msra.mxu0 0
        %781 = vmatprep.subr.bf16.mxu0 0
        %782 = vmatpush1.bf16.msra.mxu0 0
        %783 = vmatprep.subr.bf16.mxu0 0
        %784 = vmatpush1.bf16.msra.mxu0 0
        %785 = vmatprep.mubr.bf16.mxu0 0
        %786 = vmatmul.mubr.bf16.gmra.mrb[0].mxu0 %v702
        %v787 = vpop.f32.mrb[0].mxu0
        %v788 = vadd.f32 0.0, %v787
        %v789 = vpop.f32.mrb[0].mxu0
        %v790 = vpop.f32.mrb[0].mxu0
        %v791 = vadd.f32 0.0, %v790
        %v792 = vpop.f32.mrb[0].mxu0
        %793 = vmatprep.mubr.bf16.mxu0 0
        %794 = vmatmul.mubr.bf16.gmra.mrb[0].mxu0 %v701
        %v795 = vpop.f32.mrb[0].mxu0
        %v796 = vadd.f32 0.0, %v795
        %v797 = vpop.f32.mrb[0].mxu0
        %v798 = vpop.f32.mrb[0].mxu0
        %v799 = vpop.f32.mrb[0].mxu0
        %800 = vdwg.mxu0
        %v801 = vadd.f32 %v669, %v788
        %v802 = vadd.f32 %v672, %v791
        %v803 = vadd.f32 %v677, %v796
        %s804 = scalar_lea.vmem [#allocation2], 192
        %v805 = vld [vmem:[%s804] sm:$0xf]
        %v806 = vld [vmem:[%s804 + $0x4] sm:$0xf]
        %v807 = vld [vmem:[%s804 + $0x8] sm:$0xf]
        %v808 = vld [vmem:[%s804 + $0xc] sm:$0xf]
        %v809 = vld [vmem:[%s804 + $0x10] sm:$0xf]
        %v810 = vld [vmem:[%s804 + $0x14] sm:$0xf]
        %v811 = vld [vmem:[%s804 + $0x18] sm:$0xf]
        %v812 = vld [vmem:[%s804 + $0x1c] sm:$0xf]
        %v813 = vld [vmem:[%s804 + $0x20] sm:$0xf]
        %v814 = vld [vmem:[%s804 + $0x24] sm:$0xf]
        %v815 = vld [vmem:[%s804 + $0x28] sm:$0xf]
        %v816 = vld [vmem:[%s804 + $0x2c] sm:$0xf]
        %v817 = vld [vmem:[%s804 + $0x30] sm:$0xf]
        %v818 = vld [vmem:[%s804 + $0x34] sm:$0xf]
        %v819 = vld [vmem:[%s804 + $0x38] sm:$0xf]
        %v820 = vld [vmem:[%s804 + $0x3c] sm:$0xf]
        %vm821 = vsmask.f32 6400
        %v822 = vrot.slane %v471, 1
        %v823 = vrot.slane %v473, 2
        %v824 = vor.u32 %v822, %v823
        %v825 = vrot.slane %v482, 1
        %v826 = vrot.slane %v478, 2
        %v827 = vor.u32 %v825, %v826
        %v828 = vsel %vm821, %v824, %v827
        %v847 = vunpack.c.l.b16 %v805
        %v848 = vunpack.c.l.b16 %v806
        %v849 = vunpack.c.l.b16 %v807
        %v850 = vunpack.c.l.b16 %v808
        %v851 = vunpack.c.l.b16 %v809
        %v852 = vunpack.c.l.b16 %v810
        %v853 = vunpack.c.l.b16 %v811
        %v854 = vunpack.c.l.b16 %v812
        %v855 = vunpack.c.l.b16 %v813
        %v856 = vunpack.c.l.b16 %v814
        %v857 = vunpack.c.l.b16 %v815
        %v858 = vunpack.c.l.b16 %v816
        %v859 = vunpack.c.l.b16 %v817
        %v860 = vunpack.c.l.b16 %v818
        %v861 = vunpack.c.l.b16 %v819
        %v862 = vunpack.c.l.b16 %v820
        %v863 = vpack.c.b16 %v848, %v847
        %v864 = vpack.c.b16 %v850, %v849
        %v865 = vpack.c.b16 %v852, %v851
        %v866 = vpack.c.b16 %v854, %v853
        %v867 = vpack.c.b16 %v856, %v855
        %v868 = vpack.c.b16 %v858, %v857
        %v869 = vpack.c.b16 %v860, %v859
        %v870 = vpack.c.b16 %v862, %v861
        %879 = vmatprep.subr.bf16.mxu0 0
        %880 = vmatpush1.bf16.msra.mxu0 %v863
        %881 = vmatprep.subr.bf16.mxu0 0
        %882 = vmatpush1.bf16.msra.mxu0 %v864
        %883 = vmatprep.subr.bf16.mxu0 0
        %884 = vmatpush1.bf16.msra.mxu0 %v865
        %885 = vmatprep.subr.bf16.mxu0 0
        %886 = vmatpush1.bf16.msra.mxu0 %v866
        %887 = vmatprep.subr.bf16.mxu0 0
        %888 = vmatpush1.bf16.msra.mxu0 %v867
        %889 = vmatprep.subr.bf16.mxu0 0
        %890 = vmatpush1.bf16.msra.mxu0 %v868
        %891 = vmatprep.subr.bf16.mxu0 0
        %892 = vmatpush1.bf16.msra.mxu0 %v869
        %893 = vmatprep.subr.bf16.mxu0 0
        %894 = vmatpush1.bf16.msra.mxu0 %v870
        %895 = vmatprep.subr.bf16.mxu0 0
        %896 = vmatpush1.bf16.msra.mxu0 0
        %897 = vmatprep.subr.bf16.mxu0 0
        %898 = vmatpush1.bf16.msra.mxu0 0
        %899 = vmatprep.subr.bf16.mxu0 0
        %900 = vmatpush1.bf16.msra.mxu0 0
        %901 = vmatprep.subr.bf16.mxu0 0
        %902 = vmatpush1.bf16.msra.mxu0 0
        %903 = vmatprep.subr.bf16.mxu0 0
        %904 = vmatpush1.bf16.msra.mxu0 0
        %905 = vmatprep.subr.bf16.mxu0 0
        %906 = vmatpush1.bf16.msra.mxu0 0
        %907 = vmatprep.subr.bf16.mxu0 0
        %908 = vmatpush1.bf16.msra.mxu0 0
        %909 = vmatprep.subr.bf16.mxu0 0
        %910 = vmatpush1.bf16.msra.mxu0 0
        %911 = vmatprep.mubr.bf16.mxu0 0
        %912 = vmatmul.mubr.bf16.gmra.mrb[0].mxu0 %v828
        %v913 = vpop.f32.mrb[0].mxu0
        %v914 = vadd.f32 0.0, %v913
        %v915 = vpop.f32.mrb[0].mxu0
        %v916 = vpop.f32.mrb[0].mxu0
        %v917 = vadd.f32 0.0, %v916
        %v918 = vpop.f32.mrb[0].mxu0
        %919 = vmatprep.mubr.bf16.mxu0 0
        %920 = vmatmul.mubr.bf16.gmra.mrb[0].mxu0 %v827
        %v921 = vpop.f32.mrb[0].mxu0
        %v922 = vadd.f32 0.0, %v921
        %v923 = vpop.f32.mrb[0].mxu0
        %v924 = vpop.f32.mrb[0].mxu0
        %v925 = vpop.f32.mrb[0].mxu0
        %926 = vdwg.mxu0
        %v927 = vadd.f32 %v801, %v914
        %v928 = vadd.f32 %v802, %v917
        %v929 = vadd.f32 %v803, %v922
        %s930 = scalar_lea.vmem [#allocation2], 256
        %v931 = vld [vmem:[%s930] sm:$0xf]
        %v932 = vld [vmem:[%s930 + $0x4] sm:$0xf]
        %v933 = vld [vmem:[%s930 + $0x8] sm:$0xf]
        %v934 = vld [vmem:[%s930 + $0xc] sm:$0xf]
        %v935 = vld [vmem:[%s930 + $0x10] sm:$0xf]
        %v936 = vld [vmem:[%s930 + $0x14] sm:$0xf]
        %v937 = vld [vmem:[%s930 + $0x18] sm:$0xf]
        %v938 = vld [vmem:[%s930 + $0x1c] sm:$0xf]
        %v939 = vld [vmem:[%s930 + $0x20] sm:$0xf]
        %v940 = vld [vmem:[%s930 + $0x24] sm:$0xf]
        %v941 = vld [vmem:[%s930 + $0x28] sm:$0xf]
        %v942 = vld [vmem:[%s930 + $0x2c] sm:$0xf]
        %v943 = vld [vmem:[%s930 + $0x30] sm:$0xf]
        %v944 = vld [vmem:[%s930 + $0x34] sm:$0xf]
        %v945 = vld [vmem:[%s930 + $0x38] sm:$0xf]
        %v946 = vld [vmem:[%s930 + $0x3c] sm:$0xf]
        %vm947 = vcmask 1045504
        %v948 = vrot.slane %v467, 2
        %v949 = vrot.slane %v468, 2
        %v950 = vsel %vm947, %v948, %v949
        %v969 = vunpack.c.l.b16 %v931
        %v970 = vunpack.c.l.b16 %v932
        %v971 = vunpack.c.l.b16 %v933
        %v972 = vunpack.c.l.b16 %v934
        %v973 = vunpack.c.l.b16 %v935
        %v974 = vunpack.c.l.b16 %v936
        %v975 = vunpack.c.l.b16 %v937
        %v976 = vunpack.c.l.b16 %v938
        %v977 = vunpack.c.l.b16 %v939
        %v978 = vunpack.c.l.b16 %v940
        %v979 = vunpack.c.l.b16 %v941
        %v980 = vunpack.c.l.b16 %v942
        %v981 = vunpack.c.l.b16 %v943
        %v982 = vunpack.c.l.b16 %v944
        %v983 = vunpack.c.l.b16 %v945
        %v984 = vunpack.c.l.b16 %v946
        %v985 = vpack.c.b16 %v970, %v969
        %v986 = vpack.c.b16 %v972, %v971
        %v987 = vpack.c.b16 %v974, %v973
        %v988 = vpack.c.b16 %v976, %v975
        %v989 = vpack.c.b16 %v978, %v977
        %v990 = vpack.c.b16 %v980, %v979
        %v991 = vpack.c.b16 %v982, %v981
        %v992 = vpack.c.b16 %v984, %v983
        %1001 = vmatprep.subr.bf16.mxu0 0
        %1002 = vmatpush1.bf16.msra.mxu0 %v985
        %1003 = vmatprep.subr.bf16.mxu0 0
        %1004 = vmatpush1.bf16.msra.mxu0 %v986
        %1005 = vmatprep.subr.bf16.mxu0 0
        %1006 = vmatpush1.bf16.msra.mxu0 %v987
        %1007 = vmatprep.subr.bf16.mxu0 0
        %1008 = vmatpush1.bf16.msra.mxu0 %v988
        %1009 = vmatprep.subr.bf16.mxu0 0
        %1010 = vmatpush1.bf16.msra.mxu0 %v989
        %1011 = vmatprep.subr.bf16.mxu0 0
        %1012 = vmatpush1.bf16.msra.mxu0 %v990
        %1013 = vmatprep.subr.bf16.mxu0 0
        %1014 = vmatpush1.bf16.msra.mxu0 %v991
        %1015 = vmatprep.subr.bf16.mxu0 0
        %1016 = vmatpush1.bf16.msra.mxu0 %v992
        %1017 = vmatprep.subr.bf16.mxu0 0
        %1018 = vmatpush1.bf16.msra.mxu0 0
        %1019 = vmatprep.subr.bf16.mxu0 0
        %1020 = vmatpush1.bf16.msra.mxu0 0
        %1021 = vmatprep.subr.bf16.mxu0 0
        %1022 = vmatpush1.bf16.msra.mxu0 0
        %1023 = vmatprep.subr.bf16.mxu0 0
        %1024 = vmatpush1.bf16.msra.mxu0 0
        %1025 = vmatprep.subr.bf16.mxu0 0
        %1026 = vmatpush1.bf16.msra.mxu0 0
        %1027 = vmatprep.subr.bf16.mxu0 0
        %1028 = vmatpush1.bf16.msra.mxu0 0
        %1029 = vmatprep.subr.bf16.mxu0 0
        %1030 = vmatpush1.bf16.msra.mxu0 0
        %1031 = vmatprep.subr.bf16.mxu0 0
        %1032 = vmatpush1.bf16.msra.mxu0 0
        %1033 = vmatprep.mubr.bf16.mxu0 0
        %1034 = vmatmul.mubr.bf16.gmra.mrb[0].mxu0 %v950
        %v1035 = vpop.f32.mrb[0].mxu0
        %v1036 = vadd.f32 0.0, %v1035
        %v1037 = vpop.f32.mrb[0].mxu0
        %v1038 = vpop.f32.mrb[0].mxu0
        %v1039 = vadd.f32 0.0, %v1038
        %v1040 = vpop.f32.mrb[0].mxu0
        %1041 = vmatprep.mubr.bf16.mxu0 0
        %1042 = vmatmul.mubr.bf16.gmra.mrb[0].mxu0 %v949
        %v1043 = vpop.f32.mrb[0].mxu0
        %v1044 = vadd.f32 0.0, %v1043
        %v1045 = vpop.f32.mrb[0].mxu0
        %v1046 = vpop.f32.mrb[0].mxu0
        %v1047 = vpop.f32.mrb[0].mxu0
        %1048 = vdwg.mxu0
        %v1049 = vadd.f32 %v927, %v1036
        %v1050 = vadd.f32 %v928, %v1039
        %v1051 = vadd.f32 %v929, %v1044
        %v1053 = vlaneseq
        %v1054 = vshrl.u32 %v1053, 7
        %v1055 = vsub.s32 0, %v1054
        %v1056 = vrot.slane %v425, %v1055
        %v1058 = vadd.f32 %v1049, %v1056
        %v1059 = vadd.f32 %v1050, %v1056
        %v1060 = vadd.f32 %v1051, %v1056
        %v1061 = vxor.u32 %v1058, 2147483648
        %v1062 = vxor.u32 %v1059, 2147483648
        %v1063 = vxor.u32 %v1060, 2147483648
        %v1064 = vmul.f32 %v1061, 1.442695
        %v1065 = vpow.pop %v1064
        %v1066 = vmul.f32 %v1062, 1.442695
        %v1067 = vpow.pop %v1066
        %v1068 = vmul.f32 %v1063, 1.442695
        %v1069 = vpow.pop %v1068
        %v1070 = vadd.f32 %v1065, 1.0
        %v1071 = vadd.f32 %v1067, 1.0
        %v1072 = vadd.f32 %v1069, 1.0
        %v1073 = vrcp.pop %v1070
        %v1074 = vmul.f32 1.0, %v1073
        %v1075 = vrcp.pop %v1071
        %v1076 = vmul.f32 1.0, %v1075
        %v1077 = vrcp.pop %v1072
        %v1078 = vmul.f32 1.0, %v1077
        %v1079 = vmul.f32 %v1058, %v1074
        %v1080 = vmul.f32 %v1059, %v1076
        %v1081 = vmul.f32 %v1060, %v1078
        %vm1082 = vcmp.ge.s32.totalorder %v421, 0
        %vm1083 = vcmp.ge.s32.totalorder %v422, 0
        %vm1084 = vcmp.ge.s32.totalorder %v423, 0
        %vm1085 = vcmp.ge.s32.totalorder %v424, 0
        %vm1086 = vcmp.lt.s32.totalorder %v421, 32
        %vm1087 = vcmp.lt.s32.totalorder %v422, 32
        %vm1088 = vcmp.lt.s32.totalorder %v423, 32
        %vm1089 = vcmp.lt.s32.totalorder %v424, 32
        %vm1090 = vmand %vm1082, %vm1086
        %vm1091 = vmand %vm1083, %vm1087
        %vm1092 = vmand %vm1084, %vm1088
        %vm1093 = vmand %vm1085, %vm1089
        %v1094 = vsel %vm1090, 1, 0
        %v1095 = vsel %vm1091, 1, 0
        %v1096 = vsel %vm1092, 1, 0
        %v1097 = vsel %vm1093, 1, 0
        %vm1098 = vcmp.eq.s32.totalorder %v1094, 1
        %vm1099 = vcmp.eq.s32.totalorder %v1095, 1
        %vm1100 = vcmp.eq.s32.totalorder %v1096, 1
        %vm1101 = vcmp.eq.s32.totalorder %v1097, 1
        %vm1105 = vcmask 1041408
        %v1106 = vrot.slane %v1079, 6
        %v1107 = vrot.slane %v1080, 6
        %v1108 = vsel %vm1105, %v1106, %v1107
        %v1109 = vrot.slane %v1081, 6
        %v1110 = vsel %vm1105, %v1107, %v1109
        %v1115 = vsel %vm1098, %v1106, 0.0
        %v1116 = vsel %vm1099, %v1108, 0.0
        %v1117 = vsel %vm1100, %v1110, 0.0
        %v1118 = vsel %vm1101, %v1109, 0.0
        %v1119 = vpack.c.bf16 %v1116, %v1115
        %v1120 = vpack.c.bf16 %v1118, %v1117
        %v1121 = vld [vmem:[%s4] sm:$0x1]
        %v1122 = vld [vmem:[#allocation5] sm:$0xf]
        %v1123 = vld [vmem:[#allocation5 + $0x4] sm:$0xf]
        %v1124 = vld [vmem:[#allocation5 + $0x8] sm:$0xf]
        %v1125 = vld [vmem:[#allocation5 + $0xc] sm:$0xf]
        %v1126 = vld [vmem:[#allocation5 + $0x10] sm:$0xf]
        %v1127 = vld [vmem:[#allocation5 + $0x14] sm:$0xf]
        %v1128 = vld [vmem:[#allocation5 + $0x18] sm:$0xf]
        %v1129 = vld [vmem:[#allocation5 + $0x1c] sm:$0xf]
        %v1130 = vld [vmem:[#allocation5 + $0x20] sm:$0xf]
        %v1131 = vld [vmem:[#allocation5 + $0x24] sm:$0xf]
        %v1132 = vld [vmem:[#allocation5 + $0x28] sm:$0xf]
        %v1133 = vld [vmem:[#allocation5 + $0x2c] sm:$0xf]
        %v1134 = vld [vmem:[#allocation5 + $0x30] sm:$0xf]
        %v1135 = vld [vmem:[#allocation5 + $0x34] sm:$0xf]
        %v1136 = vld [vmem:[#allocation5 + $0x38] sm:$0xf]
        %v1137 = vld [vmem:[#allocation5 + $0x3c] sm:$0xf]
        %s1138 = scalar_lea.vmem [#allocation5], 64
        %v1139 = vld [vmem:[%s1138] sm:$0xf]
        %v1140 = vld [vmem:[%s1138 + $0x4] sm:$0xf]
        %v1141 = vld [vmem:[%s1138 + $0x8] sm:$0xf]
        %v1142 = vld [vmem:[%s1138 + $0xc] sm:$0xf]
        %v1143 = vld [vmem:[%s1138 + $0x10] sm:$0xf]
        %v1144 = vld [vmem:[%s1138 + $0x14] sm:$0xf]
        %v1145 = vld [vmem:[%s1138 + $0x18] sm:$0xf]
        %v1146 = vld [vmem:[%s1138 + $0x1c] sm:$0xf]
        %v1147 = vld [vmem:[%s1138 + $0x20] sm:$0xf]
        %v1148 = vld [vmem:[%s1138 + $0x24] sm:$0xf]
        %v1149 = vld [vmem:[%s1138 + $0x28] sm:$0xf]
        %v1150 = vld [vmem:[%s1138 + $0x2c] sm:$0xf]
        %v1151 = vld [vmem:[%s1138 + $0x30] sm:$0xf]
        %v1152 = vld [vmem:[%s1138 + $0x34] sm:$0xf]
        %v1153 = vld [vmem:[%s1138 + $0x38] sm:$0xf]
        %v1154 = vld [vmem:[%s1138 + $0x3c] sm:$0xf]
        %v1156 = vshrl.u32 %v1119, 16
        %v1158 = vrot.slane %v1156, 1
        %v1159 = vshll.u32 %v1119, 16
        %v1161 = vrot.slane %v1159, 2
        %v1162 = vor.u32 %v1158, %v1161
        %v1164 = vshrl.u32 %v1120, 16
        %v1166 = vrot.slane %v1164, 1
        %v1167 = vshll.u32 %v1120, 16
        %v1169 = vrot.slane %v1167, 2
        %v1170 = vor.u32 %v1166, %v1169
        %v1171 = vsel %vm821, %v1162, %v1170
        %v1190 = vunpack.c.l.b16 %v1139
        %v1191 = vunpack.c.l.b16 %v1140
        %v1192 = vunpack.c.l.b16 %v1141
        %v1193 = vunpack.c.l.b16 %v1142
        %v1194 = vunpack.c.l.b16 %v1143
        %v1195 = vunpack.c.l.b16 %v1144
        %v1196 = vunpack.c.l.b16 %v1145
        %v1197 = vunpack.c.l.b16 %v1146
        %v1198 = vunpack.c.l.b16 %v1147
        %v1199 = vunpack.c.l.b16 %v1148
        %v1200 = vunpack.c.l.b16 %v1149
        %v1201 = vunpack.c.l.b16 %v1150
        %v1202 = vunpack.c.l.b16 %v1151
        %v1203 = vunpack.c.l.b16 %v1152
        %v1204 = vunpack.c.l.b16 %v1153
        %v1205 = vunpack.c.l.b16 %v1154
        %v1206 = vpack.c.b16 %v1191, %v1190
        %v1207 = vpack.c.b16 %v1193, %v1192
        %v1208 = vpack.c.b16 %v1195, %v1194
        %v1209 = vpack.c.b16 %v1197, %v1196
        %v1210 = vpack.c.b16 %v1199, %v1198
        %v1211 = vpack.c.b16 %v1201, %v1200
        %v1212 = vpack.c.b16 %v1203, %v1202
        %v1213 = vpack.c.b16 %v1205, %v1204
        %1222 = vmatprep.subr.bf16.mxu0 0
        %1223 = vmatpush1.bf16.msra.mxu0 %v1206
        %1224 = vmatprep.subr.bf16.mxu0 0
        %1225 = vmatpush1.bf16.msra.mxu0 %v1207
        %1226 = vmatprep.subr.bf16.mxu0 0
        %1227 = vmatpush1.bf16.msra.mxu0 %v1208
        %1228 = vmatprep.subr.bf16.mxu0 0
        %1229 = vmatpush1.bf16.msra.mxu0 %v1209
        %1230 = vmatprep.subr.bf16.mxu0 0
        %1231 = vmatpush1.bf16.msra.mxu0 %v1210
        %1232 = vmatprep.subr.bf16.mxu0 0
        %1233 = vmatpush1.bf16.msra.mxu0 %v1211
        %1234 = vmatprep.subr.bf16.mxu0 0
        %1235 = vmatpush1.bf16.msra.mxu0 %v1212
        %1236 = vmatprep.subr.bf16.mxu0 0
        %1237 = vmatpush1.bf16.msra.mxu0 %v1213
        %1238 = vmatprep.subr.bf16.mxu0 0
        %1239 = vmatpush1.bf16.msra.mxu0 0
        %1240 = vmatprep.subr.bf16.mxu0 0
        %1241 = vmatpush1.bf16.msra.mxu0 0
        %1242 = vmatprep.subr.bf16.mxu0 0
        %1243 = vmatpush1.bf16.msra.mxu0 0
        %1244 = vmatprep.subr.bf16.mxu0 0
        %1245 = vmatpush1.bf16.msra.mxu0 0
        %1246 = vmatprep.subr.bf16.mxu0 0
        %1247 = vmatpush1.bf16.msra.mxu0 0
        %1248 = vmatprep.subr.bf16.mxu0 0
        %1249 = vmatpush1.bf16.msra.mxu0 0
        %1250 = vmatprep.subr.bf16.mxu0 0
        %1251 = vmatpush1.bf16.msra.mxu0 0
        %1252 = vmatprep.subr.bf16.mxu0 0
        %1253 = vmatpush1.bf16.msra.mxu0 0
        %1254 = vmatprep.mubr.bf16.mxu0 0
        %1255 = vmatmul.mubr.bf16.gmra.mrb[0].mxu0 %v1171
        %v1256 = vpop.f32.mrb[0].mxu0
        %v1257 = vadd.f32 0.0, %v1256
        %v1258 = vpop.f32.mrb[0].mxu0
        %v1259 = vpop.f32.mrb[0].mxu0
        %v1260 = vadd.f32 0.0, %v1259
        %v1261 = vpop.f32.mrb[0].mxu0
        %1262 = vmatprep.mubr.bf16.mxu0 0
        %1263 = vmatmul.mubr.bf16.gmra.mrb[0].mxu0 %v1170
        %v1264 = vpop.f32.mrb[0].mxu0
        %v1265 = vadd.f32 0.0, %v1264
        %v1266 = vpop.f32.mrb[0].mxu0
        %v1267 = vpop.f32.mrb[0].mxu0
        %v1268 = vpop.f32.mrb[0].mxu0
        %1269 = vdwg.mxu0
        %v1272 = vrot.slane %v1119, 1
        %v1273 = vrot.slane %v1120, 1
        %v1274 = vsel %vm699, %v1272, %v1273
        %v1293 = vunpack.c.l.b16 %v1122
        %v1294 = vunpack.c.l.b16 %v1123
        %v1295 = vunpack.c.l.b16 %v1124
        %v1296 = vunpack.c.l.b16 %v1125
        %v1297 = vunpack.c.l.b16 %v1126
        %v1298 = vunpack.c.l.b16 %v1127
        %v1299 = vunpack.c.l.b16 %v1128
        %v1300 = vunpack.c.l.b16 %v1129
        %v1301 = vunpack.c.l.b16 %v1130
        %v1302 = vunpack.c.l.b16 %v1131
        %v1303 = vunpack.c.l.b16 %v1132
        %v1304 = vunpack.c.l.b16 %v1133
        %v1305 = vunpack.c.l.b16 %v1134
        %v1306 = vunpack.c.l.b16 %v1135
        %v1307 = vunpack.c.l.b16 %v1136
        %v1308 = vunpack.c.l.b16 %v1137
        %v1309 = vpack.c.b16 %v1294, %v1293
        %v1310 = vpack.c.b16 %v1296, %v1295
        %v1311 = vpack.c.b16 %v1298, %v1297
        %v1312 = vpack.c.b16 %v1300, %v1299
        %v1313 = vpack.c.b16 %v1302, %v1301
        %v1314 = vpack.c.b16 %v1304, %v1303
        %v1315 = vpack.c.b16 %v1306, %v1305
        %v1316 = vpack.c.b16 %v1308, %v1307
        %1325 = vmatprep.subr.bf16.mxu0 0
        %1326 = vmatpush1.bf16.msra.mxu0 %v1309
        %1327 = vmatprep.subr.bf16.mxu0 0
        %1328 = vmatpush1.bf16.msra.mxu0 %v1310
        %1329 = vmatprep.subr.bf16.mxu0 0
        %1330 = vmatpush1.bf16.msra.mxu0 %v1311
        %1331 = vmatprep.subr.bf16.mxu0 0
        %1332 = vmatpush1.bf16.msra.mxu0 %v1312
        %1333 = vmatprep.subr.bf16.mxu0 0
        %1334 = vmatpush1.bf16.msra.mxu0 %v1313
        %1335 = vmatprep.subr.bf16.mxu0 0
        %1336 = vmatpush1.bf16.msra.mxu0 %v1314
        %1337 = vmatprep.subr.bf16.mxu0 0
        %1338 = vmatpush1.bf16.msra.mxu0 %v1315
        %1339 = vmatprep.subr.bf16.mxu0 0
        %1340 = vmatpush1.bf16.msra.mxu0 %v1316
        %1341 = vmatprep.subr.bf16.mxu0 0
        %1342 = vmatpush1.bf16.msra.mxu0 0
        %1343 = vmatprep.subr.bf16.mxu0 0
        %1344 = vmatpush1.bf16.msra.mxu0 0
        %1345 = vmatprep.subr.bf16.mxu0 0
        %1346 = vmatpush1.bf16.msra.mxu0 0
        %1347 = vmatprep.subr.bf16.mxu0 0
        %1348 = vmatpush1.bf16.msra.mxu0 0
        %1349 = vmatprep.subr.bf16.mxu0 0
        %1350 = vmatpush1.bf16.msra.mxu0 0
        %1351 = vmatprep.subr.bf16.mxu0 0
        %1352 = vmatpush1.bf16.msra.mxu0 0
        %1353 = vmatprep.subr.bf16.mxu0 0
        %1354 = vmatpush1.bf16.msra.mxu0 0
        %1355 = vmatprep.subr.bf16.mxu0 0
        %1356 = vmatpush1.bf16.msra.mxu0 0
        %1357 = vmatprep.mubr.bf16.mxu0 0
        %1358 = vmatmul.mubr.bf16.gmra.mrb[0].mxu0 %v1274
        %v1359 = vpop.f32.mrb[0].mxu0
        %v1360 = vadd.f32 %v1257, %v1359
        %v1361 = vpop.f32.mrb[0].mxu0
        %v1362 = vpop.f32.mrb[0].mxu0
        %v1363 = vadd.f32 %v1260, %v1362
        %v1364 = vpop.f32.mrb[0].mxu0
        %1365 = vmatprep.mubr.bf16.mxu0 0
        %1366 = vmatmul.mubr.bf16.gmra.mrb[0].mxu0 %v1273
        %v1367 = vpop.f32.mrb[0].mxu0
        %v1368 = vadd.f32 %v1265, %v1367
        %v1369 = vpop.f32.mrb[0].mxu0
        %v1370 = vpop.f32.mrb[0].mxu0
        %v1371 = vpop.f32.mrb[0].mxu0
        %1372 = vdwg.mxu0
        %s1373 = scalar_lea.vmem [#allocation5], 128
        %v1374 = vld [vmem:[%s1373] sm:$0xf]
        %v1375 = vld [vmem:[%s1373 + $0x4] sm:$0xf]
        %v1376 = vld [vmem:[%s1373 + $0x8] sm:$0xf]
        %v1377 = vld [vmem:[%s1373 + $0xc] sm:$0xf]
        %v1378 = vld [vmem:[%s1373 + $0x10] sm:$0xf]
        %v1379 = vld [vmem:[%s1373 + $0x14] sm:$0xf]
        %v1380 = vld [vmem:[%s1373 + $0x18] sm:$0xf]
        %v1381 = vld [vmem:[%s1373 + $0x1c] sm:$0xf]
        %v1382 = vld [vmem:[%s1373 + $0x20] sm:$0xf]
        %v1383 = vld [vmem:[%s1373 + $0x24] sm:$0xf]
        %v1384 = vld [vmem:[%s1373 + $0x28] sm:$0xf]
        %v1385 = vld [vmem:[%s1373 + $0x2c] sm:$0xf]
        %v1386 = vld [vmem:[%s1373 + $0x30] sm:$0xf]
        %v1387 = vld [vmem:[%s1373 + $0x34] sm:$0xf]
        %v1388 = vld [vmem:[%s1373 + $0x38] sm:$0xf]
        %v1389 = vld [vmem:[%s1373 + $0x3c] sm:$0xf]
        %v1390 = vrot.slane %v1119, 2
        %v1391 = vrot.slane %v1120, 2
        %v1392 = vsel %vm947, %v1390, %v1391
        %v1411 = vunpack.c.l.b16 %v1374
        %v1412 = vunpack.c.l.b16 %v1375
        %v1413 = vunpack.c.l.b16 %v1376
        %v1414 = vunpack.c.l.b16 %v1377
        %v1415 = vunpack.c.l.b16 %v1378
        %v1416 = vunpack.c.l.b16 %v1379
        %v1417 = vunpack.c.l.b16 %v1380
        %v1418 = vunpack.c.l.b16 %v1381
        %v1419 = vunpack.c.l.b16 %v1382
        %v1420 = vunpack.c.l.b16 %v1383
        %v1421 = vunpack.c.l.b16 %v1384
        %v1422 = vunpack.c.l.b16 %v1385
        %v1423 = vunpack.c.l.b16 %v1386
        %v1424 = vunpack.c.l.b16 %v1387
        %v1425 = vunpack.c.l.b16 %v1388
        %v1426 = vunpack.c.l.b16 %v1389
        %v1427 = vpack.c.b16 %v1412, %v1411
        %v1428 = vpack.c.b16 %v1414, %v1413
        %v1429 = vpack.c.b16 %v1416, %v1415
        %v1430 = vpack.c.b16 %v1418, %v1417
        %v1431 = vpack.c.b16 %v1420, %v1419
        %v1432 = vpack.c.b16 %v1422, %v1421
        %v1433 = vpack.c.b16 %v1424, %v1423
        %v1434 = vpack.c.b16 %v1426, %v1425
        %1443 = vmatprep.subr.bf16.mxu0 0
        %1444 = vmatpush1.bf16.msra.mxu0 %v1427
        %1445 = vmatprep.subr.bf16.mxu0 0
        %1446 = vmatpush1.bf16.msra.mxu0 %v1428
        %1447 = vmatprep.subr.bf16.mxu0 0
        %1448 = vmatpush1.bf16.msra.mxu0 %v1429
        %1449 = vmatprep.subr.bf16.mxu0 0
        %1450 = vmatpush1.bf16.msra.mxu0 %v1430
        %1451 = vmatprep.subr.bf16.mxu0 0
        %1452 = vmatpush1.bf16.msra.mxu0 %v1431
        %1453 = vmatprep.subr.bf16.mxu0 0
        %1454 = vmatpush1.bf16.msra.mxu0 %v1432
        %1455 = vmatprep.subr.bf16.mxu0 0
        %1456 = vmatpush1.bf16.msra.mxu0 %v1433
        %1457 = vmatprep.subr.bf16.mxu0 0
        %1458 = vmatpush1.bf16.msra.mxu0 %v1434
        %1459 = vmatprep.subr.bf16.mxu0 0
        %1460 = vmatpush1.bf16.msra.mxu0 0
        %1461 = vmatprep.subr.bf16.mxu0 0
        %1462 = vmatpush1.bf16.msra.mxu0 0
        %1463 = vmatprep.subr.bf16.mxu0 0
        %1464 = vmatpush1.bf16.msra.mxu0 0
        %1465 = vmatprep.subr.bf16.mxu0 0
        %1466 = vmatpush1.bf16.msra.mxu0 0
        %1467 = vmatprep.subr.bf16.mxu0 0
        %1468 = vmatpush1.bf16.msra.mxu0 0
        %1469 = vmatprep.subr.bf16.mxu0 0
        %1470 = vmatpush1.bf16.msra.mxu0 0
        %1471 = vmatprep.subr.bf16.mxu0 0
        %1472 = vmatpush1.bf16.msra.mxu0 0
        %1473 = vmatprep.subr.bf16.mxu0 0
        %1474 = vmatpush1.bf16.msra.mxu0 0
        %1475 = vmatprep.mubr.bf16.mxu0 0
        %1476 = vmatmul.mubr.bf16.gmra.mrb[0].mxu0 %v1392
        %v1477 = vpop.f32.mrb[0].mxu0
        %v1478 = vadd.f32 0.0, %v1477
        %v1479 = vpop.f32.mrb[0].mxu0
        %v1480 = vpop.f32.mrb[0].mxu0
        %v1481 = vadd.f32 0.0, %v1480
        %v1482 = vpop.f32.mrb[0].mxu0
        %1483 = vmatprep.mubr.bf16.mxu0 0
        %1484 = vmatmul.mubr.bf16.gmra.mrb[0].mxu0 %v1391
        %v1485 = vpop.f32.mrb[0].mxu0
        %v1486 = vadd.f32 0.0, %v1485
        %v1487 = vpop.f32.mrb[0].mxu0
        %v1488 = vpop.f32.mrb[0].mxu0
        %v1489 = vpop.f32.mrb[0].mxu0
        %1490 = vdwg.mxu0
        %v1491 = vadd.f32 %v1360, %v1478
        %v1492 = vadd.f32 %v1363, %v1481
        %v1493 = vadd.f32 %v1368, %v1486
        %s1494 = scalar_lea.vmem [#allocation5], 192
        %v1495 = vld [vmem:[%s1494] sm:$0xf]
        %v1496 = vld [vmem:[%s1494 + $0x4] sm:$0xf]
        %v1497 = vld [vmem:[%s1494 + $0x8] sm:$0xf]
        %v1498 = vld [vmem:[%s1494 + $0xc] sm:$0xf]
        %v1499 = vld [vmem:[%s1494 + $0x10] sm:$0xf]
        %v1500 = vld [vmem:[%s1494 + $0x14] sm:$0xf]
        %v1501 = vld [vmem:[%s1494 + $0x18] sm:$0xf]
        %v1502 = vld [vmem:[%s1494 + $0x1c] sm:$0xf]
        %v1503 = vld [vmem:[%s1494 + $0x20] sm:$0xf]
        %v1504 = vld [vmem:[%s1494 + $0x24] sm:$0xf]
        %v1505 = vld [vmem:[%s1494 + $0x28] sm:$0xf]
        %v1506 = vld [vmem:[%s1494 + $0x2c] sm:$0xf]
        %v1507 = vld [vmem:[%s1494 + $0x30] sm:$0xf]
        %v1508 = vld [vmem:[%s1494 + $0x34] sm:$0xf]
        %v1509 = vld [vmem:[%s1494 + $0x38] sm:$0xf]
        %v1510 = vld [vmem:[%s1494 + $0x3c] sm:$0xf]
        %vm1511 = vsmask.f32 5376
        %v1512 = vrot.slane %v1156, 2
        %v1513 = vrot.slane %v1159, 3
        %v1514 = vor.u32 %v1512, %v1513
        %v1515 = vrot.slane %v1164, 2
        %v1516 = vrot.slane %v1167, 3
        %v1517 = vor.u32 %v1515, %v1516
        %v1518 = vsel %vm1511, %v1514, %v1517
        %v1537 = vunpack.c.l.b16 %v1495
        %v1538 = vunpack.c.l.b16 %v1496
        %v1539 = vunpack.c.l.b16 %v1497
        %v1540 = vunpack.c.l.b16 %v1498
        %v1541 = vunpack.c.l.b16 %v1499
        %v1542 = vunpack.c.l.b16 %v1500
        %v1543 = vunpack.c.l.b16 %v1501
        %v1544 = vunpack.c.l.b16 %v1502
        %v1545 = vunpack.c.l.b16 %v1503
        %v1546 = vunpack.c.l.b16 %v1504
        %v1547 = vunpack.c.l.b16 %v1505
        %v1548 = vunpack.c.l.b16 %v1506
        %v1549 = vunpack.c.l.b16 %v1507
        %v1550 = vunpack.c.l.b16 %v1508
        %v1551 = vunpack.c.l.b16 %v1509
        %v1552 = vunpack.c.l.b16 %v1510
        %v1553 = vpack.c.b16 %v1538, %v1537
        %v1554 = vpack.c.b16 %v1540, %v1539
        %v1555 = vpack.c.b16 %v1542, %v1541
        %v1556 = vpack.c.b16 %v1544, %v1543
        %v1557 = vpack.c.b16 %v1546, %v1545
        %v1558 = vpack.c.b16 %v1548, %v1547
        %v1559 = vpack.c.b16 %v1550, %v1549
        %v1560 = vpack.c.b16 %v1552, %v1551
        %1569 = vmatprep.subr.bf16.mxu0 0
        %1570 = vmatpush1.bf16.msra.mxu0 %v1553
        %1571 = vmatprep.subr.bf16.mxu0 0
        %1572 = vmatpush1.bf16.msra.mxu0 %v1554
        %1573 = vmatprep.subr.bf16.mxu0 0
        %1574 = vmatpush1.bf16.msra.mxu0 %v1555
        %1575 = vmatprep.subr.bf16.mxu0 0
        %1576 = vmatpush1.bf16.msra.mxu0 %v1556
        %1577 = vmatprep.subr.bf16.mxu0 0
        %1578 = vmatpush1.bf16.msra.mxu0 %v1557
        %1579 = vmatprep.subr.bf16.mxu0 0
        %1580 = vmatpush1.bf16.msra.mxu0 %v1558
        %1581 = vmatprep.subr.bf16.mxu0 0
        %1582 = vmatpush1.bf16.msra.mxu0 %v1559
        %1583 = vmatprep.subr.bf16.mxu0 0
        %1584 = vmatpush1.bf16.msra.mxu0 %v1560
        %1585 = vmatprep.subr.bf16.mxu0 0
        %1586 = vmatpush1.bf16.msra.mxu0 0
        %1587 = vmatprep.subr.bf16.mxu0 0
        %1588 = vmatpush1.bf16.msra.mxu0 0
        %1589 = vmatprep.subr.bf16.mxu0 0
        %1590 = vmatpush1.bf16.msra.mxu0 0
        %1591 = vmatprep.subr.bf16.mxu0 0
        %1592 = vmatpush1.bf16.msra.mxu0 0
        %1593 = vmatprep.subr.bf16.mxu0 0
        %1594 = vmatpush1.bf16.msra.mxu0 0
        %1595 = vmatprep.subr.bf16.mxu0 0
        %1596 = vmatpush1.bf16.msra.mxu0 0
        %1597 = vmatprep.subr.bf16.mxu0 0
        %1598 = vmatpush1.bf16.msra.mxu0 0
        %1599 = vmatprep.subr.bf16.mxu0 0
        %1600 = vmatpush1.bf16.msra.mxu0 0
        %1601 = vmatprep.mubr.bf16.mxu0 0
        %1602 = vmatmul.mubr.bf16.gmra.mrb[0].mxu0 %v1518
        %v1603 = vpop.f32.mrb[0].mxu0
        %v1604 = vadd.f32 0.0, %v1603
        %v1605 = vpop.f32.mrb[0].mxu0
        %v1606 = vpop.f32.mrb[0].mxu0
        %v1607 = vadd.f32 0.0, %v1606
        %v1608 = vpop.f32.mrb[0].mxu0
        %1609 = vmatprep.mubr.bf16.mxu0 0
        %1610 = vmatmul.mubr.bf16.gmra.mrb[0].mxu0 %v1517
        %v1611 = vpop.f32.mrb[0].mxu0
        %v1612 = vadd.f32 0.0, %v1611
        %v1613 = vpop.f32.mrb[0].mxu0
        %v1614 = vpop.f32.mrb[0].mxu0
        %v1615 = vpop.f32.mrb[0].mxu0
        %1616 = vdwg.mxu0
        %v1617 = vadd.f32 %v1491, %v1604
        %v1618 = vadd.f32 %v1492, %v1607
        %v1619 = vadd.f32 %v1493, %v1612
        %s1620 = scalar_lea.vmem [#allocation5], 256
        %v1621 = vld [vmem:[%s1620] sm:$0xf]
        %v1622 = vld [vmem:[%s1620 + $0x4] sm:$0xf]
        %v1623 = vld [vmem:[%s1620 + $0x8] sm:$0xf]
        %v1624 = vld [vmem:[%s1620 + $0xc] sm:$0xf]
        %v1625 = vld [vmem:[%s1620 + $0x10] sm:$0xf]
        %v1626 = vld [vmem:[%s1620 + $0x14] sm:$0xf]
        %v1627 = vld [vmem:[%s1620 + $0x18] sm:$0xf]
        %v1628 = vld [vmem:[%s1620 + $0x1c] sm:$0xf]
        %v1629 = vld [vmem:[%s1620 + $0x20] sm:$0xf]
        %v1630 = vld [vmem:[%s1620 + $0x24] sm:$0xf]
        %v1631 = vld [vmem:[%s1620 + $0x28] sm:$0xf]
        %v1632 = vld [vmem:[%s1620 + $0x2c] sm:$0xf]
        %v1633 = vld [vmem:[%s1620 + $0x30] sm:$0xf]
        %v1634 = vld [vmem:[%s1620 + $0x34] sm:$0xf]
        %v1635 = vld [vmem:[%s1620 + $0x38] sm:$0xf]
        %v1636 = vld [vmem:[%s1620 + $0x3c] sm:$0xf]
        %vm1637 = vcmask 1044480
        %v1638 = vrot.slane %v1119, 3
        %v1639 = vrot.slane %v1120, 3
        %v1640 = vsel %vm1637, %v1638, %v1639
        %v1659 = vunpack.c.l.b16 %v1621
        %v1660 = vunpack.c.l.b16 %v1622
        %v1661 = vunpack.c.l.b16 %v1623
        %v1662 = vunpack.c.l.b16 %v1624
        %v1663 = vunpack.c.l.b16 %v1625
        %v1664 = vunpack.c.l.b16 %v1626
        %v1665 = vunpack.c.l.b16 %v1627
        %v1666 = vunpack.c.l.b16 %v1628
        %v1667 = vunpack.c.l.b16 %v1629
        %v1668 = vunpack.c.l.b16 %v1630
        %v1669 = vunpack.c.l.b16 %v1631
        %v1670 = vunpack.c.l.b16 %v1632
        %v1671 = vunpack.c.l.b16 %v1633
        %v1672 = vunpack.c.l.b16 %v1634
        %v1673 = vunpack.c.l.b16 %v1635
        %v1674 = vunpack.c.l.b16 %v1636
        %v1675 = vpack.c.b16 %v1660, %v1659
        %v1676 = vpack.c.b16 %v1662, %v1661
        %v1677 = vpack.c.b16 %v1664, %v1663
        %v1678 = vpack.c.b16 %v1666, %v1665
        %v1679 = vpack.c.b16 %v1668, %v1667
        %v1680 = vpack.c.b16 %v1670, %v1669
        %v1681 = vpack.c.b16 %v1672, %v1671
        %v1682 = vpack.c.b16 %v1674, %v1673
        %1691 = vmatprep.subr.bf16.mxu0 0
        %1692 = vmatpush1.bf16.msra.mxu0 %v1675
        %1693 = vmatprep.subr.bf16.mxu0 0
        %1694 = vmatpush1.bf16.msra.mxu0 %v1676
        %1695 = vmatprep.subr.bf16.mxu0 0
        %1696 = vmatpush1.bf16.msra.mxu0 %v1677
        %1697 = vmatprep.subr.bf16.mxu0 0
        %1698 = vmatpush1.bf16.msra.mxu0 %v1678
        %1699 = vmatprep.subr.bf16.mxu0 0
        %1700 = vmatpush1.bf16.msra.mxu0 %v1679
        %1701 = vmatprep.subr.bf16.mxu0 0
        %1702 = vmatpush1.bf16.msra.mxu0 %v1680
        %1703 = vmatprep.subr.bf16.mxu0 0
        %1704 = vmatpush1.bf16.msra.mxu0 %v1681
        %1705 = vmatprep.subr.bf16.mxu0 0
        %1706 = vmatpush1.bf16.msra.mxu0 %v1682
        %1707 = vmatprep.subr.bf16.mxu0 0
        %1708 = vmatpush1.bf16.msra.mxu0 0
        %1709 = vmatprep.subr.bf16.mxu0 0
        %1710 = vmatpush1.bf16.msra.mxu0 0
        %1711 = vmatprep.subr.bf16.mxu0 0
        %1712 = vmatpush1.bf16.msra.mxu0 0
        %1713 = vmatprep.subr.bf16.mxu0 0
        %1714 = vmatpush1.bf16.msra.mxu0 0
        %1715 = vmatprep.subr.bf16.mxu0 0
        %1716 = vmatpush1.bf16.msra.mxu0 0
        %1717 = vmatprep.subr.bf16.mxu0 0
        %1718 = vmatpush1.bf16.msra.mxu0 0
        %1719 = vmatprep.subr.bf16.mxu0 0
        %1720 = vmatpush1.bf16.msra.mxu0 0
        %1721 = vmatprep.subr.bf16.mxu0 0
        %1722 = vmatpush1.bf16.msra.mxu0 0
        %1723 = vmatprep.mubr.bf16.mxu0 0
        %1724 = vmatmul.mubr.bf16.gmra.mrb[0].mxu0 %v1640
        %v1725 = vpop.f32.mrb[0].mxu0
        %v1726 = vadd.f32 0.0, %v1725
        %v1727 = vpop.f32.mrb[0].mxu0
        %v1728 = vpop.f32.mrb[0].mxu0
        %v1729 = vadd.f32 0.0, %v1728
        %v1730 = vpop.f32.mrb[0].mxu0
        %1731 = vmatprep.mubr.bf16.mxu0 0
        %1732 = vmatmul.mubr.bf16.gmra.mrb[0].mxu0 %v1639
        %v1733 = vpop.f32.mrb[0].mxu0
        %v1734 = vadd.f32 0.0, %v1733
        %v1735 = vpop.f32.mrb[0].mxu0
        %v1736 = vpop.f32.mrb[0].mxu0
        %v1737 = vpop.f32.mrb[0].mxu0
        %1738 = vdwg.mxu0
        %v1739 = vadd.f32 %v1617, %v1726
        %v1740 = vadd.f32 %v1618, %v1729
        %v1741 = vadd.f32 %v1619, %v1734
        %v1743 = vlaneseq
        %v1744 = vshrl.u32 %v1743, 7
        %v1745 = vsub.s32 0, %v1744
        %v1746 = vrot.slane %v1121, %v1745
        %v1748 = vadd.f32 %v1739, %v1746
        %v1749 = vadd.f32 %v1740, %v1746
        %v1750 = vadd.f32 %v1741, %v1746
        %v1751 = vxor.u32 %v1748, 2147483648
        %v1752 = vxor.u32 %v1749, 2147483648
        %v1753 = vxor.u32 %v1750, 2147483648
        %v1754 = vmul.f32 %v1751, 1.442695
        %v1755 = vpow.pop %v1754
        %v1756 = vmul.f32 %v1752, 1.442695
        %v1757 = vpow.pop %v1756
        %v1758 = vmul.f32 %v1753, 1.442695
        %v1759 = vpow.pop %v1758
        %v1760 = vadd.f32 %v1755, 1.0
        %v1761 = vadd.f32 %v1757, 1.0
        %v1762 = vadd.f32 %v1759, 1.0
        %v1763 = vrcp.pop %v1760
        %v1764 = vmul.f32 1.0, %v1763
        %v1765 = vrcp.pop %v1761
        %v1766 = vmul.f32 1.0, %v1765
        %v1767 = vrcp.pop %v1762
        %v1768 = vmul.f32 1.0, %v1767
        %v1769 = vmul.f32 %v1748, %v1764
        %v1770 = vmul.f32 %v1749, %v1766
        %v1771 = vmul.f32 %v1750, %v1768
        %vm1775 = vcmask 1043456
        %v1776 = vrot.slane %v1769, 4
        %v1777 = vrot.slane %v1770, 4
        %v1778 = vsel %vm1775, %v1776, %v1777
        %v1779 = vrot.slane %v1771, 4
        %v1780 = vsel %vm1775, %v1777, %v1779
        %v1784 = vsel %vm1098, %v1776, 0.0
        %v1785 = vsel %vm1099, %v1778, 0.0
        %v1786 = vsel %vm1100, %v1780, 0.0
        %v1787 = vpack.c.bf16 %v1785, %v1784
        %v1788 = vpack.c.bf16 %v1786, %v1786
        %v1789 = vld [vmem:[%s6] sm:$0x1]
        %v1790 = vld [vmem:[#allocation7] sm:$0xf]
        %v1791 = vld [vmem:[#allocation7 + $0x4] sm:$0xf]
        %v1792 = vld [vmem:[#allocation7 + $0x8] sm:$0xf]
        %v1793 = vld [vmem:[#allocation7 + $0xc] sm:$0xf]
        %v1794 = vld [vmem:[#allocation7 + $0x10] sm:$0xf]
        %v1795 = vld [vmem:[#allocation7 + $0x14] sm:$0xf]
        %v1796 = vld [vmem:[#allocation7 + $0x18] sm:$0xf]
        %v1797 = vld [vmem:[#allocation7 + $0x1c] sm:$0xf]
        %v1798 = vld [vmem:[#allocation7 + $0x20] sm:$0xf]
        %v1799 = vld [vmem:[#allocation7 + $0x24] sm:$0xf]
        %v1800 = vld [vmem:[#allocation7 + $0x28] sm:$0xf]
        %v1801 = vld [vmem:[#allocation7 + $0x2c] sm:$0xf]
        %v1802 = vld [vmem:[#allocation7 + $0x30] sm:$0xf]
        %v1803 = vld [vmem:[#allocation7 + $0x34] sm:$0xf]
        %v1804 = vld [vmem:[#allocation7 + $0x38] sm:$0xf]
        %v1805 = vld [vmem:[#allocation7 + $0x3c] sm:$0xf]
        %s1806 = scalar_lea.vmem [#allocation7], 64
        %v1807 = vld [vmem:[%s1806] sm:$0xf]
        %v1808 = vld [vmem:[%s1806 + $0x4] sm:$0xf]
        %v1809 = vld [vmem:[%s1806 + $0x8] sm:$0xf]
        %v1810 = vld [vmem:[%s1806 + $0xc] sm:$0xf]
        %v1811 = vld [vmem:[%s1806 + $0x10] sm:$0xf]
        %v1812 = vld [vmem:[%s1806 + $0x14] sm:$0xf]
        %v1813 = vld [vmem:[%s1806 + $0x18] sm:$0xf]
        %v1814 = vld [vmem:[%s1806 + $0x1c] sm:$0xf]
        %v1815 = vld [vmem:[%s1806 + $0x20] sm:$0xf]
        %v1816 = vld [vmem:[%s1806 + $0x24] sm:$0xf]
        %v1817 = vld [vmem:[%s1806 + $0x28] sm:$0xf]
        %v1818 = vld [vmem:[%s1806 + $0x2c] sm:$0xf]
        %v1819 = vld [vmem:[%s1806 + $0x30] sm:$0xf]
        %v1820 = vld [vmem:[%s1806 + $0x34] sm:$0xf]
        %v1821 = vld [vmem:[%s1806 + $0x38] sm:$0xf]
        %v1822 = vld [vmem:[%s1806 + $0x3c] sm:$0xf]
        %v1824 = vshrl.u32 %v1787, 16
        %v1826 = vrot.slane %v1824, 2
        %v1827 = vshll.u32 %v1787, 16
        %v1829 = vrot.slane %v1827, 3
        %v1830 = vor.u32 %v1826, %v1829
        %v1832 = vshrl.u32 %v1788, 16
        %v1834 = vrot.slane %v1832, 2
        %v1835 = vshll.u32 %v1788, 16
        %v1837 = vrot.slane %v1835, 3
        %v1838 = vor.u32 %v1834, %v1837
        %v1839 = vsel %vm1511, %v1830, %v1838
        %v1857 = vunpack.c.l.b16 %v1807
        %v1858 = vunpack.c.l.b16 %v1808
        %v1859 = vunpack.c.l.b16 %v1809
        %v1860 = vunpack.c.l.b16 %v1810
        %v1861 = vunpack.c.l.b16 %v1811
        %v1862 = vunpack.c.l.b16 %v1812
        %v1863 = vunpack.c.l.b16 %v1813
        %v1864 = vunpack.c.l.b16 %v1814
        %v1865 = vunpack.c.l.b16 %v1815
        %v1866 = vunpack.c.l.b16 %v1816
        %v1867 = vunpack.c.l.b16 %v1817
        %v1868 = vunpack.c.l.b16 %v1818
        %v1869 = vunpack.c.l.b16 %v1819
        %v1870 = vunpack.c.l.b16 %v1820
        %v1871 = vunpack.c.l.b16 %v1821
        %v1872 = vunpack.c.l.b16 %v1822
        %v1873 = vpack.c.b16 %v1858, %v1857
        %v1874 = vpack.c.b16 %v1860, %v1859
        %v1875 = vpack.c.b16 %v1862, %v1861
        %v1876 = vpack.c.b16 %v1864, %v1863
        %v1877 = vpack.c.b16 %v1866, %v1865
        %v1878 = vpack.c.b16 %v1868, %v1867
        %v1879 = vpack.c.b16 %v1870, %v1869
        %v1880 = vpack.c.b16 %v1872, %v1871
        %1889 = vmatprep.subr.bf16.mxu0 0
        %1890 = vmatpush1.bf16.msra.mxu0 %v1873
        %1891 = vmatprep.subr.bf16.mxu0 0
        %1892 = vmatpush1.bf16.msra.mxu0 %v1874
        %1893 = vmatprep.subr.bf16.mxu0 0
        %1894 = vmatpush1.bf16.msra.mxu0 %v1875
        %1895 = vmatprep.subr.bf16.mxu0 0
        %1896 = vmatpush1.bf16.msra.mxu0 %v1876
        %1897 = vmatprep.subr.bf16.mxu0 0
        %1898 = vmatpush1.bf16.msra.mxu0 %v1877
        %1899 = vmatprep.subr.bf16.mxu0 0
        %1900 = vmatpush1.bf16.msra.mxu0 %v1878
        %1901 = vmatprep.subr.bf16.mxu0 0
        %1902 = vmatpush1.bf16.msra.mxu0 %v1879
        %1903 = vmatprep.subr.bf16.mxu0 0
        %1904 = vmatpush1.bf16.msra.mxu0 %v1880
        %1905 = vmatprep.subr.bf16.mxu0 0
        %1906 = vmatpush1.bf16.msra.mxu0 0
        %1907 = vmatprep.subr.bf16.mxu0 0
        %1908 = vmatpush1.bf16.msra.mxu0 0
        %1909 = vmatprep.subr.bf16.mxu0 0
        %1910 = vmatpush1.bf16.msra.mxu0 0
        %1911 = vmatprep.subr.bf16.mxu0 0
        %1912 = vmatpush1.bf16.msra.mxu0 0
        %1913 = vmatprep.subr.bf16.mxu0 0
        %1914 = vmatpush1.bf16.msra.mxu0 0
        %1915 = vmatprep.subr.bf16.mxu0 0
        %1916 = vmatpush1.bf16.msra.mxu0 0
        %1917 = vmatprep.subr.bf16.mxu0 0
        %1918 = vmatpush1.bf16.msra.mxu0 0
        %1919 = vmatprep.subr.bf16.mxu0 0
        %1920 = vmatpush1.bf16.msra.mxu0 0
        %1921 = vmatprep.mubr.bf16.mxu0 0
        %1922 = vmatmul.mubr.bf16.gmra.mrb[0].mxu0 %v1839
        %v1923 = vpop.f32.mrb[0].mxu0
        %v1924 = vadd.f32 0.0, %v1923
        %v1925 = vpop.f32.mrb[0].mxu0
        %v1926 = vpop.f32.mrb[0].mxu0
        %v1927 = vadd.f32 0.0, %v1926
        %v1928 = vpop.f32.mrb[0].mxu0
        %1929 = vdwg.mxu0
        %v1932 = vrot.slane %v1787, 2
        %v1933 = vrot.slane %v1788, 2
        %v1934 = vsel %vm947, %v1932, %v1933
        %v1952 = vunpack.c.l.b16 %v1790
        %v1953 = vunpack.c.l.b16 %v1791
        %v1954 = vunpack.c.l.b16 %v1792
        %v1955 = vunpack.c.l.b16 %v1793
        %v1956 = vunpack.c.l.b16 %v1794
        %v1957 = vunpack.c.l.b16 %v1795
        %v1958 = vunpack.c.l.b16 %v1796
        %v1959 = vunpack.c.l.b16 %v1797
        %v1960 = vunpack.c.l.b16 %v1798
        %v1961 = vunpack.c.l.b16 %v1799
        %v1962 = vunpack.c.l.b16 %v1800
        %v1963 = vunpack.c.l.b16 %v1801
        %v1964 = vunpack.c.l.b16 %v1802
        %v1965 = vunpack.c.l.b16 %v1803
        %v1966 = vunpack.c.l.b16 %v1804
        %v1967 = vunpack.c.l.b16 %v1805
        %v1968 = vpack.c.b16 %v1953, %v1952
        %v1969 = vpack.c.b16 %v1955, %v1954
        %v1970 = vpack.c.b16 %v1957, %v1956
        %v1971 = vpack.c.b16 %v1959, %v1958
        %v1972 = vpack.c.b16 %v1961, %v1960
        %v1973 = vpack.c.b16 %v1963, %v1962
        %v1974 = vpack.c.b16 %v1965, %v1964
        %v1975 = vpack.c.b16 %v1967, %v1966
        %1984 = vmatprep.subr.bf16.mxu0 0
        %1985 = vmatpush1.bf16.msra.mxu0 %v1968
        %1986 = vmatprep.subr.bf16.mxu0 0
        %1987 = vmatpush1.bf16.msra.mxu0 %v1969
        %1988 = vmatprep.subr.bf16.mxu0 0
        %1989 = vmatpush1.bf16.msra.mxu0 %v1970
        %1990 = vmatprep.subr.bf16.mxu0 0
        %1991 = vmatpush1.bf16.msra.mxu0 %v1971
        %1992 = vmatprep.subr.bf16.mxu0 0
        %1993 = vmatpush1.bf16.msra.mxu0 %v1972
        %1994 = vmatprep.subr.bf16.mxu0 0
        %1995 = vmatpush1.bf16.msra.mxu0 %v1973
        %1996 = vmatprep.subr.bf16.mxu0 0
        %1997 = vmatpush1.bf16.msra.mxu0 %v1974
        %1998 = vmatprep.subr.bf16.mxu0 0
        %1999 = vmatpush1.bf16.msra.mxu0 %v1975
        %2000 = vmatprep.subr.bf16.mxu0 0
        %2001 = vmatpush1.bf16.msra.mxu0 0
        %2002 = vmatprep.subr.bf16.mxu0 0
        %2003 = vmatpush1.bf16.msra.mxu0 0
        %2004 = vmatprep.subr.bf16.mxu0 0
        %2005 = vmatpush1.bf16.msra.mxu0 0
        %2006 = vmatprep.subr.bf16.mxu0 0
        %2007 = vmatpush1.bf16.msra.mxu0 0
        %2008 = vmatprep.subr.bf16.mxu0 0
        %2009 = vmatpush1.bf16.msra.mxu0 0
        %2010 = vmatprep.subr.bf16.mxu0 0
        %2011 = vmatpush1.bf16.msra.mxu0 0
        %2012 = vmatprep.subr.bf16.mxu0 0
        %2013 = vmatpush1.bf16.msra.mxu0 0
        %2014 = vmatprep.subr.bf16.mxu0 0
        %2015 = vmatpush1.bf16.msra.mxu0 0
        %2016 = vmatprep.mubr.bf16.mxu0 0
        %2017 = vmatmul.mubr.bf16.gmra.mrb[0].mxu0 %v1934
        %v2018 = vpop.f32.mrb[0].mxu0
        %v2019 = vadd.f32 %v1924, %v2018
        %v2020 = vpop.f32.mrb[0].mxu0
        %v2021 = vpop.f32.mrb[0].mxu0
        %v2022 = vadd.f32 %v1927, %v2021
        %v2023 = vpop.f32.mrb[0].mxu0
        %2024 = vdwg.mxu0
        %s2025 = scalar_lea.vmem [#allocation7], 128
        %v2026 = vld [vmem:[%s2025] sm:$0xf]
        %v2027 = vld [vmem:[%s2025 + $0x4] sm:$0xf]
        %v2028 = vld [vmem:[%s2025 + $0x8] sm:$0xf]
        %v2029 = vld [vmem:[%s2025 + $0xc] sm:$0xf]
        %v2030 = vld [vmem:[%s2025 + $0x10] sm:$0xf]
        %v2031 = vld [vmem:[%s2025 + $0x14] sm:$0xf]
        %v2032 = vld [vmem:[%s2025 + $0x18] sm:$0xf]
        %v2033 = vld [vmem:[%s2025 + $0x1c] sm:$0xf]
        %v2034 = vld [vmem:[%s2025 + $0x20] sm:$0xf]
        %v2035 = vld [vmem:[%s2025 + $0x24] sm:$0xf]
        %v2036 = vld [vmem:[%s2025 + $0x28] sm:$0xf]
        %v2037 = vld [vmem:[%s2025 + $0x2c] sm:$0xf]
        %v2038 = vld [vmem:[%s2025 + $0x30] sm:$0xf]
        %v2039 = vld [vmem:[%s2025 + $0x34] sm:$0xf]
        %v2040 = vld [vmem:[%s2025 + $0x38] sm:$0xf]
        %v2041 = vld [vmem:[%s2025 + $0x3c] sm:$0xf]
        %v2042 = vrot.slane %v1787, 3
        %v2043 = vrot.slane %v1788, 3
        %v2044 = vsel %vm1637, %v2042, %v2043
        %v2062 = vunpack.c.l.b16 %v2026
        %v2063 = vunpack.c.l.b16 %v2027
        %v2064 = vunpack.c.l.b16 %v2028
        %v2065 = vunpack.c.l.b16 %v2029
        %v2066 = vunpack.c.l.b16 %v2030
        %v2067 = vunpack.c.l.b16 %v2031
        %v2068 = vunpack.c.l.b16 %v2032
        %v2069 = vunpack.c.l.b16 %v2033
        %v2070 = vunpack.c.l.b16 %v2034
        %v2071 = vunpack.c.l.b16 %v2035
        %v2072 = vunpack.c.l.b16 %v2036
        %v2073 = vunpack.c.l.b16 %v2037
        %v2074 = vunpack.c.l.b16 %v2038
        %v2075 = vunpack.c.l.b16 %v2039
        %v2076 = vunpack.c.l.b16 %v2040
        %v2077 = vunpack.c.l.b16 %v2041
        %v2078 = vpack.c.b16 %v2063, %v2062
        %v2079 = vpack.c.b16 %v2065, %v2064
        %v2080 = vpack.c.b16 %v2067, %v2066
        %v2081 = vpack.c.b16 %v2069, %v2068
        %v2082 = vpack.c.b16 %v2071, %v2070
        %v2083 = vpack.c.b16 %v2073, %v2072
        %v2084 = vpack.c.b16 %v2075, %v2074
        %v2085 = vpack.c.b16 %v2077, %v2076
        %2094 = vmatprep.subr.bf16.mxu0 0
        %2095 = vmatpush1.bf16.msra.mxu0 %v2078
        %2096 = vmatprep.subr.bf16.mxu0 0
        %2097 = vmatpush1.bf16.msra.mxu0 %v2079
        %2098 = vmatprep.subr.bf16.mxu0 0
        %2099 = vmatpush1.bf16.msra.mxu0 %v2080
        %2100 = vmatprep.subr.bf16.mxu0 0
        %2101 = vmatpush1.bf16.msra.mxu0 %v2081
        %2102 = vmatprep.subr.bf16.mxu0 0
        %2103 = vmatpush1.bf16.msra.mxu0 %v2082
        %2104 = vmatprep.subr.bf16.mxu0 0
        %2105 = vmatpush1.bf16.msra.mxu0 %v2083
        %2106 = vmatprep.subr.bf16.mxu0 0
        %2107 = vmatpush1.bf16.msra.mxu0 %v2084
        %2108 = vmatprep.subr.bf16.mxu0 0
        %2109 = vmatpush1.bf16.msra.mxu0 %v2085
        %2110 = vmatprep.subr.bf16.mxu0 0
        %2111 = vmatpush1.bf16.msra.mxu0 0
        %2112 = vmatprep.subr.bf16.mxu0 0
        %2113 = vmatpush1.bf16.msra.mxu0 0
        %2114 = vmatprep.subr.bf16.mxu0 0
        %2115 = vmatpush1.bf16.msra.mxu0 0
        %2116 = vmatprep.subr.bf16.mxu0 0
        %2117 = vmatpush1.bf16.msra.mxu0 0
        %2118 = vmatprep.subr.bf16.mxu0 0
        %2119 = vmatpush1.bf16.msra.mxu0 0
        %2120 = vmatprep.subr.bf16.mxu0 0
        %2121 = vmatpush1.bf16.msra.mxu0 0
        %2122 = vmatprep.subr.bf16.mxu0 0
        %2123 = vmatpush1.bf16.msra.mxu0 0
        %2124 = vmatprep.subr.bf16.mxu0 0
        %2125 = vmatpush1.bf16.msra.mxu0 0
        %2126 = vmatprep.mubr.bf16.mxu0 0
        %2127 = vmatmul.mubr.bf16.gmra.mrb[0].mxu0 %v2044
        %v2128 = vpop.f32.mrb[0].mxu0
        %v2129 = vadd.f32 0.0, %v2128
        %v2130 = vpop.f32.mrb[0].mxu0
        %v2131 = vpop.f32.mrb[0].mxu0
        %v2132 = vadd.f32 0.0, %v2131
        %v2133 = vpop.f32.mrb[0].mxu0
        %2134 = vdwg.mxu0
        %v2135 = vadd.f32 %v2019, %v2129
        %v2136 = vadd.f32 %v2022, %v2132
        %s2137 = scalar_lea.vmem [#allocation7], 192
        %v2138 = vld [vmem:[%s2137] sm:$0xf]
        %v2139 = vld [vmem:[%s2137 + $0x4] sm:$0xf]
        %v2140 = vld [vmem:[%s2137 + $0x8] sm:$0xf]
        %v2141 = vld [vmem:[%s2137 + $0xc] sm:$0xf]
        %v2142 = vld [vmem:[%s2137 + $0x10] sm:$0xf]
        %v2143 = vld [vmem:[%s2137 + $0x14] sm:$0xf]
        %v2144 = vld [vmem:[%s2137 + $0x18] sm:$0xf]
        %v2145 = vld [vmem:[%s2137 + $0x1c] sm:$0xf]
        %v2146 = vld [vmem:[%s2137 + $0x20] sm:$0xf]
        %v2147 = vld [vmem:[%s2137 + $0x24] sm:$0xf]
        %v2148 = vld [vmem:[%s2137 + $0x28] sm:$0xf]
        %v2149 = vld [vmem:[%s2137 + $0x2c] sm:$0xf]
        %v2150 = vld [vmem:[%s2137 + $0x30] sm:$0xf]
        %v2151 = vld [vmem:[%s2137 + $0x34] sm:$0xf]
        %v2152 = vld [vmem:[%s2137 + $0x38] sm:$0xf]
        %v2153 = vld [vmem:[%s2137 + $0x3c] sm:$0xf]
        %vm2154 = vsmask.f32 4352
        %v2155 = vrot.slane %v1824, 3
        %v2156 = vrot.slane %v1827, 4
        %v2157 = vor.u32 %v2155, %v2156
        %v2158 = vrot.slane %v1832, 3
        %v2159 = vrot.slane %v1835, 4
        %v2160 = vor.u32 %v2158, %v2159
        %v2161 = vsel %vm2154, %v2157, %v2160
        %v2179 = vunpack.c.l.b16 %v2138
        %v2180 = vunpack.c.l.b16 %v2139
        %v2181 = vunpack.c.l.b16 %v2140
        %v2182 = vunpack.c.l.b16 %v2141
        %v2183 = vunpack.c.l.b16 %v2142
        %v2184 = vunpack.c.l.b16 %v2143
        %v2185 = vunpack.c.l.b16 %v2144
        %v2186 = vunpack.c.l.b16 %v2145
        %v2187 = vunpack.c.l.b16 %v2146
        %v2188 = vunpack.c.l.b16 %v2147
        %v2189 = vunpack.c.l.b16 %v2148
        %v2190 = vunpack.c.l.b16 %v2149
        %v2191 = vunpack.c.l.b16 %v2150
        %v2192 = vunpack.c.l.b16 %v2151
        %v2193 = vunpack.c.l.b16 %v2152
        %v2194 = vunpack.c.l.b16 %v2153
        %v2195 = vpack.c.b16 %v2180, %v2179
        %v2196 = vpack.c.b16 %v2182, %v2181
        %v2197 = vpack.c.b16 %v2184, %v2183
        %v2198 = vpack.c.b16 %v2186, %v2185
        %v2199 = vpack.c.b16 %v2188, %v2187
        %v2200 = vpack.c.b16 %v2190, %v2189
        %v2201 = vpack.c.b16 %v2192, %v2191
        %v2202 = vpack.c.b16 %v2194, %v2193
        %2211 = vmatprep.subr.bf16.mxu0 0
        %2212 = vmatpush1.bf16.msra.mxu0 %v2195
        %2213 = vmatprep.subr.bf16.mxu0 0
        %2214 = vmatpush1.bf16.msra.mxu0 %v2196
        %2215 = vmatprep.subr.bf16.mxu0 0
        %2216 = vmatpush1.bf16.msra.mxu0 %v2197
        %2217 = vmatprep.subr.bf16.mxu0 0
        %2218 = vmatpush1.bf16.msra.mxu0 %v2198
        %2219 = vmatprep.subr.bf16.mxu0 0
        %2220 = vmatpush1.bf16.msra.mxu0 %v2199
        %2221 = vmatprep.subr.bf16.mxu0 0
        %2222 = vmatpush1.bf16.msra.mxu0 %v2200
        %2223 = vmatprep.subr.bf16.mxu0 0
        %2224 = vmatpush1.bf16.msra.mxu0 %v2201
        %2225 = vmatprep.subr.bf16.mxu0 0
        %2226 = vmatpush1.bf16.msra.mxu0 %v2202
        %2227 = vmatprep.subr.bf16.mxu0 0
        %2228 = vmatpush1.bf16.msra.mxu0 0
        %2229 = vmatprep.subr.bf16.mxu0 0
        %2230 = vmatpush1.bf16.msra.mxu0 0
        %2231 = vmatprep.subr.bf16.mxu0 0
        %2232 = vmatpush1.bf16.msra.mxu0 0
        %2233 = vmatprep.subr.bf16.mxu0 0
        %2234 = vmatpush1.bf16.msra.mxu0 0
        %2235 = vmatprep.subr.bf16.mxu0 0
        %2236 = vmatpush1.bf16.msra.mxu0 0
        %2237 = vmatprep.subr.bf16.mxu0 0
        %2238 = vmatpush1.bf16.msra.mxu0 0
        %2239 = vmatprep.subr.bf16.mxu0 0
        %2240 = vmatpush1.bf16.msra.mxu0 0
        %2241 = vmatprep.subr.bf16.mxu0 0
        %2242 = vmatpush1.bf16.msra.mxu0 0
        %2243 = vmatprep.mubr.bf16.mxu0 0
        %2244 = vmatmul.mubr.bf16.gmra.mrb[0].mxu0 %v2161
        %v2245 = vpop.f32.mrb[0].mxu0
        %v2246 = vadd.f32 0.0, %v2245
        %v2247 = vpop.f32.mrb[0].mxu0
        %v2248 = vpop.f32.mrb[0].mxu0
        %v2249 = vadd.f32 0.0, %v2248
        %v2250 = vpop.f32.mrb[0].mxu0
        %2251 = vdwg.mxu0
        %v2252 = vadd.f32 %v2135, %v2246
        %v2253 = vadd.f32 %v2136, %v2249
        %s2254 = scalar_lea.vmem [#allocation7], 256
        %v2255 = vld [vmem:[%s2254] sm:$0xf]
        %v2256 = vld [vmem:[%s2254 + $0x4] sm:$0xf]
        %v2257 = vld [vmem:[%s2254 + $0x8] sm:$0xf]
        %v2258 = vld [vmem:[%s2254 + $0xc] sm:$0xf]
        %v2259 = vld [vmem:[%s2254 + $0x10] sm:$0xf]
        %v2260 = vld [vmem:[%s2254 + $0x14] sm:$0xf]
        %v2261 = vld [vmem:[%s2254 + $0x18] sm:$0xf]
        %v2262 = vld [vmem:[%s2254 + $0x1c] sm:$0xf]
        %v2263 = vld [vmem:[%s2254 + $0x20] sm:$0xf]
        %v2264 = vld [vmem:[%s2254 + $0x24] sm:$0xf]
        %v2265 = vld [vmem:[%s2254 + $0x28] sm:$0xf]
        %v2266 = vld [vmem:[%s2254 + $0x2c] sm:$0xf]
        %v2267 = vld [vmem:[%s2254 + $0x30] sm:$0xf]
        %v2268 = vld [vmem:[%s2254 + $0x34] sm:$0xf]
        %v2269 = vld [vmem:[%s2254 + $0x38] sm:$0xf]
        %v2270 = vld [vmem:[%s2254 + $0x3c] sm:$0xf]
        %vm2271 = vcmask 1043456
        %v2272 = vrot.slane %v1787, 4
        %v2273 = vrot.slane %v1788, 4
        %v2274 = vsel %vm2271, %v2272, %v2273
        %v2292 = vunpack.c.l.b16 %v2255
        %v2293 = vunpack.c.l.b16 %v2256
        %v2294 = vunpack.c.l.b16 %v2257
        %v2295 = vunpack.c.l.b16 %v2258
        %v2296 = vunpack.c.l.b16 %v2259
        %v2297 = vunpack.c.l.b16 %v2260
        %v2298 = vunpack.c.l.b16 %v2261
        %v2299 = vunpack.c.l.b16 %v2262
        %v2300 = vunpack.c.l.b16 %v2263
        %v2301 = vunpack.c.l.b16 %v2264
        %v2302 = vunpack.c.l.b16 %v2265
        %v2303 = vunpack.c.l.b16 %v2266
        %v2304 = vunpack.c.l.b16 %v2267
        %v2305 = vunpack.c.l.b16 %v2268
        %v2306 = vunpack.c.l.b16 %v2269
        %v2307 = vunpack.c.l.b16 %v2270
        %v2308 = vpack.c.b16 %v2293, %v2292
        %v2309 = vpack.c.b16 %v2295, %v2294
        %v2310 = vpack.c.b16 %v2297, %v2296
        %v2311 = vpack.c.b16 %v2299, %v2298
        %v2312 = vpack.c.b16 %v2301, %v2300
        %v2313 = vpack.c.b16 %v2303, %v2302
        %v2314 = vpack.c.b16 %v2305, %v2304
        %v2315 = vpack.c.b16 %v2307, %v2306
        %2324 = vmatprep.subr.bf16.mxu0 0
        %2325 = vmatpush1.bf16.msra.mxu0 %v2308
        %2326 = vmatprep.subr.bf16.mxu0 0
        %2327 = vmatpush1.bf16.msra.mxu0 %v2309
        %2328 = vmatprep.subr.bf16.mxu0 0
        %2329 = vmatpush1.bf16.msra.mxu0 %v2310
        %2330 = vmatprep.subr.bf16.mxu0 0
        %2331 = vmatpush1.bf16.msra.mxu0 %v2311
        %2332 = vmatprep.subr.bf16.mxu0 0
        %2333 = vmatpush1.bf16.msra.mxu0 %v2312
        %2334 = vmatprep.subr.bf16.mxu0 0
        %2335 = vmatpush1.bf16.msra.mxu0 %v2313
        %2336 = vmatprep.subr.bf16.mxu0 0
        %2337 = vmatpush1.bf16.msra.mxu0 %v2314
        %2338 = vmatprep.subr.bf16.mxu0 0
        %2339 = vmatpush1.bf16.msra.mxu0 %v2315
        %2340 = vmatprep.subr.bf16.mxu0 0
        %2341 = vmatpush1.bf16.msra.mxu0 0
        %2342 = vmatprep.subr.bf16.mxu0 0
        %2343 = vmatpush1.bf16.msra.mxu0 0
        %2344 = vmatprep.subr.bf16.mxu0 0
        %2345 = vmatpush1.bf16.msra.mxu0 0
        %2346 = vmatprep.subr.bf16.mxu0 0
        %2347 = vmatpush1.bf16.msra.mxu0 0
        %2348 = vmatprep.subr.bf16.mxu0 0
        %2349 = vmatpush1.bf16.msra.mxu0 0
        %2350 = vmatprep.subr.bf16.mxu0 0
        %2351 = vmatpush1.bf16.msra.mxu0 0
        %2352 = vmatprep.subr.bf16.mxu0 0
        %2353 = vmatpush1.bf16.msra.mxu0 0
        %2354 = vmatprep.subr.bf16.mxu0 0
        %2355 = vmatpush1.bf16.msra.mxu0 0
        %2356 = vmatprep.mubr.bf16.mxu0 0
        %2357 = vmatmul.mubr.bf16.gmra.mrb[0].mxu0 %v2274
        %v2358 = vpop.f32.mrb[0].mxu0
        %v2359 = vadd.f32 0.0, %v2358
        %v2360 = vpop.f32.mrb[0].mxu0
        %v2361 = vpop.f32.mrb[0].mxu0
        %v2362 = vadd.f32 0.0, %v2361
        %v2363 = vpop.f32.mrb[0].mxu0
        %2364 = vdwg.mxu0
        %v2365 = vadd.f32 %v2252, %v2359
        %v2366 = vadd.f32 %v2253, %v2362
        %v2368 = vlaneseq
        %v2369 = vshrl.u32 %v2368, 7
        %v2370 = vsub.s32 0, %v2369
        %v2371 = vrot.slane %v1789, %v2370
        %v2373 = vadd.f32 %v2365, %v2371
        %v2374 = vadd.f32 %v2366, %v2371
        %v2375 = vxor.u32 %v2373, 2147483648
        %v2376 = vxor.u32 %v2374, 2147483648
        %v2377 = vmul.f32 %v2375, 1.442695
        %v2378 = vpow.pop %v2377
        %v2379 = vmul.f32 %v2376, 1.442695
        %v2380 = vpow.pop %v2379
        %v2381 = vadd.f32 %v2378, 1.0
        %v2382 = vadd.f32 %v2380, 1.0
        %v2383 = vrcp.pop %v2381
        %v2384 = vmul.f32 1.0, %v2383
        %v2385 = vrcp.pop %v2382
        %v2386 = vmul.f32 1.0, %v2385
        %v2387 = vmul.f32 %v2373, %v2384
        %v2388 = vmul.f32 %v2374, %v2386
        %v2389 = vpack.c.bf16 %v2388, %v2387
        %v2391 = vunpack.c.l.b16 %v2389
        %v2392 = vunpack.c.h.b16 %v2389
        %v2393 = vpack.c.b16 %v2391, %v2391
        %v2394 = vpack.c.b16 %v2392, %v2392
        %2397 = vst [vmem:[%s389] sm:$0xf] %v2393
        %2398 = vst [vmem:[%s389 + $0x4] sm:$0xf] %v2394
        %v2399 = vld [vmem:[%s7] sm:$0xf]
        %v2400 = vld [vmem:[%s7 + $0x4] sm:$0xf]
        %v2401 = vld [vmem:[%s7 + $0x8] sm:$0xf]
        %v2402 = vld [vmem:[%s7 + $0xc] sm:$0xf]
        %v2403 = vld [vmem:[%s7 + $0x10] sm:$0xf]
        %v2404 = vld [vmem:[%s7 + $0x14] sm:$0xf]
        %v2405 = vld [vmem:[%s7 + $0x18] sm:$0xf]
        %v2406 = vld [vmem:[%s7 + $0x1c] sm:$0xf]
        %v2407 = vld [vmem:[%s7 + $0x20] sm:$0xf]
        %v2408 = vld [vmem:[%s7 + $0x24] sm:$0xf]
        %v2409 = vld [vmem:[%s7 + $0x28] sm:$0xf]
        %v2410 = vld [vmem:[%s7 + $0x2c] sm:$0xf]
        %v2411 = vld [vmem:[%s7 + $0x30] sm:$0xf]
        %v2412 = vld [vmem:[%s7 + $0x34] sm:$0xf]
        %v2413 = vld [vmem:[%s7 + $0x38] sm:$0xf]
        %v2414 = vld [vmem:[%s7 + $0x3c] sm:$0xf]
        %v2431 = vunpack.c.l.b16 %v2399
        %v2432 = vunpack.c.l.b16 %v2400
        %v2433 = vunpack.c.l.b16 %v2401
        %v2434 = vunpack.c.l.b16 %v2402
        %v2435 = vunpack.c.l.b16 %v2403
        %v2436 = vunpack.c.l.b16 %v2404
        %v2437 = vunpack.c.l.b16 %v2405
        %v2438 = vunpack.c.l.b16 %v2406
        %v2439 = vunpack.c.l.b16 %v2407
        %v2440 = vunpack.c.l.b16 %v2408
        %v2441 = vunpack.c.l.b16 %v2409
        %v2442 = vunpack.c.l.b16 %v2410
        %v2443 = vunpack.c.l.b16 %v2411
        %v2444 = vunpack.c.l.b16 %v2412
        %v2445 = vunpack.c.l.b16 %v2413
        %v2446 = vunpack.c.l.b16 %v2414
        %v2447 = vpack.c.b16 %v2432, %v2431
        %v2448 = vpack.c.b16 %v2434, %v2433
        %v2449 = vpack.c.b16 %v2436, %v2435
        %v2450 = vpack.c.b16 %v2438, %v2437
        %v2451 = vpack.c.b16 %v2440, %v2439
        %v2452 = vpack.c.b16 %v2442, %v2441
        %v2453 = vpack.c.b16 %v2444, %v2443
        %v2454 = vpack.c.b16 %v2446, %v2445
        %2463 = vmatprep.subr.bf16.mxu0 0
        %2464 = vmatpush1.bf16.msra.mxu0 %v2447
        %2465 = vmatprep.subr.bf16.mxu0 0
        %2466 = vmatpush1.bf16.msra.mxu0 %v2448
        %2467 = vmatprep.subr.bf16.mxu0 0
        %2468 = vmatpush1.bf16.msra.mxu0 %v2449
        %2469 = vmatprep.subr.bf16.mxu0 0
        %2470 = vmatpush1.bf16.msra.mxu0 %v2450
        %2471 = vmatprep.subr.bf16.mxu0 0
        %2472 = vmatpush1.bf16.msra.mxu0 %v2451
        %2473 = vmatprep.subr.bf16.mxu0 0
        %2474 = vmatpush1.bf16.msra.mxu0 %v2452
        %2475 = vmatprep.subr.bf16.mxu0 0
        %2476 = vmatpush1.bf16.msra.mxu0 %v2453
        %2477 = vmatprep.subr.bf16.mxu0 0
        %2478 = vmatpush1.bf16.msra.mxu0 %v2454
        %2479 = vmatprep.subr.bf16.mxu0 0
        %2480 = vmatpush1.bf16.msra.mxu0 0
        %2481 = vmatprep.subr.bf16.mxu0 0
        %2482 = vmatpush1.bf16.msra.mxu0 0
        %2483 = vmatprep.subr.bf16.mxu0 0
        %2484 = vmatpush1.bf16.msra.mxu0 0
        %2485 = vmatprep.subr.bf16.mxu0 0
        %2486 = vmatpush1.bf16.msra.mxu0 0
        %2487 = vmatprep.subr.bf16.mxu0 0
        %2488 = vmatpush1.bf16.msra.mxu0 0
        %2489 = vmatprep.subr.bf16.mxu0 0
        %2490 = vmatpush1.bf16.msra.mxu0 0
        %2491 = vmatprep.subr.bf16.mxu0 0
        %2492 = vmatpush1.bf16.msra.mxu0 0
        %2493 = vmatprep.subr.bf16.mxu0 0
        %2494 = vmatpush1.bf16.msra.mxu0 0
        %2495 = vmatprep.mubr.bf16.mxu0 0
        %2496 = vmatmul.mubr.bf16.gmra.mrb[0].mxu0 %v2389
        %v2497 = vpop.f32.mrb[0].mxu0
        %v2498 = vadd.f32 0.0, %v2497
        %v2499 = vpop.f32.mrb[0].mxu0
        %v2500 = vpop.f32.mrb[0].mxu0
        %v2501 = vadd.f32 0.0, %v2500
        %v2502 = vpop.f32.mrb[0].mxu0
        %2503 = vdwg.mxu0
        %v2504 = vlaneseq
        %v2505 = vand.u32 %v2504, 127
        %vm2506 = vcmp.lt.s32.totalorder %v2505, 10
        %v2507 = vsel %vm2506, 1, 0
        %vm2508 = vcmp.eq.s32.totalorder %v2507, 1
        %v2509 = vsel %vm2508, %v2498, -1e+30
        %v2510 = vsel %vm2508, %v2501, -1e+30
        %2511 = vmax.xlane.f32.xlu0 %v2509
        %v2512 = vpop.xlane.xlu0 %2511
        %2513 = vmax.xlane.f32.xlu0 %v2510
        %v2514 = vpop.xlane.xlu0 %2513
        %v2515 = vsub.f32 %v2509, %v2512
        %v2516 = vsub.f32 %v2510, %v2514
        %v2517 = vmul.f32 %v2515, 1.442695
        %v2518 = vpow.pop %v2517
        %v2519 = vmul.f32 %v2516, 1.442695
        %v2520 = vpow.pop %v2519
        %2521 = vadd.xlane.f32.xlu0 %v2518
        %v2522 = vpop.xlane.xlu0 %2521
        %2523 = vadd.xlane.f32.xlu0 %v2520
        %v2524 = vpop.xlane.xlu0 %2523
        %v2525 = vlog2.pop %v2522
        %v2526 = vmul.f32 %v2525, 0.6931472
        %v2527 = vlog2.pop %v2524
        %v2528 = vmul.f32 %v2527, 0.6931472
        %v2529 = vsub.f32 %v2515, %v2526
        %v2530 = vsub.f32 %v2516, %v2528
        %2531 = vst [vmem:[%s396] sm:$0xff] %v2529
        %2532 = vst [vmem:[%s396 + $0x8] sm:$0xff] %v2530
        %s2533 = sand.u32 %s224, 1
        %s2534 = scalar_lea.sflag [#allocation4], %s2533
        %s2535 = sand.u32 %s224, 1
        %s2536 = smul.addr %s2535, 8
        %s2537 = scalar_lea.vmem [#allocation8], %s2536
        %s2538 = sand.u32 %s252, 1
        %s2539 = scalar_lea.sflag [#allocation10], %s2538
        %s2540 = sand.u32 %s252, 1
        %s2541 = smul.addr %s2540, 16
        %s2542 = scalar_lea.vmem [#allocation9], %s2541
        // Predicated region
        $region65: #{tpu_custom_call.1} parent=51 // pred_check
          %p2543 = pneg %p234
        $region66: #{tpu_custom_call.1} parent=51 // pred_check_branch
          %2545 = sbr.rel (%p2543) target = $region68
        $region67: #{tpu_custom_call.1} parent=51 // pred_region
          %s2546 = smul.u32 2, %s34
          %s2548 = ssub.s32 128, 128
          %2549 = vsyncadd %s2534, %s2548
          %s2550 = smul.addr %s33, 4
          %s2551 = sadd.s32 %s2546, %s2550
          %s2552 = smul.addr %s2551, 64
          %s2553 = scalar_lea.hbm %s8, %s2552
          %s2554 = sshll.u32 %s2537, 4
          %s2555 = int_to_ptr.vmem [resolvable:$true] %s2554
          %2560 = dma.vmem_to_hbm [thread:$0]  %s2555, 128, %s2553, %s2534, 64, 64, 4
        $region68: #{tpu_custom_call.1} parent=51 // pred_fallthru
          _
        // Predicated region
        $region69: #{tpu_custom_call.1} parent=51 // pred_check
          %p2561 = pneg %p262
        $region70: #{tpu_custom_call.1} parent=51 // pred_check_branch
          %2563 = sbr.rel (%p2561) target = $region72
        $region71: #{tpu_custom_call.1} parent=51 // pred_region
          %s2564 = smul.u32 2, %s34
          %s2566 = ssub.s32 256, 256
          %2567 = vsyncadd %s2539, %s2566
          %s2568 = smul.addr %s33, 4
          %s2569 = sadd.s32 %s2564, %s2568
          %s2570 = smul.addr %s2569, 128
          %s2571 = scalar_lea.hbm %s9, %s2570
          %s2572 = sshll.u32 %s2542, 4
          %s2573 = int_to_ptr.vmem [resolvable:$true] %s2572
          %2578 = dma.vmem_to_hbm [thread:$0]  %s2573, 256, %s2571, %s2539, 128, 128, 8
        $region72: #{tpu_custom_call.1} parent=51 // pred_fallthru
          _
      $region52: #{tpu_custom_call.1} parent=5 // pred_fallthru
        _
      %p2579 = scmp.le.s32.totalorder 2, %s24
      // Predicated region
      $region73: #{tpu_custom_call.1} parent=5 // pred_check
        %p2580 = pneg %p2579
      $region74: #{tpu_custom_call.1} parent=5 // pred_check_branch
        %2582 = sbr.rel (%p2580) target = $region76
      $region75: #{tpu_custom_call.1} parent=5 // pred_region
        %s2583 = ssub.s32 %s24, 2
        // Predicated region
        $region77: #{tpu_custom_call.1} parent=75 // pred_check
          %p2584 = pneg %p240
        $region78: #{tpu_custom_call.1} parent=75 // pred_check_branch
          %2586 = sbr.rel (%p2584) target = $region80
        $region79: #{tpu_custom_call.1} parent=75 // pred_region
          %s2587 = sand.u32 %s225, 1
          %s2588 = scalar_lea.sflag [#allocation4], %s2587
          %s2589 = sand.u32 %s225, 1
          %s2590 = smul.addr %s2589, 8
          %s2591 = scalar_lea.vmem [#allocation8], %s2590
          %2592 = dma.done %s2588, 128
        $region80: #{tpu_custom_call.1} parent=75 // pred_fallthru
          _
        // Predicated region
        $region81: #{tpu_custom_call.1} parent=75 // pred_check
          %p2593 = pneg %p268
        $region82: #{tpu_custom_call.1} parent=75 // pred_check_branch
          %2595 = sbr.rel (%p2593) target = $region84
        $region83: #{tpu_custom_call.1} parent=75 // pred_region
          %s2596 = sand.u32 %s253, 1
          %s2597 = scalar_lea.sflag [#allocation10], %s2596
          %s2598 = sand.u32 %s253, 1
          %s2599 = smul.addr %s2598, 16
          %s2600 = scalar_lea.vmem [#allocation9], %s2599
          %2601 = dma.done %s2597, 256
        $region84: #{tpu_custom_call.1} parent=75 // pred_fallthru
          _
      $region76: #{tpu_custom_call.1} parent=5 // pred_fallthru
        _
    $region6: #{tpu_custom_call.1} parent=1 // loop_footer
      %s28 = sadd.s32 1, %s24
    $region7: #{tpu_custom_call.1} parent=1 // loop_footer_branch
      %23 = sbr.rel target = $region3
    $region8: #{tpu_custom_call.1} parent=1 // loop_exit
      _
    %2602 = vsyncpa [#allocation3], 1
    %s2603 = scalar_lea.sflag [#allocation3], 1
    %2604 = vsyncpa %s2603, 1
    %2605 = vsyncpa [#allocation6], 1
    %2606 = vsyncpa [#allocation4], 1
    %s2607 = scalar_lea.sflag [#allocation4], 1
    %2608 = vsyncpa %s2607, 1
    %2609 = vsyncpa [#allocation10], 1
    %s2610 = scalar_lea.sflag [#allocation10], 1
    %2611 = vsyncpa %s2610, 1

</llo_original>
